<compile_context>
chip_gen: v7x
topology: tpu7x:2x2x1
jax: 0.10.0
libtpu: 0.0.40
codegen_flags: <defaults>
</compile_context>

<pallas_src>
import functools

import jax
import jax.numpy as jnp
from jax import lax
from jax.experimental import pallas as pl
from jax.experimental.pallas import tpu as pltpu


# ----------------------------- shared math -----------------------------------


def _bdot(a, w):
    """Single-pass bf16 MXU dot with f32 accumulation (w is already bf16)."""
    return jnp.dot(a.astype(jnp.bfloat16), w, preferred_element_type=jnp.float32)


def _gru_gates(gi, gh, h, H):
    """PyTorch nn.GRUCell gate math, gate order (r, z, n); biases already in gi/gh."""
    rz = jax.nn.sigmoid(gi[:, :2 * H] + gh[:, :2 * H])   # one fused sigmoid
    r = rz[:, :H]
    z = rz[:, H:]
    n = jnp.tanh(gi[:, 2 * H:] + r * gh[:, 2 * H:])
    return (1.0 - z) * n + z * h


# ----------------------------- kernel ----------------------------------------


def vae_decoder_kernel(
    infor_ref,
    li_w_ref, li_b_ref,
    g1_wx_ref, g1_wi_ref, g1_whh_ref, g1_bih_ref, g1_bhh_ref,
    g2_wih_ref, g2_whh_ref, g2_bih_ref, g2_bhh_ref,
    lo_w_ref, lo_b_ref,
    out_ref,
    *, n_step, roll_dims, hidden_dims,
):
    R, H = roll_dims, hidden_dims
    infor = infor_ref[...]                                 # (B, I) f32
    B = infor.shape[0]

    # Load every weight/bias exactly once (the step loop below is unrolled).
    li_w, li_b = li_w_ref[...], li_b_ref[...]
    g1_wx, g1_wi, g1_whh = g1_wx_ref[...], g1_wi_ref[...], g1_whh_ref[...]
    g1_bih, g1_bhh = g1_bih_ref[...], g1_bhh_ref[...]
    g2_wih, g2_whh = g2_wih_ref[...], g2_whh_ref[...]
    g2_bih, g2_bhh = g2_bih_ref[...], g2_bhh_ref[...]
    lo_w, lo_b = lo_w_ref[...], lo_b_ref[...]

    col = lax.broadcasted_iota(jnp.int32, (B, R), 1)
    # out = zeros; out[:, -1] = 1.0  (one-hot start token)
    out = jnp.where(col == R - 1, 1.0, 0.0).astype(jnp.float32)

    # Loop-invariant: infor's contribution to GRU-1 input gates (incl. b_ih).
    gi_inf = _bdot(infor, g1_wi) + g1_bih                  # (B, 3H)
    # hx[0] = tanh(linear_init_1(infor))
    h1 = jnp.tanh(_bdot(infor, li_w) + li_b)
    h2 = jnp.zeros_like(h1)

    steps = []
    # n_step is small & static -> full unroll keeps everything in vregs.
    # TODO(synk): switch to lax.fori_loop with (out, h1, h2) carry (peeling
    #             i == 0) if n_step ever grows beyond ~16.
    for i in range(n_step):
        gi1 = _bdot(out, g1_wx) + gi_inf
        gh1 = _bdot(h1, g1_whh) + g1_bhh
        h1 = _gru_gates(gi1, gh1, h1, H)
        if i == 0:
            h2 = h1
        gi2 = _bdot(h1, g2_wih) + g2_bih
        gh2 = _bdot(h2, g2_whh) + g2_bhh
        h2 = _gru_gates(gi2, gh2, h2, H)

        logits = _bdot(h2, lo_w) + lo_b                    # (B, R)
        shifted = logits - jnp.max(logits, axis=1, keepdims=True)
        logp = shifted - jnp.log(jnp.sum(jnp.exp(shifted), axis=1, keepdims=True))
        steps.append(logp)

        # eval-mode _sampling: argmax one-hot, first-max tie break (torch.max).
        # Reuse the softmax reduction: argmax(logp) == argmax(shifted), and
        # max(shifted) == 0 exactly (x - x), so no extra cross-lane max.
        cand = jnp.where(shifted == 0.0, col, R)
        idx = jnp.min(cand, axis=1, keepdims=True)
        out = jnp.where(col == idx, 1.0, 0.0).astype(jnp.float32)

    # Single lane-dense store: (B, n_step*R) == (B, 128) for the demo shapes.
    out_ref[...] = jnp.concatenate(steps, axis=1)


# ----------------------------- wrapper ----------------------------------------


def init_params(key, roll_dims, hidden_dims, infor_dims):
    """Deterministic synthetic parameters (PyTorch-style uniform init).

    Weights stored pre-transposed as (in_dim, out_dim); biases as (1, out).
    """
    def u(key, shape, bound):
        return jax.random.uniform(key, shape, jnp.float32, -bound, bound)

    ks = jax.random.split(key, 14)
    in1 = roll_dims + infor_dims
    bh = 1.0 / jnp.sqrt(hidden_dims)
    bi = 1.0 / jnp.sqrt(infor_dims)
    return {
        "li_w": u(ks[0], (infor_dims, hidden_dims), bi),
        "li_b": u(ks[1], (1, hidden_dims), bi),
        "g1_wih": u(ks[2], (in1, 3 * hidden_dims), bh),
        "g1_whh": u(ks[3], (hidden_dims, 3 * hidden_dims), bh),
        "g1_bih": u(ks[4], (1, 3 * hidden_dims), bh),
        "g1_bhh": u(ks[5], (1, 3 * hidden_dims), bh),
        "g2_wih": u(ks[6], (hidden_dims, 3 * hidden_dims), bh),
        "g2_whh": u(ks[7], (hidden_dims, 3 * hidden_dims), bh),
        "g2_bih": u(ks[8], (1, 3 * hidden_dims), bh),
        "g2_bhh": u(ks[9], (1, 3 * hidden_dims), bh),
        "lo_w": u(ks[10], (hidden_dims, roll_dims), bh),
        "lo_b": u(ks[11], (1, roll_dims), bh),
    }


def _prepare_params(params, roll_dims):
    """Split GRU-1's input weight into (roll | infor) rows and pre-cast weights
    to bf16 for single-pass MXU dots.  Biases stay f32."""
    bf16 = jnp.bfloat16
    g1_wih = params["g1_wih"]
    return {
        "li_w": params["li_w"].astype(bf16),
        "li_b": params["li_b"],
        "g1_wx": g1_wih[:roll_dims].astype(bf16),   # rows multiplying `out`
        "g1_wi": g1_wih[roll_dims:].astype(bf16),   # rows multiplying `infor` (hoisted)
        "g1_whh": params["g1_whh"].astype(bf16),
        "g1_bih": params["g1_bih"],
        "g1_bhh": params["g1_bhh"],
        "g2_wih": params["g2_wih"].astype(bf16),
        "g2_whh": params["g2_whh"].astype(bf16),
        "g2_bih": params["g2_bih"],
        "g2_bhh": params["g2_bhh"],
        "lo_w": params["lo_w"].astype(bf16),
        "lo_b": params["lo_b"],
    }


def _apply_length_mask(x, length, n_step, roll_dims):
    """torch: if length[j] != n_step: x[j, length[j]-n_step:] = silence."""
    silence = jnp.zeros((roll_dims,), jnp.float32).at[-1].set(-1.0)
    t = jnp.arange(n_step)[None, :]
    mask = (t >= length[:, None]) & (length[:, None] != n_step)
    return jnp.where(mask[:, :, None], silence[None, None, :], x)


def vae_forward(params, infor, x, length, *, n_step, roll_dims, hidden_dims):
    """Eval-mode VAE.forward(infor, x, length) -> recon (B, n_step, roll_dims).

    `x` (teacher-forcing sample) is unused in eval mode, kept for signature parity.
    """
    del x
    B, I = infor.shape
    p = _prepare_params(params, roll_dims)
    weights = (p["li_w"], p["li_b"],
               p["g1_wx"], p["g1_wi"], p["g1_whh"], p["g1_bih"], p["g1_bhh"],
               p["g2_wih"], p["g2_whh"], p["g2_bih"], p["g2_bhh"],
               p["lo_w"], p["lo_b"])

    # Batch is the only parallel axis (time is serial): block it so larger
    # batches shard across cores via "parallel" grid semantics.
    b_block = B if B <= 8 else 8
    grid = (pl.cdiv(B, b_block),)

    kernel = functools.partial(
        vae_decoder_kernel,
        n_step=n_step, roll_dims=roll_dims, hidden_dims=hidden_dims)

    in_specs = [pl.BlockSpec((b_block, I), lambda b: (b, 0))]
    in_specs += [pl.BlockSpec(w.shape, lambda b: (0, 0)) for w in weights]

    raw = pl.pallas_call(
        kernel,
        out_shape=jax.ShapeDtypeStruct((B, n_step * roll_dims), jnp.float32),
        grid=grid,
        in_specs=in_specs,
        out_specs=pl.BlockSpec((b_block, n_step * roll_dims), lambda b: (b, 0)),
        compiler_params=pltpu.CompilerParams(dimension_semantics=("parallel",)),
    )(infor.astype(jnp.float32), *weights)

    raw = raw.reshape(B, n_step, roll_dims)
    # Silence/length masking is pure post-processing (does not feed the
    # recurrence) -> done here, outside the serial kernel loop.
    return _apply_length_mask(raw, length.astype(jnp.int32), n_step, roll_dims)


# ----------------------------- reference (pure JAX) ---------------------------


def vae_forward_ref(params, infor, length, *, n_step, roll_dims, hidden_dims):
    """Pure-JAX reference mirroring the kernel math (same bf16-dot precision)."""
    R, H = roll_dims, hidden_dims
    B = infor.shape[0]
    p = _prepare_params(params, roll_dims)
    infor = infor.astype(jnp.float32)
    col = jnp.arange(R)[None, :]

    out = jnp.zeros((B, R), jnp.float32).at[:, -1].set(1.0)
    gi_inf = _bdot(infor, p["g1_wi"]) + p["g1_bih"]
    h1 = jnp.tanh(_bdot(infor, p["li_w"]) + p["li_b"])
    h2 = jnp.zeros_like(h1)

    steps = []
    for i in range(n_step):
        gi1 = _bdot(out, p["g1_wx"]) + gi_inf
        gh1 = _bdot(h1, p["g1_whh"]) + p["g1_bhh"]
        h1 = _gru_gates(gi1, gh1, h1, H)
        if i == 0:
            h2 = h1
        gi2 = _bdot(h1, p["g2_wih"]) + p["g2_bih"]
        gh2 = _bdot(h2, p["g2_whh"]) + p["g2_bhh"]
        h2 = _gru_gates(gi2, gh2, h2, H)

        logits = _bdot(h2, p["lo_w"]) + p["lo_b"]
        shifted = logits - jnp.max(logits, axis=1, keepdims=True)
        logp = shifted - jnp.log(jnp.sum(jnp.exp(shifted), axis=1, keepdims=True))
        steps.append(logp)

        idx = jnp.argmax(logp, axis=1, keepdims=True)   # first-max tie break
        out = jnp.where(col == idx, 1.0, 0.0).astype(jnp.float32)

    x = jnp.stack(steps, axis=1)
    return _apply_length_mask(x, length.astype(jnp.int32), n_step, roll_dims)


# ----------------------------- main -------------------------------------------


if __name__ == "__main__":
    roll_dims, infor_dims, hidden_dims = 16, 8, 32
    n_step, batch = 8, 2

    key = jax.random.PRNGKey(0)
    kp, ki, kx = jax.random.split(key, 3)
    params = init_params(kp, roll_dims, hidden_dims, infor_dims)

    infor = jax.random.normal(ki, (batch, infor_dims), jnp.float32)
    x_sample = jax.random.normal(kx, (batch, n_step, roll_dims), jnp.float32)
    length = jnp.array([n_step, 5], dtype=jnp.int32)   # second sequence masked

    recon = vae_forward(params, infor, x_sample, length,
                        n_step=n_step, roll_dims=roll_dims,
                        hidden_dims=hidden_dims)
    recon = jax.block_until_ready(recon)

    ref = vae_forward_ref(params, infor, length,
                          n_step=n_step, roll_dims=roll_dims,
                          hidden_dims=hidden_dims)
    assert recon.shape == (batch, n_step, roll_dims)
    err = jnp.max(jnp.abs(recon - ref))
    assert jnp.allclose(recon, ref, rtol=1e-2, atol=1e-2), f"max err {err}"
    print("KERNEL_OK")
</pallas_src>

<mosaic_0001>
module attributes {stable_mosaic.version = 11 : i64} {
  func.func @vae_decoder_kernel(%arg0: i32, %arg1: memref<2x8xf32, #tpu.memory_space<vmem>>, %arg2: memref<8x32xbf16, #tpu.memory_space<vmem>>, %arg3: memref<1x32xf32, #tpu.memory_space<vmem>>, %arg4: memref<16x96xbf16, #tpu.memory_space<vmem>>, %arg5: memref<8x96xbf16, #tpu.memory_space<vmem>>, %arg6: memref<32x96xbf16, #tpu.memory_space<vmem>>, %arg7: memref<1x96xf32, #tpu.memory_space<vmem>>, %arg8: memref<1x96xf32, #tpu.memory_space<vmem>>, %arg9: memref<32x96xbf16, #tpu.memory_space<vmem>>, %arg10: memref<32x96xbf16, #tpu.memory_space<vmem>>, %arg11: memref<1x96xf32, #tpu.memory_space<vmem>>, %arg12: memref<1x96xf32, #tpu.memory_space<vmem>>, %arg13: memref<32x16xbf16, #tpu.memory_space<vmem>>, %arg14: memref<1x16xf32, #tpu.memory_space<vmem>>, %arg15: memref<2x128xf32, #tpu.memory_space<vmem>>) attributes {dimension_semantics = [#tpu.dimension_semantics<parallel>], iteration_bounds = array<i64: 1>, scalar_prefetch = 0 : i64, scratch_operands = 0 : i64, tpu.core_type = #tpu.core_type<tc>, window_params = [{transform_indices = @transform_0, window_bounds = array<i64: 2, 8>}, {pipeline_mode = #tpu.pipeline_mode<synchronous>, transform_indices = @transform_1, window_bounds = array<i64: 8, 32>}, {pipeline_mode = #tpu.pipeline_mode<synchronous>, transform_indices = @transform_2, window_bounds = array<i64: 1, 32>}, {pipeline_mode = #tpu.pipeline_mode<synchronous>, transform_indices = @transform_3, window_bounds = array<i64: 16, 96>}, {pipeline_mode = #tpu.pipeline_mode<synchronous>, transform_indices = @transform_4, window_bounds = array<i64: 8, 96>}, {pipeline_mode = #tpu.pipeline_mode<synchronous>, transform_indices = @transform_5, window_bounds = array<i64: 32, 96>}, {pipeline_mode = #tpu.pipeline_mode<synchronous>, transform_indices = @transform_6, window_bounds = array<i64: 1, 96>}, {pipeline_mode = #tpu.pipeline_mode<synchronous>, transform_indices = @transform_7, window_bounds = array<i64: 1, 96>}, {pipeline_mode = #tpu.pipeline_mode<synchronous>, transform_indices = @transform_8, window_bounds = array<i64: 32, 96>}, {pipeline_mode = #tpu.pipeline_mode<synchronous>, transform_indices = @transform_9, window_bounds = array<i64: 32, 96>}, {pipeline_mode = #tpu.pipeline_mode<synchronous>, transform_indices = @transform_10, window_bounds = array<i64: 1, 96>}, {pipeline_mode = #tpu.pipeline_mode<synchronous>, transform_indices = @transform_11, window_bounds = array<i64: 1, 96>}, {pipeline_mode = #tpu.pipeline_mode<synchronous>, transform_indices = @transform_12, window_bounds = array<i64: 32, 16>}, {pipeline_mode = #tpu.pipeline_mode<synchronous>, transform_indices = @transform_13, window_bounds = array<i64: 1, 16>}, {transform_indices = @transform_14, window_bounds = array<i64: 2, 128>}]} {
    %c0 = arith.constant 0 : index
    %c0_0 = arith.constant 0 : index
    %0 = vector.load %arg1[%c0, %c0_0] : memref<2x8xf32, #tpu.memory_space<vmem>>, vector<2x8xf32>
    %c0_1 = arith.constant 0 : index
    %c0_2 = arith.constant 0 : index
    %1 = vector.load %arg2[%c0_1, %c0_2] : memref<8x32xbf16, #tpu.memory_space<vmem>>, vector<8x32xbf16>
    %c0_3 = arith.constant 0 : index
    %c0_4 = arith.constant 0 : index
    %2 = vector.load %arg3[%c0_3, %c0_4] : memref<1x32xf32, #tpu.memory_space<vmem>>, vector<1x32xf32>
    %c0_5 = arith.constant 0 : index
    %c0_6 = arith.constant 0 : index
    %3 = vector.load %arg4[%c0_5, %c0_6] : memref<16x96xbf16, #tpu.memory_space<vmem>>, vector<16x96xbf16>
    %c0_7 = arith.constant 0 : index
    %c0_8 = arith.constant 0 : index
    %4 = vector.load %arg5[%c0_7, %c0_8] : memref<8x96xbf16, #tpu.memory_space<vmem>>, vector<8x96xbf16>
    %c0_9 = arith.constant 0 : index
    %c0_10 = arith.constant 0 : index
    %5 = vector.load %arg6[%c0_9, %c0_10] : memref<32x96xbf16, #tpu.memory_space<vmem>>, vector<32x96xbf16>
    %c0_11 = arith.constant 0 : index
    %c0_12 = arith.constant 0 : index
    %6 = vector.load %arg7[%c0_11, %c0_12] : memref<1x96xf32, #tpu.memory_space<vmem>>, vector<1x96xf32>
    %c0_13 = arith.constant 0 : index
    %c0_14 = arith.constant 0 : index
    %7 = vector.load %arg8[%c0_13, %c0_14] : memref<1x96xf32, #tpu.memory_space<vmem>>, vector<1x96xf32>
    %c0_15 = arith.constant 0 : index
    %c0_16 = arith.constant 0 : index
    %8 = vector.load %arg9[%c0_15, %c0_16] : memref<32x96xbf16, #tpu.memory_space<vmem>>, vector<32x96xbf16>
    %c0_17 = arith.constant 0 : index
    %c0_18 = arith.constant 0 : index
    %9 = vector.load %arg10[%c0_17, %c0_18] : memref<32x96xbf16, #tpu.memory_space<vmem>>, vector<32x96xbf16>
    %c0_19 = arith.constant 0 : index
    %c0_20 = arith.constant 0 : index
    %10 = vector.load %arg11[%c0_19, %c0_20] : memref<1x96xf32, #tpu.memory_space<vmem>>, vector<1x96xf32>
    %c0_21 = arith.constant 0 : index
    %c0_22 = arith.constant 0 : index
    %11 = vector.load %arg12[%c0_21, %c0_22] : memref<1x96xf32, #tpu.memory_space<vmem>>, vector<1x96xf32>
    %c0_23 = arith.constant 0 : index
    %c0_24 = arith.constant 0 : index
    %12 = vector.load %arg13[%c0_23, %c0_24] : memref<32x16xbf16, #tpu.memory_space<vmem>>, vector<32x16xbf16>
    %c0_25 = arith.constant 0 : index
    %c0_26 = arith.constant 0 : index
    %13 = vector.load %arg14[%c0_25, %c0_26] : memref<1x16xf32, #tpu.memory_space<vmem>>, vector<1x16xf32>
    %14 = tpu.iota {dimensions = array<i32: 1>} : vector<2x16xi32>
    %c15_i32 = arith.constant 15 : i32
    %15 = vector.broadcast %c15_i32 : i32 to vector<2x16xi32>
    %16 = arith.cmpi eq, %14, %15 : vector<2x16xi32>
    %cst = arith.constant 1.000000e+00 : f32
    %cst_27 = arith.constant 0.000000e+00 : f32
    %17 = vector.broadcast %cst : f32 to vector<2x16xf32>
    %18 = vector.broadcast %cst_27 : f32 to vector<2x16xf32>
    %19 = arith.select %16, %17, %18 : vector<2x16xi1>, vector<2x16xf32>
    %20 = arith.truncf %0 : vector<2x8xf32> to vector<2x8xbf16>
    %cst_28 = arith.constant dense<0.000000e+00> : vector<2x96xf32>
    %21 = tpu.matmul %20, %4, %cst_28 {dimension_numbers = #tpu.dot_dimension_numbers<[1], [0], [0], [1], [0, 0, 1, 1], [], []>} : vector<2x8xbf16>, vector<8x96xbf16>, vector<2x96xf32> -> vector<2x96xf32>
    %22 = vector.broadcast %6 : vector<1x96xf32> to vector<2x96xf32>
    %23 = arith.addf %21, %22 : vector<2x96xf32>
    %24 = arith.truncf %0 : vector<2x8xf32> to vector<2x8xbf16>
    %cst_29 = arith.constant dense<0.000000e+00> : vector<2x32xf32>
    %25 = tpu.matmul %24, %1, %cst_29 {dimension_numbers = #tpu.dot_dimension_numbers<[1], [0], [0], [1], [0, 0, 1, 1], [], []>} : vector<2x8xbf16>, vector<8x32xbf16>, vector<2x32xf32> -> vector<2x32xf32>
    %26 = vector.broadcast %2 : vector<1x32xf32> to vector<2x32xf32>
    %27 = arith.addf %25, %26 : vector<2x32xf32>
    %28 = math.tanh %27 : vector<2x32xf32>
    %29 = arith.truncf %19 : vector<2x16xf32> to vector<2x16xbf16>
    %cst_30 = arith.constant dense<0.000000e+00> : vector<2x96xf32>
    %30 = tpu.matmul %29, %3, %cst_30 {dimension_numbers = #tpu.dot_dimension_numbers<[1], [0], [0], [1], [0, 0, 1, 1], [], []>} : vector<2x16xbf16>, vector<16x96xbf16>, vector<2x96xf32> -> vector<2x96xf32>
    %31 = arith.addf %30, %23 : vector<2x96xf32>
    %32 = arith.truncf %28 : vector<2x32xf32> to vector<2x32xbf16>
    %cst_31 = arith.constant dense<0.000000e+00> : vector<2x96xf32>
    %33 = tpu.matmul %32, %5, %cst_31 {dimension_numbers = #tpu.dot_dimension_numbers<[1], [0], [0], [1], [0, 0, 1, 1], [], []>} : vector<2x32xbf16>, vector<32x96xbf16>, vector<2x96xf32> -> vector<2x96xf32>
    %34 = vector.broadcast %7 : vector<1x96xf32> to vector<2x96xf32>
    %35 = arith.addf %33, %34 : vector<2x96xf32>
    %36 = vector.extract_strided_slice %31 {offsets = [0, 0], sizes = [2, 64], strides = [1, 1]} : vector<2x96xf32> to vector<2x64xf32>
    %37 = vector.extract_strided_slice %35 {offsets = [0, 0], sizes = [2, 64], strides = [1, 1]} : vector<2x96xf32> to vector<2x64xf32>
    %38 = arith.addf %36, %37 : vector<2x64xf32>
    %39 = arith.negf %38 : vector<2x64xf32>
    %40 = math.exp %39 : vector<2x64xf32>
    %cst_32 = arith.constant 1.000000e+00 : f32
    %41 = vector.broadcast %cst_32 : f32 to vector<2x64xf32>
    %42 = arith.addf %41, %40 : vector<2x64xf32>
    %43 = arith.divf %41, %42 : vector<2x64xf32>
    %44 = vector.extract_strided_slice %43 {offsets = [0, 0], sizes = [2, 32], strides = [1, 1]} : vector<2x64xf32> to vector<2x32xf32>
    %45 = vector.extract_strided_slice %43 {offsets = [0, 32], sizes = [2, 32], strides = [1, 1]} : vector<2x64xf32> to vector<2x32xf32>
    %46 = vector.extract_strided_slice %31 {offsets = [0, 64], sizes = [2, 32], strides = [1, 1]} : vector<2x96xf32> to vector<2x32xf32>
    %47 = vector.extract_strided_slice %35 {offsets = [0, 64], sizes = [2, 32], strides = [1, 1]} : vector<2x96xf32> to vector<2x32xf32>
    %48 = arith.mulf %44, %47 : vector<2x32xf32>
    %49 = arith.addf %46, %48 : vector<2x32xf32>
    %50 = math.tanh %49 : vector<2x32xf32>
    %cst_33 = arith.constant 1.000000e+00 : f32
    %51 = vector.broadcast %cst_33 : f32 to vector<2x32xf32>
    %52 = arith.subf %51, %45 : vector<2x32xf32>
    %53 = arith.mulf %52, %50 : vector<2x32xf32>
    %54 = arith.mulf %45, %28 : vector<2x32xf32>
    %55 = arith.addf %53, %54 : vector<2x32xf32>
    %56 = arith.truncf %55 : vector<2x32xf32> to vector<2x32xbf16>
    %cst_34 = arith.constant dense<0.000000e+00> : vector<2x96xf32>
    %57 = tpu.matmul %56, %8, %cst_34 {dimension_numbers = #tpu.dot_dimension_numbers<[1], [0], [0], [1], [0, 0, 1, 1], [], []>} : vector<2x32xbf16>, vector<32x96xbf16>, vector<2x96xf32> -> vector<2x96xf32>
    %58 = vector.broadcast %10 : vector<1x96xf32> to vector<2x96xf32>
    %59 = arith.addf %57, %58 : vector<2x96xf32>
    %60 = arith.truncf %55 : vector<2x32xf32> to vector<2x32xbf16>
    %cst_35 = arith.constant dense<0.000000e+00> : vector<2x96xf32>
    %61 = tpu.matmul %60, %9, %cst_35 {dimension_numbers = #tpu.dot_dimension_numbers<[1], [0], [0], [1], [0, 0, 1, 1], [], []>} : vector<2x32xbf16>, vector<32x96xbf16>, vector<2x96xf32> -> vector<2x96xf32>
    %62 = vector.broadcast %11 : vector<1x96xf32> to vector<2x96xf32>
    %63 = arith.addf %61, %62 : vector<2x96xf32>
    %64 = vector.extract_strided_slice %59 {offsets = [0, 0], sizes = [2, 64], strides = [1, 1]} : vector<2x96xf32> to vector<2x64xf32>
    %65 = vector.extract_strided_slice %63 {offsets = [0, 0], sizes = [2, 64], strides = [1, 1]} : vector<2x96xf32> to vector<2x64xf32>
    %66 = arith.addf %64, %65 : vector<2x64xf32>
    %67 = arith.negf %66 : vector<2x64xf32>
    %68 = math.exp %67 : vector<2x64xf32>
    %cst_36 = arith.constant 1.000000e+00 : f32
    %69 = vector.broadcast %cst_36 : f32 to vector<2x64xf32>
    %70 = arith.addf %69, %68 : vector<2x64xf32>
    %71 = arith.divf %69, %70 : vector<2x64xf32>
    %72 = vector.extract_strided_slice %71 {offsets = [0, 0], sizes = [2, 32], strides = [1, 1]} : vector<2x64xf32> to vector<2x32xf32>
    %73 = vector.extract_strided_slice %71 {offsets = [0, 32], sizes = [2, 32], strides = [1, 1]} : vector<2x64xf32> to vector<2x32xf32>
    %74 = vector.extract_strided_slice %59 {offsets = [0, 64], sizes = [2, 32], strides = [1, 1]} : vector<2x96xf32> to vector<2x32xf32>
    %75 = vector.extract_strided_slice %63 {offsets = [0, 64], sizes = [2, 32], strides = [1, 1]} : vector<2x96xf32> to vector<2x32xf32>
    %76 = arith.mulf %72, %75 : vector<2x32xf32>
    %77 = arith.addf %74, %76 : vector<2x32xf32>
    %78 = math.tanh %77 : vector<2x32xf32>
    %cst_37 = arith.constant 1.000000e+00 : f32
    %79 = vector.broadcast %cst_37 : f32 to vector<2x32xf32>
    %80 = arith.subf %79, %73 : vector<2x32xf32>
    %81 = arith.mulf %80, %78 : vector<2x32xf32>
    %82 = arith.mulf %73, %55 : vector<2x32xf32>
    %83 = arith.addf %81, %82 : vector<2x32xf32>
    %84 = arith.truncf %83 : vector<2x32xf32> to vector<2x32xbf16>
    %cst_38 = arith.constant dense<0.000000e+00> : vector<2x16xf32>
    %85 = tpu.matmul %84, %12, %cst_38 {dimension_numbers = #tpu.dot_dimension_numbers<[1], [0], [0], [1], [0, 0, 1, 1], [], []>} : vector<2x32xbf16>, vector<32x16xbf16>, vector<2x16xf32> -> vector<2x16xf32>
    %86 = vector.broadcast %13 : vector<1x16xf32> to vector<2x16xf32>
    %87 = arith.addf %85, %86 : vector<2x16xf32>
    %cst_39 = arith.constant dense<0xFF800000> : vector<2xf32>
    %88 = vector.multi_reduction <maximumf>, %87, %cst_39 [1] : vector<2x16xf32> to vector<2xf32>
    %89 = vector.shape_cast %88 : vector<2xf32> to vector<2x1xf32>
    %90 = vector.broadcast %89 : vector<2x1xf32> to vector<2x16xf32>
    %91 = arith.subf %87, %90 : vector<2x16xf32>
    %92 = math.exp %91 : vector<2x16xf32>
    %cst_40 = arith.constant dense<0.000000e+00> : vector<2xf32>
    %93 = vector.multi_reduction <add>, %92, %cst_40 [1] : vector<2x16xf32> to vector<2xf32>
    %94 = vector.shape_cast %93 : vector<2xf32> to vector<2x1xf32>
    %95 = math.log %94 : vector<2x1xf32>
    %96 = vector.broadcast %95 : vector<2x1xf32> to vector<2x16xf32>
    %97 = arith.subf %91, %96 : vector<2x16xf32>
    %cst_41 = arith.constant 0.000000e+00 : f32
    %98 = vector.broadcast %cst_41 : f32 to vector<2x16xf32>
    %99 = arith.cmpf oeq, %91, %98 : vector<2x16xf32>
    %c16_i32 = arith.constant 16 : i32
    %100 = vector.broadcast %c16_i32 : i32 to vector<2x16xi32>
    %101 = arith.select %99, %14, %100 : vector<2x16xi1>, vector<2x16xi32>
    %cst_42 = arith.constant dense<2147483647> : vector<2xi32>
    %102 = vector.multi_reduction <minsi>, %101, %cst_42 [1] : vector<2x16xi32> to vector<2xi32>
    %103 = vector.shape_cast %102 : vector<2xi32> to vector<2x1xi32>
    %104 = vector.broadcast %103 : vector<2x1xi32> to vector<2x16xi32>
    %105 = arith.cmpi eq, %14, %104 : vector<2x16xi32>
    %cst_43 = arith.constant 1.000000e+00 : f32
    %cst_44 = arith.constant 0.000000e+00 : f32
    %106 = vector.broadcast %cst_43 : f32 to vector<2x16xf32>
    %107 = vector.broadcast %cst_44 : f32 to vector<2x16xf32>
    %108 = arith.select %105, %106, %107 : vector<2x16xi1>, vector<2x16xf32>
    %109 = arith.truncf %108 : vector<2x16xf32> to vector<2x16xbf16>
    %cst_45 = arith.constant dense<0.000000e+00> : vector<2x96xf32>
    %110 = tpu.matmul %109, %3, %cst_45 {dimension_numbers = #tpu.dot_dimension_numbers<[1], [0], [0], [1], [0, 0, 1, 1], [], []>} : vector<2x16xbf16>, vector<16x96xbf16>, vector<2x96xf32> -> vector<2x96xf32>
    %111 = arith.addf %110, %23 : vector<2x96xf32>
    %112 = arith.truncf %55 : vector<2x32xf32> to vector<2x32xbf16>
    %cst_46 = arith.constant dense<0.000000e+00> : vector<2x96xf32>
    %113 = tpu.matmul %112, %5, %cst_46 {dimension_numbers = #tpu.dot_dimension_numbers<[1], [0], [0], [1], [0, 0, 1, 1], [], []>} : vector<2x32xbf16>, vector<32x96xbf16>, vector<2x96xf32> -> vector<2x96xf32>
    %114 = vector.broadcast %7 : vector<1x96xf32> to vector<2x96xf32>
    %115 = arith.addf %113, %114 : vector<2x96xf32>
    %116 = vector.extract_strided_slice %111 {offsets = [0, 0], sizes = [2, 64], strides = [1, 1]} : vector<2x96xf32> to vector<2x64xf32>
    %117 = vector.extract_strided_slice %115 {offsets = [0, 0], sizes = [2, 64], strides = [1, 1]} : vector<2x96xf32> to vector<2x64xf32>
    %118 = arith.addf %116, %117 : vector<2x64xf32>
    %119 = arith.negf %118 : vector<2x64xf32>
    %120 = math.exp %119 : vector<2x64xf32>
    %cst_47 = arith.constant 1.000000e+00 : f32
    %121 = vector.broadcast %cst_47 : f32 to vector<2x64xf32>
    %122 = arith.addf %121, %120 : vector<2x64xf32>
    %123 = arith.divf %121, %122 : vector<2x64xf32>
    %124 = vector.extract_strided_slice %123 {offsets = [0, 0], sizes = [2, 32], strides = [1, 1]} : vector<2x64xf32> to vector<2x32xf32>
    %125 = vector.extract_strided_slice %123 {offsets = [0, 32], sizes = [2, 32], strides = [1, 1]} : vector<2x64xf32> to vector<2x32xf32>
    %126 = vector.extract_strided_slice %111 {offsets = [0, 64], sizes = [2, 32], strides = [1, 1]} : vector<2x96xf32> to vector<2x32xf32>
    %127 = vector.extract_strided_slice %115 {offsets = [0, 64], sizes = [2, 32], strides = [1, 1]} : vector<2x96xf32> to vector<2x32xf32>
    %128 = arith.mulf %124, %127 : vector<2x32xf32>
    %129 = arith.addf %126, %128 : vector<2x32xf32>
    %130 = math.tanh %129 : vector<2x32xf32>
    %cst_48 = arith.constant 1.000000e+00 : f32
    %131 = vector.broadcast %cst_48 : f32 to vector<2x32xf32>
    %132 = arith.subf %131, %125 : vector<2x32xf32>
    %133 = arith.mulf %132, %130 : vector<2x32xf32>
    %134 = arith.mulf %125, %55 : vector<2x32xf32>
    %135 = arith.addf %133, %134 : vector<2x32xf32>
    %136 = arith.truncf %135 : vector<2x32xf32> to vector<2x32xbf16>
    %cst_49 = arith.constant dense<0.000000e+00> : vector<2x96xf32>
    %137 = tpu.matmul %136, %8, %cst_49 {dimension_numbers = #tpu.dot_dimension_numbers<[1], [0], [0], [1], [0, 0, 1, 1], [], []>} : vector<2x32xbf16>, vector<32x96xbf16>, vector<2x96xf32> -> vector<2x96xf32>
    %138 = vector.broadcast %10 : vector<1x96xf32> to vector<2x96xf32>
    %139 = arith.addf %137, %138 : vector<2x96xf32>
    %140 = arith.truncf %83 : vector<2x32xf32> to vector<2x32xbf16>
    %cst_50 = arith.constant dense<0.000000e+00> : vector<2x96xf32>
    %141 = tpu.matmul %140, %9, %cst_50 {dimension_numbers = #tpu.dot_dimension_numbers<[1], [0], [0], [1], [0, 0, 1, 1], [], []>} : vector<2x32xbf16>, vector<32x96xbf16>, vector<2x96xf32> -> vector<2x96xf32>
    %142 = vector.broadcast %11 : vector<1x96xf32> to vector<2x96xf32>
    %143 = arith.addf %141, %142 : vector<2x96xf32>
    %144 = vector.extract_strided_slice %139 {offsets = [0, 0], sizes = [2, 64], strides = [1, 1]} : vector<2x96xf32> to vector<2x64xf32>
    %145 = vector.extract_strided_slice %143 {offsets = [0, 0], sizes = [2, 64], strides = [1, 1]} : vector<2x96xf32> to vector<2x64xf32>
    %146 = arith.addf %144, %145 : vector<2x64xf32>
    %147 = arith.negf %146 : vector<2x64xf32>
    %148 = math.exp %147 : vector<2x64xf32>
    %cst_51 = arith.constant 1.000000e+00 : f32
    %149 = vector.broadcast %cst_51 : f32 to vector<2x64xf32>
    %150 = arith.addf %149, %148 : vector<2x64xf32>
    %151 = arith.divf %149, %150 : vector<2x64xf32>
    %152 = vector.extract_strided_slice %151 {offsets = [0, 0], sizes = [2, 32], strides = [1, 1]} : vector<2x64xf32> to vector<2x32xf32>
    %153 = vector.extract_strided_slice %151 {offsets = [0, 32], sizes = [2, 32], strides = [1, 1]} : vector<2x64xf32> to vector<2x32xf32>
    %154 = vector.extract_strided_slice %139 {offsets = [0, 64], sizes = [2, 32], strides = [1, 1]} : vector<2x96xf32> to vector<2x32xf32>
    %155 = vector.extract_strided_slice %143 {offsets = [0, 64], sizes = [2, 32], strides = [1, 1]} : vector<2x96xf32> to vector<2x32xf32>
    %156 = arith.mulf %152, %155 : vector<2x32xf32>
    %157 = arith.addf %154, %156 : vector<2x32xf32>
    %158 = math.tanh %157 : vector<2x32xf32>
    %cst_52 = arith.constant 1.000000e+00 : f32
    %159 = vector.broadcast %cst_52 : f32 to vector<2x32xf32>
    %160 = arith.subf %159, %153 : vector<2x32xf32>
    %161 = arith.mulf %160, %158 : vector<2x32xf32>
    %162 = arith.mulf %153, %83 : vector<2x32xf32>
    %163 = arith.addf %161, %162 : vector<2x32xf32>
    %164 = arith.truncf %163 : vector<2x32xf32> to vector<2x32xbf16>
    %cst_53 = arith.constant dense<0.000000e+00> : vector<2x16xf32>
    %165 = tpu.matmul %164, %12, %cst_53 {dimension_numbers = #tpu.dot_dimension_numbers<[1], [0], [0], [1], [0, 0, 1, 1], [], []>} : vector<2x32xbf16>, vector<32x16xbf16>, vector<2x16xf32> -> vector<2x16xf32>
    %166 = vector.broadcast %13 : vector<1x16xf32> to vector<2x16xf32>
    %167 = arith.addf %165, %166 : vector<2x16xf32>
    %cst_54 = arith.constant dense<0xFF800000> : vector<2xf32>
    %168 = vector.multi_reduction <maximumf>, %167, %cst_54 [1] : vector<2x16xf32> to vector<2xf32>
    %169 = vector.shape_cast %168 : vector<2xf32> to vector<2x1xf32>
    %170 = vector.broadcast %169 : vector<2x1xf32> to vector<2x16xf32>
    %171 = arith.subf %167, %170 : vector<2x16xf32>
    %172 = math.exp %171 : vector<2x16xf32>
    %cst_55 = arith.constant dense<0.000000e+00> : vector<2xf32>
    %173 = vector.multi_reduction <add>, %172, %cst_55 [1] : vector<2x16xf32> to vector<2xf32>
    %174 = vector.shape_cast %173 : vector<2xf32> to vector<2x1xf32>
    %175 = math.log %174 : vector<2x1xf32>
    %176 = vector.broadcast %175 : vector<2x1xf32> to vector<2x16xf32>
    %177 = arith.subf %171, %176 : vector<2x16xf32>
    %cst_56 = arith.constant 0.000000e+00 : f32
    %178 = vector.broadcast %cst_56 : f32 to vector<2x16xf32>
    %179 = arith.cmpf oeq, %171, %178 : vector<2x16xf32>
    %c16_i32_57 = arith.constant 16 : i32
    %180 = vector.broadcast %c16_i32_57 : i32 to vector<2x16xi32>
    %181 = arith.select %179, %14, %180 : vector<2x16xi1>, vector<2x16xi32>
    %cst_58 = arith.constant dense<2147483647> : vector<2xi32>
    %182 = vector.multi_reduction <minsi>, %181, %cst_58 [1] : vector<2x16xi32> to vector<2xi32>
    %183 = vector.shape_cast %182 : vector<2xi32> to vector<2x1xi32>
    %184 = vector.broadcast %183 : vector<2x1xi32> to vector<2x16xi32>
    %185 = arith.cmpi eq, %14, %184 : vector<2x16xi32>
    %cst_59 = arith.constant 1.000000e+00 : f32
    %cst_60 = arith.constant 0.000000e+00 : f32
    %186 = vector.broadcast %cst_59 : f32 to vector<2x16xf32>
    %187 = vector.broadcast %cst_60 : f32 to vector<2x16xf32>
    %188 = arith.select %185, %186, %187 : vector<2x16xi1>, vector<2x16xf32>
    %189 = arith.truncf %188 : vector<2x16xf32> to vector<2x16xbf16>
    %cst_61 = arith.constant dense<0.000000e+00> : vector<2x96xf32>
    %190 = tpu.matmul %189, %3, %cst_61 {dimension_numbers = #tpu.dot_dimension_numbers<[1], [0], [0], [1], [0, 0, 1, 1], [], []>} : vector<2x16xbf16>, vector<16x96xbf16>, vector<2x96xf32> -> vector<2x96xf32>
    %191 = arith.addf %190, %23 : vector<2x96xf32>
    %192 = arith.truncf %135 : vector<2x32xf32> to vector<2x32xbf16>
    %cst_62 = arith.constant dense<0.000000e+00> : vector<2x96xf32>
    %193 = tpu.matmul %192, %5, %cst_62 {dimension_numbers = #tpu.dot_dimension_numbers<[1], [0], [0], [1], [0, 0, 1, 1], [], []>} : vector<2x32xbf16>, vector<32x96xbf16>, vector<2x96xf32> -> vector<2x96xf32>
    %194 = vector.broadcast %7 : vector<1x96xf32> to vector<2x96xf32>
    %195 = arith.addf %193, %194 : vector<2x96xf32>
    %196 = vector.extract_strided_slice %191 {offsets = [0, 0], sizes = [2, 64], strides = [1, 1]} : vector<2x96xf32> to vector<2x64xf32>
    %197 = vector.extract_strided_slice %195 {offsets = [0, 0], sizes = [2, 64], strides = [1, 1]} : vector<2x96xf32> to vector<2x64xf32>
    %198 = arith.addf %196, %197 : vector<2x64xf32>
    %199 = arith.negf %198 : vector<2x64xf32>
    %200 = math.exp %199 : vector<2x64xf32>
    %cst_63 = arith.constant 1.000000e+00 : f32
    %201 = vector.broadcast %cst_63 : f32 to vector<2x64xf32>
    %202 = arith.addf %201, %200 : vector<2x64xf32>
    %203 = arith.divf %201, %202 : vector<2x64xf32>
    %204 = vector.extract_strided_slice %203 {offsets = [0, 0], sizes = [2, 32], strides = [1, 1]} : vector<2x64xf32> to vector<2x32xf32>
    %205 = vector.extract_strided_slice %203 {offsets = [0, 32], sizes = [2, 32], strides = [1, 1]} : vector<2x64xf32> to vector<2x32xf32>
    %206 = vector.extract_strided_slice %191 {offsets = [0, 64], sizes = [2, 32], strides = [1, 1]} : vector<2x96xf32> to vector<2x32xf32>
    %207 = vector.extract_strided_slice %195 {offsets = [0, 64], sizes = [2, 32], strides = [1, 1]} : vector<2x96xf32> to vector<2x32xf32>
    %208 = arith.mulf %204, %207 : vector<2x32xf32>
    %209 = arith.addf %206, %208 : vector<2x32xf32>
    %210 = math.tanh %209 : vector<2x32xf32>
    %cst_64 = arith.constant 1.000000e+00 : f32
    %211 = vector.broadcast %cst_64 : f32 to vector<2x32xf32>
    %212 = arith.subf %211, %205 : vector<2x32xf32>
    %213 = arith.mulf %212, %210 : vector<2x32xf32>
    %214 = arith.mulf %205, %135 : vector<2x32xf32>
    %215 = arith.addf %213, %214 : vector<2x32xf32>
    %216 = arith.truncf %215 : vector<2x32xf32> to vector<2x32xbf16>
    %cst_65 = arith.constant dense<0.000000e+00> : vector<2x96xf32>
    %217 = tpu.matmul %216, %8, %cst_65 {dimension_numbers = #tpu.dot_dimension_numbers<[1], [0], [0], [1], [0, 0, 1, 1], [], []>} : vector<2x32xbf16>, vector<32x96xbf16>, vector<2x96xf32> -> vector<2x96xf32>
    %218 = vector.broadcast %10 : vector<1x96xf32> to vector<2x96xf32>
    %219 = arith.addf %217, %218 : vector<2x96xf32>
    %220 = arith.truncf %163 : vector<2x32xf32> to vector<2x32xbf16>
    %cst_66 = arith.constant dense<0.000000e+00> : vector<2x96xf32>
    %221 = tpu.matmul %220, %9, %cst_66 {dimension_numbers = #tpu.dot_dimension_numbers<[1], [0], [0], [1], [0, 0, 1, 1], [], []>} : vector<2x32xbf16>, vector<32x96xbf16>, vector<2x96xf32> -> vector<2x96xf32>
    %222 = vector.broadcast %11 : vector<1x96xf32> to vector<2x96xf32>
    %223 = arith.addf %221, %222 : vector<2x96xf32>
    %224 = vector.extract_strided_slice %219 {offsets = [0, 0], sizes = [2, 64], strides = [1, 1]} : vector<2x96xf32> to vector<2x64xf32>
    %225 = vector.extract_strided_slice %223 {offsets = [0, 0], sizes = [2, 64], strides = [1, 1]} : vector<2x96xf32> to vector<2x64xf32>
    %226 = arith.addf %224, %225 : vector<2x64xf32>
    %227 = arith.negf %226 : vector<2x64xf32>
    %228 = math.exp %227 : vector<2x64xf32>
    %cst_67 = arith.constant 1.000000e+00 : f32
    %229 = vector.broadcast %cst_67 : f32 to vector<2x64xf32>
    %230 = arith.addf %229, %228 : vector<2x64xf32>
    %231 = arith.divf %229, %230 : vector<2x64xf32>
    %232 = vector.extract_strided_slice %231 {offsets = [0, 0], sizes = [2, 32], strides = [1, 1]} : vector<2x64xf32> to vector<2x32xf32>
    %233 = vector.extract_strided_slice %231 {offsets = [0, 32], sizes = [2, 32], strides = [1, 1]} : vector<2x64xf32> to vector<2x32xf32>
    %234 = vector.extract_strided_slice %219 {offsets = [0, 64], sizes = [2, 32], strides = [1, 1]} : vector<2x96xf32> to vector<2x32xf32>
    %235 = vector.extract_strided_slice %223 {offsets = [0, 64], sizes = [2, 32], strides = [1, 1]} : vector<2x96xf32> to vector<2x32xf32>
    %236 = arith.mulf %232, %235 : vector<2x32xf32>
    %237 = arith.addf %234, %236 : vector<2x32xf32>
    %238 = math.tanh %237 : vector<2x32xf32>
    %cst_68 = arith.constant 1.000000e+00 : f32
    %239 = vector.broadcast %cst_68 : f32 to vector<2x32xf32>
    %240 = arith.subf %239, %233 : vector<2x32xf32>
    %241 = arith.mulf %240, %238 : vector<2x32xf32>
    %242 = arith.mulf %233, %163 : vector<2x32xf32>
    %243 = arith.addf %241, %242 : vector<2x32xf32>
    %244 = arith.truncf %243 : vector<2x32xf32> to vector<2x32xbf16>
    %cst_69 = arith.constant dense<0.000000e+00> : vector<2x16xf32>
    %245 = tpu.matmul %244, %12, %cst_69 {dimension_numbers = #tpu.dot_dimension_numbers<[1], [0], [0], [1], [0, 0, 1, 1], [], []>} : vector<2x32xbf16>, vector<32x16xbf16>, vector<2x16xf32> -> vector<2x16xf32>
    %246 = vector.broadcast %13 : vector<1x16xf32> to vector<2x16xf32>
    %247 = arith.addf %245, %246 : vector<2x16xf32>
    %cst_70 = arith.constant dense<0xFF800000> : vector<2xf32>
    %248 = vector.multi_reduction <maximumf>, %247, %cst_70 [1] : vector<2x16xf32> to vector<2xf32>
    %249 = vector.shape_cast %248 : vector<2xf32> to vector<2x1xf32>
    %250 = vector.broadcast %249 : vector<2x1xf32> to vector<2x16xf32>
    %251 = arith.subf %247, %250 : vector<2x16xf32>
    %252 = math.exp %251 : vector<2x16xf32>
    %cst_71 = arith.constant dense<0.000000e+00> : vector<2xf32>
    %253 = vector.multi_reduction <add>, %252, %cst_71 [1] : vector<2x16xf32> to vector<2xf32>
    %254 = vector.shape_cast %253 : vector<2xf32> to vector<2x1xf32>
    %255 = math.log %254 : vector<2x1xf32>
    %256 = vector.broadcast %255 : vector<2x1xf32> to vector<2x16xf32>
    %257 = arith.subf %251, %256 : vector<2x16xf32>
    %cst_72 = arith.constant 0.000000e+00 : f32
    %258 = vector.broadcast %cst_72 : f32 to vector<2x16xf32>
    %259 = arith.cmpf oeq, %251, %258 : vector<2x16xf32>
    %c16_i32_73 = arith.constant 16 : i32
    %260 = vector.broadcast %c16_i32_73 : i32 to vector<2x16xi32>
    %261 = arith.select %259, %14, %260 : vector<2x16xi1>, vector<2x16xi32>
    %cst_74 = arith.constant dense<2147483647> : vector<2xi32>
    %262 = vector.multi_reduction <minsi>, %261, %cst_74 [1] : vector<2x16xi32> to vector<2xi32>
    %263 = vector.shape_cast %262 : vector<2xi32> to vector<2x1xi32>
    %264 = vector.broadcast %263 : vector<2x1xi32> to vector<2x16xi32>
    %265 = arith.cmpi eq, %14, %264 : vector<2x16xi32>
    %cst_75 = arith.constant 1.000000e+00 : f32
    %cst_76 = arith.constant 0.000000e+00 : f32
    %266 = vector.broadcast %cst_75 : f32 to vector<2x16xf32>
    %267 = vector.broadcast %cst_76 : f32 to vector<2x16xf32>
    %268 = arith.select %265, %266, %267 : vector<2x16xi1>, vector<2x16xf32>
    %269 = arith.truncf %268 : vector<2x16xf32> to vector<2x16xbf16>
    %cst_77 = arith.constant dense<0.000000e+00> : vector<2x96xf32>
    %270 = tpu.matmul %269, %3, %cst_77 {dimension_numbers = #tpu.dot_dimension_numbers<[1], [0], [0], [1], [0, 0, 1, 1], [], []>} : vector<2x16xbf16>, vector<16x96xbf16>, vector<2x96xf32> -> vector<2x96xf32>
    %271 = arith.addf %270, %23 : vector<2x96xf32>
    %272 = arith.truncf %215 : vector<2x32xf32> to vector<2x32xbf16>
    %cst_78 = arith.constant dense<0.000000e+00> : vector<2x96xf32>
    %273 = tpu.matmul %272, %5, %cst_78 {dimension_numbers = #tpu.dot_dimension_numbers<[1], [0], [0], [1], [0, 0, 1, 1], [], []>} : vector<2x32xbf16>, vector<32x96xbf16>, vector<2x96xf32> -> vector<2x96xf32>
    %274 = vector.broadcast %7 : vector<1x96xf32> to vector<2x96xf32>
    %275 = arith.addf %273, %274 : vector<2x96xf32>
    %276 = vector.extract_strided_slice %271 {offsets = [0, 0], sizes = [2, 64], strides = [1, 1]} : vector<2x96xf32> to vector<2x64xf32>
    %277 = vector.extract_strided_slice %275 {offsets = [0, 0], sizes = [2, 64], strides = [1, 1]} : vector<2x96xf32> to vector<2x64xf32>
    %278 = arith.addf %276, %277 : vector<2x64xf32>
    %279 = arith.negf %278 : vector<2x64xf32>
    %280 = math.exp %279 : vector<2x64xf32>
    %cst_79 = arith.constant 1.000000e+00 : f32
    %281 = vector.broadcast %cst_79 : f32 to vector<2x64xf32>
    %282 = arith.addf %281, %280 : vector<2x64xf32>
    %283 = arith.divf %281, %282 : vector<2x64xf32>
    %284 = vector.extract_strided_slice %283 {offsets = [0, 0], sizes = [2, 32], strides = [1, 1]} : vector<2x64xf32> to vector<2x32xf32>
    %285 = vector.extract_strided_slice %283 {offsets = [0, 32], sizes = [2, 32], strides = [1, 1]} : vector<2x64xf32> to vector<2x32xf32>
    %286 = vector.extract_strided_slice %271 {offsets = [0, 64], sizes = [2, 32], strides = [1, 1]} : vector<2x96xf32> to vector<2x32xf32>
    %287 = vector.extract_strided_slice %275 {offsets = [0, 64], sizes = [2, 32], strides = [1, 1]} : vector<2x96xf32> to vector<2x32xf32>
    %288 = arith.mulf %284, %287 : vector<2x32xf32>
    %289 = arith.addf %286, %288 : vector<2x32xf32>
    %290 = math.tanh %289 : vector<2x32xf32>
    %cst_80 = arith.constant 1.000000e+00 : f32
    %291 = vector.broadcast %cst_80 : f32 to vector<2x32xf32>
    %292 = arith.subf %291, %285 : vector<2x32xf32>
    %293 = arith.mulf %292, %290 : vector<2x32xf32>
    %294 = arith.mulf %285, %215 : vector<2x32xf32>
    %295 = arith.addf %293, %294 : vector<2x32xf32>
    %296 = arith.truncf %295 : vector<2x32xf32> to vector<2x32xbf16>
    %cst_81 = arith.constant dense<0.000000e+00> : vector<2x96xf32>
    %297 = tpu.matmul %296, %8, %cst_81 {dimension_numbers = #tpu.dot_dimension_numbers<[1], [0], [0], [1], [0, 0, 1, 1], [], []>} : vector<2x32xbf16>, vector<32x96xbf16>, vector<2x96xf32> -> vector<2x96xf32>
    %298 = vector.broadcast %10 : vector<1x96xf32> to vector<2x96xf32>
    %299 = arith.addf %297, %298 : vector<2x96xf32>
    %300 = arith.truncf %243 : vector<2x32xf32> to vector<2x32xbf16>
    %cst_82 = arith.constant dense<0.000000e+00> : vector<2x96xf32>
    %301 = tpu.matmul %300, %9, %cst_82 {dimension_numbers = #tpu.dot_dimension_numbers<[1], [0], [0], [1], [0, 0, 1, 1], [], []>} : vector<2x32xbf16>, vector<32x96xbf16>, vector<2x96xf32> -> vector<2x96xf32>
    %302 = vector.broadcast %11 : vector<1x96xf32> to vector<2x96xf32>
    %303 = arith.addf %301, %302 : vector<2x96xf32>
    %304 = vector.extract_strided_slice %299 {offsets = [0, 0], sizes = [2, 64], strides = [1, 1]} : vector<2x96xf32> to vector<2x64xf32>
    %305 = vector.extract_strided_slice %303 {offsets = [0, 0], sizes = [2, 64], strides = [1, 1]} : vector<2x96xf32> to vector<2x64xf32>
    %306 = arith.addf %304, %305 : vector<2x64xf32>
    %307 = arith.negf %306 : vector<2x64xf32>
    %308 = math.exp %307 : vector<2x64xf32>
    %cst_83 = arith.constant 1.000000e+00 : f32
    %309 = vector.broadcast %cst_83 : f32 to vector<2x64xf32>
    %310 = arith.addf %309, %308 : vector<2x64xf32>
    %311 = arith.divf %309, %310 : vector<2x64xf32>
    %312 = vector.extract_strided_slice %311 {offsets = [0, 0], sizes = [2, 32], strides = [1, 1]} : vector<2x64xf32> to vector<2x32xf32>
    %313 = vector.extract_strided_slice %311 {offsets = [0, 32], sizes = [2, 32], strides = [1, 1]} : vector<2x64xf32> to vector<2x32xf32>
    %314 = vector.extract_strided_slice %299 {offsets = [0, 64], sizes = [2, 32], strides = [1, 1]} : vector<2x96xf32> to vector<2x32xf32>
    %315 = vector.extract_strided_slice %303 {offsets = [0, 64], sizes = [2, 32], strides = [1, 1]} : vector<2x96xf32> to vector<2x32xf32>
    %316 = arith.mulf %312, %315 : vector<2x32xf32>
    %317 = arith.addf %314, %316 : vector<2x32xf32>
    %318 = math.tanh %317 : vector<2x32xf32>
    %cst_84 = arith.constant 1.000000e+00 : f32
    %319 = vector.broadcast %cst_84 : f32 to vector<2x32xf32>
    %320 = arith.subf %319, %313 : vector<2x32xf32>
    %321 = arith.mulf %320, %318 : vector<2x32xf32>
    %322 = arith.mulf %313, %243 : vector<2x32xf32>
    %323 = arith.addf %321, %322 : vector<2x32xf32>
    %324 = arith.truncf %323 : vector<2x32xf32> to vector<2x32xbf16>
    %cst_85 = arith.constant dense<0.000000e+00> : vector<2x16xf32>
    %325 = tpu.matmul %324, %12, %cst_85 {dimension_numbers = #tpu.dot_dimension_numbers<[1], [0], [0], [1], [0, 0, 1, 1], [], []>} : vector<2x32xbf16>, vector<32x16xbf16>, vector<2x16xf32> -> vector<2x16xf32>
    %326 = vector.broadcast %13 : vector<1x16xf32> to vector<2x16xf32>
    %327 = arith.addf %325, %326 : vector<2x16xf32>
    %cst_86 = arith.constant dense<0xFF800000> : vector<2xf32>
    %328 = vector.multi_reduction <maximumf>, %327, %cst_86 [1] : vector<2x16xf32> to vector<2xf32>
    %329 = vector.shape_cast %328 : vector<2xf32> to vector<2x1xf32>
    %330 = vector.broadcast %329 : vector<2x1xf32> to vector<2x16xf32>
    %331 = arith.subf %327, %330 : vector<2x16xf32>
    %332 = math.exp %331 : vector<2x16xf32>
    %cst_87 = arith.constant dense<0.000000e+00> : vector<2xf32>
    %333 = vector.multi_reduction <add>, %332, %cst_87 [1] : vector<2x16xf32> to vector<2xf32>
    %334 = vector.shape_cast %333 : vector<2xf32> to vector<2x1xf32>
    %335 = math.log %334 : vector<2x1xf32>
    %336 = vector.broadcast %335 : vector<2x1xf32> to vector<2x16xf32>
    %337 = arith.subf %331, %336 : vector<2x16xf32>
    %cst_88 = arith.constant 0.000000e+00 : f32
    %338 = vector.broadcast %cst_88 : f32 to vector<2x16xf32>
    %339 = arith.cmpf oeq, %331, %338 : vector<2x16xf32>
    %c16_i32_89 = arith.constant 16 : i32
    %340 = vector.broadcast %c16_i32_89 : i32 to vector<2x16xi32>
    %341 = arith.select %339, %14, %340 : vector<2x16xi1>, vector<2x16xi32>
    %cst_90 = arith.constant dense<2147483647> : vector<2xi32>
    %342 = vector.multi_reduction <minsi>, %341, %cst_90 [1] : vector<2x16xi32> to vector<2xi32>
    %343 = vector.shape_cast %342 : vector<2xi32> to vector<2x1xi32>
    %344 = vector.broadcast %343 : vector<2x1xi32> to vector<2x16xi32>
    %345 = arith.cmpi eq, %14, %344 : vector<2x16xi32>
    %cst_91 = arith.constant 1.000000e+00 : f32
    %cst_92 = arith.constant 0.000000e+00 : f32
    %346 = vector.broadcast %cst_91 : f32 to vector<2x16xf32>
    %347 = vector.broadcast %cst_92 : f32 to vector<2x16xf32>
    %348 = arith.select %345, %346, %347 : vector<2x16xi1>, vector<2x16xf32>
    %349 = arith.truncf %348 : vector<2x16xf32> to vector<2x16xbf16>
    %cst_93 = arith.constant dense<0.000000e+00> : vector<2x96xf32>
    %350 = tpu.matmul %349, %3, %cst_93 {dimension_numbers = #tpu.dot_dimension_numbers<[1], [0], [0], [1], [0, 0, 1, 1], [], []>} : vector<2x16xbf16>, vector<16x96xbf16>, vector<2x96xf32> -> vector<2x96xf32>
    %351 = arith.addf %350, %23 : vector<2x96xf32>
    %352 = arith.truncf %295 : vector<2x32xf32> to vector<2x32xbf16>
    %cst_94 = arith.constant dense<0.000000e+00> : vector<2x96xf32>
    %353 = tpu.matmul %352, %5, %cst_94 {dimension_numbers = #tpu.dot_dimension_numbers<[1], [0], [0], [1], [0, 0, 1, 1], [], []>} : vector<2x32xbf16>, vector<32x96xbf16>, vector<2x96xf32> -> vector<2x96xf32>
    %354 = vector.broadcast %7 : vector<1x96xf32> to vector<2x96xf32>
    %355 = arith.addf %353, %354 : vector<2x96xf32>
    %356 = vector.extract_strided_slice %351 {offsets = [0, 0], sizes = [2, 64], strides = [1, 1]} : vector<2x96xf32> to vector<2x64xf32>
    %357 = vector.extract_strided_slice %355 {offsets = [0, 0], sizes = [2, 64], strides = [1, 1]} : vector<2x96xf32> to vector<2x64xf32>
    %358 = arith.addf %356, %357 : vector<2x64xf32>
    %359 = arith.negf %358 : vector<2x64xf32>
    %360 = math.exp %359 : vector<2x64xf32>
    %cst_95 = arith.constant 1.000000e+00 : f32
    %361 = vector.broadcast %cst_95 : f32 to vector<2x64xf32>
    %362 = arith.addf %361, %360 : vector<2x64xf32>
    %363 = arith.divf %361, %362 : vector<2x64xf32>
    %364 = vector.extract_strided_slice %363 {offsets = [0, 0], sizes = [2, 32], strides = [1, 1]} : vector<2x64xf32> to vector<2x32xf32>
    %365 = vector.extract_strided_slice %363 {offsets = [0, 32], sizes = [2, 32], strides = [1, 1]} : vector<2x64xf32> to vector<2x32xf32>
    %366 = vector.extract_strided_slice %351 {offsets = [0, 64], sizes = [2, 32], strides = [1, 1]} : vector<2x96xf32> to vector<2x32xf32>
    %367 = vector.extract_strided_slice %355 {offsets = [0, 64], sizes = [2, 32], strides = [1, 1]} : vector<2x96xf32> to vector<2x32xf32>
    %368 = arith.mulf %364, %367 : vector<2x32xf32>
    %369 = arith.addf %366, %368 : vector<2x32xf32>
    %370 = math.tanh %369 : vector<2x32xf32>
    %cst_96 = arith.constant 1.000000e+00 : f32
    %371 = vector.broadcast %cst_96 : f32 to vector<2x32xf32>
    %372 = arith.subf %371, %365 : vector<2x32xf32>
    %373 = arith.mulf %372, %370 : vector<2x32xf32>
    %374 = arith.mulf %365, %295 : vector<2x32xf32>
    %375 = arith.addf %373, %374 : vector<2x32xf32>
    %376 = arith.truncf %375 : vector<2x32xf32> to vector<2x32xbf16>
    %cst_97 = arith.constant dense<0.000000e+00> : vector<2x96xf32>
    %377 = tpu.matmul %376, %8, %cst_97 {dimension_numbers = #tpu.dot_dimension_numbers<[1], [0], [0], [1], [0, 0, 1, 1], [], []>} : vector<2x32xbf16>, vector<32x96xbf16>, vector<2x96xf32> -> vector<2x96xf32>
    %378 = vector.broadcast %10 : vector<1x96xf32> to vector<2x96xf32>
    %379 = arith.addf %377, %378 : vector<2x96xf32>
    %380 = arith.truncf %323 : vector<2x32xf32> to vector<2x32xbf16>
    %cst_98 = arith.constant dense<0.000000e+00> : vector<2x96xf32>
    %381 = tpu.matmul %380, %9, %cst_98 {dimension_numbers = #tpu.dot_dimension_numbers<[1], [0], [0], [1], [0, 0, 1, 1], [], []>} : vector<2x32xbf16>, vector<32x96xbf16>, vector<2x96xf32> -> vector<2x96xf32>
    %382 = vector.broadcast %11 : vector<1x96xf32> to vector<2x96xf32>
    %383 = arith.addf %381, %382 : vector<2x96xf32>
    %384 = vector.extract_strided_slice %379 {offsets = [0, 0], sizes = [2, 64], strides = [1, 1]} : vector<2x96xf32> to vector<2x64xf32>
    %385 = vector.extract_strided_slice %383 {offsets = [0, 0], sizes = [2, 64], strides = [1, 1]} : vector<2x96xf32> to vector<2x64xf32>
    %386 = arith.addf %384, %385 : vector<2x64xf32>
    %387 = arith.negf %386 : vector<2x64xf32>
    %388 = math.exp %387 : vector<2x64xf32>
    %cst_99 = arith.constant 1.000000e+00 : f32
    %389 = vector.broadcast %cst_99 : f32 to vector<2x64xf32>
    %390 = arith.addf %389, %388 : vector<2x64xf32>
    %391 = arith.divf %389, %390 : vector<2x64xf32>
    %392 = vector.extract_strided_slice %391 {offsets = [0, 0], sizes = [2, 32], strides = [1, 1]} : vector<2x64xf32> to vector<2x32xf32>
    %393 = vector.extract_strided_slice %391 {offsets = [0, 32], sizes = [2, 32], strides = [1, 1]} : vector<2x64xf32> to vector<2x32xf32>
    %394 = vector.extract_strided_slice %379 {offsets = [0, 64], sizes = [2, 32], strides = [1, 1]} : vector<2x96xf32> to vector<2x32xf32>
    %395 = vector.extract_strided_slice %383 {offsets = [0, 64], sizes = [2, 32], strides = [1, 1]} : vector<2x96xf32> to vector<2x32xf32>
    %396 = arith.mulf %392, %395 : vector<2x32xf32>
    %397 = arith.addf %394, %396 : vector<2x32xf32>
    %398 = math.tanh %397 : vector<2x32xf32>
    %cst_100 = arith.constant 1.000000e+00 : f32
    %399 = vector.broadcast %cst_100 : f32 to vector<2x32xf32>
    %400 = arith.subf %399, %393 : vector<2x32xf32>
    %401 = arith.mulf %400, %398 : vector<2x32xf32>
    %402 = arith.mulf %393, %323 : vector<2x32xf32>
    %403 = arith.addf %401, %402 : vector<2x32xf32>
    %404 = arith.truncf %403 : vector<2x32xf32> to vector<2x32xbf16>
    %cst_101 = arith.constant dense<0.000000e+00> : vector<2x16xf32>
    %405 = tpu.matmul %404, %12, %cst_101 {dimension_numbers = #tpu.dot_dimension_numbers<[1], [0], [0], [1], [0, 0, 1, 1], [], []>} : vector<2x32xbf16>, vector<32x16xbf16>, vector<2x16xf32> -> vector<2x16xf32>
    %406 = vector.broadcast %13 : vector<1x16xf32> to vector<2x16xf32>
    %407 = arith.addf %405, %406 : vector<2x16xf32>
    %cst_102 = arith.constant dense<0xFF800000> : vector<2xf32>
    %408 = vector.multi_reduction <maximumf>, %407, %cst_102 [1] : vector<2x16xf32> to vector<2xf32>
    %409 = vector.shape_cast %408 : vector<2xf32> to vector<2x1xf32>
    %410 = vector.broadcast %409 : vector<2x1xf32> to vector<2x16xf32>
    %411 = arith.subf %407, %410 : vector<2x16xf32>
    %412 = math.exp %411 : vector<2x16xf32>
    %cst_103 = arith.constant dense<0.000000e+00> : vector<2xf32>
    %413 = vector.multi_reduction <add>, %412, %cst_103 [1] : vector<2x16xf32> to vector<2xf32>
    %414 = vector.shape_cast %413 : vector<2xf32> to vector<2x1xf32>
    %415 = math.log %414 : vector<2x1xf32>
    %416 = vector.broadcast %415 : vector<2x1xf32> to vector<2x16xf32>
    %417 = arith.subf %411, %416 : vector<2x16xf32>
    %cst_104 = arith.constant 0.000000e+00 : f32
    %418 = vector.broadcast %cst_104 : f32 to vector<2x16xf32>
    %419 = arith.cmpf oeq, %411, %418 : vector<2x16xf32>
    %c16_i32_105 = arith.constant 16 : i32
    %420 = vector.broadcast %c16_i32_105 : i32 to vector<2x16xi32>
    %421 = arith.select %419, %14, %420 : vector<2x16xi1>, vector<2x16xi32>
    %cst_106 = arith.constant dense<2147483647> : vector<2xi32>
    %422 = vector.multi_reduction <minsi>, %421, %cst_106 [1] : vector<2x16xi32> to vector<2xi32>
    %423 = vector.shape_cast %422 : vector<2xi32> to vector<2x1xi32>
    %424 = vector.broadcast %423 : vector<2x1xi32> to vector<2x16xi32>
    %425 = arith.cmpi eq, %14, %424 : vector<2x16xi32>
    %cst_107 = arith.constant 1.000000e+00 : f32
    %cst_108 = arith.constant 0.000000e+00 : f32
    %426 = vector.broadcast %cst_107 : f32 to vector<2x16xf32>
    %427 = vector.broadcast %cst_108 : f32 to vector<2x16xf32>
    %428 = arith.select %425, %426, %427 : vector<2x16xi1>, vector<2x16xf32>
    %429 = arith.truncf %428 : vector<2x16xf32> to vector<2x16xbf16>
    %cst_109 = arith.constant dense<0.000000e+00> : vector<2x96xf32>
    %430 = tpu.matmul %429, %3, %cst_109 {dimension_numbers = #tpu.dot_dimension_numbers<[1], [0], [0], [1], [0, 0, 1, 1], [], []>} : vector<2x16xbf16>, vector<16x96xbf16>, vector<2x96xf32> -> vector<2x96xf32>
    %431 = arith.addf %430, %23 : vector<2x96xf32>
    %432 = arith.truncf %375 : vector<2x32xf32> to vector<2x32xbf16>
    %cst_110 = arith.constant dense<0.000000e+00> : vector<2x96xf32>
    %433 = tpu.matmul %432, %5, %cst_110 {dimension_numbers = #tpu.dot_dimension_numbers<[1], [0], [0], [1], [0, 0, 1, 1], [], []>} : vector<2x32xbf16>, vector<32x96xbf16>, vector<2x96xf32> -> vector<2x96xf32>
    %434 = vector.broadcast %7 : vector<1x96xf32> to vector<2x96xf32>
    %435 = arith.addf %433, %434 : vector<2x96xf32>
    %436 = vector.extract_strided_slice %431 {offsets = [0, 0], sizes = [2, 64], strides = [1, 1]} : vector<2x96xf32> to vector<2x64xf32>
    %437 = vector.extract_strided_slice %435 {offsets = [0, 0], sizes = [2, 64], strides = [1, 1]} : vector<2x96xf32> to vector<2x64xf32>
    %438 = arith.addf %436, %437 : vector<2x64xf32>
    %439 = arith.negf %438 : vector<2x64xf32>
    %440 = math.exp %439 : vector<2x64xf32>
    %cst_111 = arith.constant 1.000000e+00 : f32
    %441 = vector.broadcast %cst_111 : f32 to vector<2x64xf32>
    %442 = arith.addf %441, %440 : vector<2x64xf32>
    %443 = arith.divf %441, %442 : vector<2x64xf32>
    %444 = vector.extract_strided_slice %443 {offsets = [0, 0], sizes = [2, 32], strides = [1, 1]} : vector<2x64xf32> to vector<2x32xf32>
    %445 = vector.extract_strided_slice %443 {offsets = [0, 32], sizes = [2, 32], strides = [1, 1]} : vector<2x64xf32> to vector<2x32xf32>
    %446 = vector.extract_strided_slice %431 {offsets = [0, 64], sizes = [2, 32], strides = [1, 1]} : vector<2x96xf32> to vector<2x32xf32>
    %447 = vector.extract_strided_slice %435 {offsets = [0, 64], sizes = [2, 32], strides = [1, 1]} : vector<2x96xf32> to vector<2x32xf32>
    %448 = arith.mulf %444, %447 : vector<2x32xf32>
    %449 = arith.addf %446, %448 : vector<2x32xf32>
    %450 = math.tanh %449 : vector<2x32xf32>
    %cst_112 = arith.constant 1.000000e+00 : f32
    %451 = vector.broadcast %cst_112 : f32 to vector<2x32xf32>
    %452 = arith.subf %451, %445 : vector<2x32xf32>
    %453 = arith.mulf %452, %450 : vector<2x32xf32>
    %454 = arith.mulf %445, %375 : vector<2x32xf32>
    %455 = arith.addf %453, %454 : vector<2x32xf32>
    %456 = arith.truncf %455 : vector<2x32xf32> to vector<2x32xbf16>
    %cst_113 = arith.constant dense<0.000000e+00> : vector<2x96xf32>
    %457 = tpu.matmul %456, %8, %cst_113 {dimension_numbers = #tpu.dot_dimension_numbers<[1], [0], [0], [1], [0, 0, 1, 1], [], []>} : vector<2x32xbf16>, vector<32x96xbf16>, vector<2x96xf32> -> vector<2x96xf32>
    %458 = vector.broadcast %10 : vector<1x96xf32> to vector<2x96xf32>
    %459 = arith.addf %457, %458 : vector<2x96xf32>
    %460 = arith.truncf %403 : vector<2x32xf32> to vector<2x32xbf16>
    %cst_114 = arith.constant dense<0.000000e+00> : vector<2x96xf32>
    %461 = tpu.matmul %460, %9, %cst_114 {dimension_numbers = #tpu.dot_dimension_numbers<[1], [0], [0], [1], [0, 0, 1, 1], [], []>} : vector<2x32xbf16>, vector<32x96xbf16>, vector<2x96xf32> -> vector<2x96xf32>
    %462 = vector.broadcast %11 : vector<1x96xf32> to vector<2x96xf32>
    %463 = arith.addf %461, %462 : vector<2x96xf32>
    %464 = vector.extract_strided_slice %459 {offsets = [0, 0], sizes = [2, 64], strides = [1, 1]} : vector<2x96xf32> to vector<2x64xf32>
    %465 = vector.extract_strided_slice %463 {offsets = [0, 0], sizes = [2, 64], strides = [1, 1]} : vector<2x96xf32> to vector<2x64xf32>
    %466 = arith.addf %464, %465 : vector<2x64xf32>
    %467 = arith.negf %466 : vector<2x64xf32>
    %468 = math.exp %467 : vector<2x64xf32>
    %cst_115 = arith.constant 1.000000e+00 : f32
    %469 = vector.broadcast %cst_115 : f32 to vector<2x64xf32>
    %470 = arith.addf %469, %468 : vector<2x64xf32>
    %471 = arith.divf %469, %470 : vector<2x64xf32>
    %472 = vector.extract_strided_slice %471 {offsets = [0, 0], sizes = [2, 32], strides = [1, 1]} : vector<2x64xf32> to vector<2x32xf32>
    %473 = vector.extract_strided_slice %471 {offsets = [0, 32], sizes = [2, 32], strides = [1, 1]} : vector<2x64xf32> to vector<2x32xf32>
    %474 = vector.extract_strided_slice %459 {offsets = [0, 64], sizes = [2, 32], strides = [1, 1]} : vector<2x96xf32> to vector<2x32xf32>
    %475 = vector.extract_strided_slice %463 {offsets = [0, 64], sizes = [2, 32], strides = [1, 1]} : vector<2x96xf32> to vector<2x32xf32>
    %476 = arith.mulf %472, %475 : vector<2x32xf32>
    %477 = arith.addf %474, %476 : vector<2x32xf32>
    %478 = math.tanh %477 : vector<2x32xf32>
    %cst_116 = arith.constant 1.000000e+00 : f32
    %479 = vector.broadcast %cst_116 : f32 to vector<2x32xf32>
    %480 = arith.subf %479, %473 : vector<2x32xf32>
    %481 = arith.mulf %480, %478 : vector<2x32xf32>
    %482 = arith.mulf %473, %403 : vector<2x32xf32>
    %483 = arith.addf %481, %482 : vector<2x32xf32>
    %484 = arith.truncf %483 : vector<2x32xf32> to vector<2x32xbf16>
    %cst_117 = arith.constant dense<0.000000e+00> : vector<2x16xf32>
    %485 = tpu.matmul %484, %12, %cst_117 {dimension_numbers = #tpu.dot_dimension_numbers<[1], [0], [0], [1], [0, 0, 1, 1], [], []>} : vector<2x32xbf16>, vector<32x16xbf16>, vector<2x16xf32> -> vector<2x16xf32>
    %486 = vector.broadcast %13 : vector<1x16xf32> to vector<2x16xf32>
    %487 = arith.addf %485, %486 : vector<2x16xf32>
    %cst_118 = arith.constant dense<0xFF800000> : vector<2xf32>
    %488 = vector.multi_reduction <maximumf>, %487, %cst_118 [1] : vector<2x16xf32> to vector<2xf32>
    %489 = vector.shape_cast %488 : vector<2xf32> to vector<2x1xf32>
    %490 = vector.broadcast %489 : vector<2x1xf32> to vector<2x16xf32>
    %491 = arith.subf %487, %490 : vector<2x16xf32>
    %492 = math.exp %491 : vector<2x16xf32>
    %cst_119 = arith.constant dense<0.000000e+00> : vector<2xf32>
    %493 = vector.multi_reduction <add>, %492, %cst_119 [1] : vector<2x16xf32> to vector<2xf32>
    %494 = vector.shape_cast %493 : vector<2xf32> to vector<2x1xf32>
    %495 = math.log %494 : vector<2x1xf32>
    %496 = vector.broadcast %495 : vector<2x1xf32> to vector<2x16xf32>
    %497 = arith.subf %491, %496 : vector<2x16xf32>
    %cst_120 = arith.constant 0.000000e+00 : f32
    %498 = vector.broadcast %cst_120 : f32 to vector<2x16xf32>
    %499 = arith.cmpf oeq, %491, %498 : vector<2x16xf32>
    %c16_i32_121 = arith.constant 16 : i32
    %500 = vector.broadcast %c16_i32_121 : i32 to vector<2x16xi32>
    %501 = arith.select %499, %14, %500 : vector<2x16xi1>, vector<2x16xi32>
    %cst_122 = arith.constant dense<2147483647> : vector<2xi32>
    %502 = vector.multi_reduction <minsi>, %501, %cst_122 [1] : vector<2x16xi32> to vector<2xi32>
    %503 = vector.shape_cast %502 : vector<2xi32> to vector<2x1xi32>
    %504 = vector.broadcast %503 : vector<2x1xi32> to vector<2x16xi32>
    %505 = arith.cmpi eq, %14, %504 : vector<2x16xi32>
    %cst_123 = arith.constant 1.000000e+00 : f32
    %cst_124 = arith.constant 0.000000e+00 : f32
    %506 = vector.broadcast %cst_123 : f32 to vector<2x16xf32>
    %507 = vector.broadcast %cst_124 : f32 to vector<2x16xf32>
    %508 = arith.select %505, %506, %507 : vector<2x16xi1>, vector<2x16xf32>
    %509 = arith.truncf %508 : vector<2x16xf32> to vector<2x16xbf16>
    %cst_125 = arith.constant dense<0.000000e+00> : vector<2x96xf32>
    %510 = tpu.matmul %509, %3, %cst_125 {dimension_numbers = #tpu.dot_dimension_numbers<[1], [0], [0], [1], [0, 0, 1, 1], [], []>} : vector<2x16xbf16>, vector<16x96xbf16>, vector<2x96xf32> -> vector<2x96xf32>
    %511 = arith.addf %510, %23 : vector<2x96xf32>
    %512 = arith.truncf %455 : vector<2x32xf32> to vector<2x32xbf16>
    %cst_126 = arith.constant dense<0.000000e+00> : vector<2x96xf32>
    %513 = tpu.matmul %512, %5, %cst_126 {dimension_numbers = #tpu.dot_dimension_numbers<[1], [0], [0], [1], [0, 0, 1, 1], [], []>} : vector<2x32xbf16>, vector<32x96xbf16>, vector<2x96xf32> -> vector<2x96xf32>
    %514 = vector.broadcast %7 : vector<1x96xf32> to vector<2x96xf32>
    %515 = arith.addf %513, %514 : vector<2x96xf32>
    %516 = vector.extract_strided_slice %511 {offsets = [0, 0], sizes = [2, 64], strides = [1, 1]} : vector<2x96xf32> to vector<2x64xf32>
    %517 = vector.extract_strided_slice %515 {offsets = [0, 0], sizes = [2, 64], strides = [1, 1]} : vector<2x96xf32> to vector<2x64xf32>
    %518 = arith.addf %516, %517 : vector<2x64xf32>
    %519 = arith.negf %518 : vector<2x64xf32>
    %520 = math.exp %519 : vector<2x64xf32>
    %cst_127 = arith.constant 1.000000e+00 : f32
    %521 = vector.broadcast %cst_127 : f32 to vector<2x64xf32>
    %522 = arith.addf %521, %520 : vector<2x64xf32>
    %523 = arith.divf %521, %522 : vector<2x64xf32>
    %524 = vector.extract_strided_slice %523 {offsets = [0, 0], sizes = [2, 32], strides = [1, 1]} : vector<2x64xf32> to vector<2x32xf32>
    %525 = vector.extract_strided_slice %523 {offsets = [0, 32], sizes = [2, 32], strides = [1, 1]} : vector<2x64xf32> to vector<2x32xf32>
    %526 = vector.extract_strided_slice %511 {offsets = [0, 64], sizes = [2, 32], strides = [1, 1]} : vector<2x96xf32> to vector<2x32xf32>
    %527 = vector.extract_strided_slice %515 {offsets = [0, 64], sizes = [2, 32], strides = [1, 1]} : vector<2x96xf32> to vector<2x32xf32>
    %528 = arith.mulf %524, %527 : vector<2x32xf32>
    %529 = arith.addf %526, %528 : vector<2x32xf32>
    %530 = math.tanh %529 : vector<2x32xf32>
    %cst_128 = arith.constant 1.000000e+00 : f32
    %531 = vector.broadcast %cst_128 : f32 to vector<2x32xf32>
    %532 = arith.subf %531, %525 : vector<2x32xf32>
    %533 = arith.mulf %532, %530 : vector<2x32xf32>
    %534 = arith.mulf %525, %455 : vector<2x32xf32>
    %535 = arith.addf %533, %534 : vector<2x32xf32>
    %536 = arith.truncf %535 : vector<2x32xf32> to vector<2x32xbf16>
    %cst_129 = arith.constant dense<0.000000e+00> : vector<2x96xf32>
    %537 = tpu.matmul %536, %8, %cst_129 {dimension_numbers = #tpu.dot_dimension_numbers<[1], [0], [0], [1], [0, 0, 1, 1], [], []>} : vector<2x32xbf16>, vector<32x96xbf16>, vector<2x96xf32> -> vector<2x96xf32>
    %538 = vector.broadcast %10 : vector<1x96xf32> to vector<2x96xf32>
    %539 = arith.addf %537, %538 : vector<2x96xf32>
    %540 = arith.truncf %483 : vector<2x32xf32> to vector<2x32xbf16>
    %cst_130 = arith.constant dense<0.000000e+00> : vector<2x96xf32>
    %541 = tpu.matmul %540, %9, %cst_130 {dimension_numbers = #tpu.dot_dimension_numbers<[1], [0], [0], [1], [0, 0, 1, 1], [], []>} : vector<2x32xbf16>, vector<32x96xbf16>, vector<2x96xf32> -> vector<2x96xf32>
    %542 = vector.broadcast %11 : vector<1x96xf32> to vector<2x96xf32>
    %543 = arith.addf %541, %542 : vector<2x96xf32>
    %544 = vector.extract_strided_slice %539 {offsets = [0, 0], sizes = [2, 64], strides = [1, 1]} : vector<2x96xf32> to vector<2x64xf32>
    %545 = vector.extract_strided_slice %543 {offsets = [0, 0], sizes = [2, 64], strides = [1, 1]} : vector<2x96xf32> to vector<2x64xf32>
    %546 = arith.addf %544, %545 : vector<2x64xf32>
    %547 = arith.negf %546 : vector<2x64xf32>
    %548 = math.exp %547 : vector<2x64xf32>
    %cst_131 = arith.constant 1.000000e+00 : f32
    %549 = vector.broadcast %cst_131 : f32 to vector<2x64xf32>
    %550 = arith.addf %549, %548 : vector<2x64xf32>
    %551 = arith.divf %549, %550 : vector<2x64xf32>
    %552 = vector.extract_strided_slice %551 {offsets = [0, 0], sizes = [2, 32], strides = [1, 1]} : vector<2x64xf32> to vector<2x32xf32>
    %553 = vector.extract_strided_slice %551 {offsets = [0, 32], sizes = [2, 32], strides = [1, 1]} : vector<2x64xf32> to vector<2x32xf32>
    %554 = vector.extract_strided_slice %539 {offsets = [0, 64], sizes = [2, 32], strides = [1, 1]} : vector<2x96xf32> to vector<2x32xf32>
    %555 = vector.extract_strided_slice %543 {offsets = [0, 64], sizes = [2, 32], strides = [1, 1]} : vector<2x96xf32> to vector<2x32xf32>
    %556 = arith.mulf %552, %555 : vector<2x32xf32>
    %557 = arith.addf %554, %556 : vector<2x32xf32>
    %558 = math.tanh %557 : vector<2x32xf32>
    %cst_132 = arith.constant 1.000000e+00 : f32
    %559 = vector.broadcast %cst_132 : f32 to vector<2x32xf32>
    %560 = arith.subf %559, %553 : vector<2x32xf32>
    %561 = arith.mulf %560, %558 : vector<2x32xf32>
    %562 = arith.mulf %553, %483 : vector<2x32xf32>
    %563 = arith.addf %561, %562 : vector<2x32xf32>
    %564 = arith.truncf %563 : vector<2x32xf32> to vector<2x32xbf16>
    %cst_133 = arith.constant dense<0.000000e+00> : vector<2x16xf32>
    %565 = tpu.matmul %564, %12, %cst_133 {dimension_numbers = #tpu.dot_dimension_numbers<[1], [0], [0], [1], [0, 0, 1, 1], [], []>} : vector<2x32xbf16>, vector<32x16xbf16>, vector<2x16xf32> -> vector<2x16xf32>
    %566 = vector.broadcast %13 : vector<1x16xf32> to vector<2x16xf32>
    %567 = arith.addf %565, %566 : vector<2x16xf32>
    %cst_134 = arith.constant dense<0xFF800000> : vector<2xf32>
    %568 = vector.multi_reduction <maximumf>, %567, %cst_134 [1] : vector<2x16xf32> to vector<2xf32>
    %569 = vector.shape_cast %568 : vector<2xf32> to vector<2x1xf32>
    %570 = vector.broadcast %569 : vector<2x1xf32> to vector<2x16xf32>
    %571 = arith.subf %567, %570 : vector<2x16xf32>
    %572 = math.exp %571 : vector<2x16xf32>
    %cst_135 = arith.constant dense<0.000000e+00> : vector<2xf32>
    %573 = vector.multi_reduction <add>, %572, %cst_135 [1] : vector<2x16xf32> to vector<2xf32>
    %574 = vector.shape_cast %573 : vector<2xf32> to vector<2x1xf32>
    %575 = math.log %574 : vector<2x1xf32>
    %576 = vector.broadcast %575 : vector<2x1xf32> to vector<2x16xf32>
    %577 = arith.subf %571, %576 : vector<2x16xf32>
    %cst_136 = arith.constant 0.000000e+00 : f32
    %578 = vector.broadcast %cst_136 : f32 to vector<2x16xf32>
    %579 = arith.cmpf oeq, %571, %578 : vector<2x16xf32>
    %c16_i32_137 = arith.constant 16 : i32
    %580 = vector.broadcast %c16_i32_137 : i32 to vector<2x16xi32>
    %581 = arith.select %579, %14, %580 : vector<2x16xi1>, vector<2x16xi32>
    %cst_138 = arith.constant dense<2147483647> : vector<2xi32>
    %582 = vector.multi_reduction <minsi>, %581, %cst_138 [1] : vector<2x16xi32> to vector<2xi32>
    %583 = vector.shape_cast %582 : vector<2xi32> to vector<2x1xi32>
    %584 = vector.broadcast %583 : vector<2x1xi32> to vector<2x16xi32>
    %585 = arith.cmpi eq, %14, %584 : vector<2x16xi32>
    %cst_139 = arith.constant 1.000000e+00 : f32
    %cst_140 = arith.constant 0.000000e+00 : f32
    %586 = vector.broadcast %cst_139 : f32 to vector<2x16xf32>
    %587 = vector.broadcast %cst_140 : f32 to vector<2x16xf32>
    %588 = arith.select %585, %586, %587 : vector<2x16xi1>, vector<2x16xf32>
    %589 = arith.truncf %588 : vector<2x16xf32> to vector<2x16xbf16>
    %cst_141 = arith.constant dense<0.000000e+00> : vector<2x96xf32>
    %590 = tpu.matmul %589, %3, %cst_141 {dimension_numbers = #tpu.dot_dimension_numbers<[1], [0], [0], [1], [0, 0, 1, 1], [], []>} : vector<2x16xbf16>, vector<16x96xbf16>, vector<2x96xf32> -> vector<2x96xf32>
    %591 = arith.addf %590, %23 : vector<2x96xf32>
    %592 = arith.truncf %535 : vector<2x32xf32> to vector<2x32xbf16>
    %cst_142 = arith.constant dense<0.000000e+00> : vector<2x96xf32>
    %593 = tpu.matmul %592, %5, %cst_142 {dimension_numbers = #tpu.dot_dimension_numbers<[1], [0], [0], [1], [0, 0, 1, 1], [], []>} : vector<2x32xbf16>, vector<32x96xbf16>, vector<2x96xf32> -> vector<2x96xf32>
    %594 = vector.broadcast %7 : vector<1x96xf32> to vector<2x96xf32>
    %595 = arith.addf %593, %594 : vector<2x96xf32>
    %596 = vector.extract_strided_slice %591 {offsets = [0, 0], sizes = [2, 64], strides = [1, 1]} : vector<2x96xf32> to vector<2x64xf32>
    %597 = vector.extract_strided_slice %595 {offsets = [0, 0], sizes = [2, 64], strides = [1, 1]} : vector<2x96xf32> to vector<2x64xf32>
    %598 = arith.addf %596, %597 : vector<2x64xf32>
    %599 = arith.negf %598 : vector<2x64xf32>
    %600 = math.exp %599 : vector<2x64xf32>
    %cst_143 = arith.constant 1.000000e+00 : f32
    %601 = vector.broadcast %cst_143 : f32 to vector<2x64xf32>
    %602 = arith.addf %601, %600 : vector<2x64xf32>
    %603 = arith.divf %601, %602 : vector<2x64xf32>
    %604 = vector.extract_strided_slice %603 {offsets = [0, 0], sizes = [2, 32], strides = [1, 1]} : vector<2x64xf32> to vector<2x32xf32>
    %605 = vector.extract_strided_slice %603 {offsets = [0, 32], sizes = [2, 32], strides = [1, 1]} : vector<2x64xf32> to vector<2x32xf32>
    %606 = vector.extract_strided_slice %591 {offsets = [0, 64], sizes = [2, 32], strides = [1, 1]} : vector<2x96xf32> to vector<2x32xf32>
    %607 = vector.extract_strided_slice %595 {offsets = [0, 64], sizes = [2, 32], strides = [1, 1]} : vector<2x96xf32> to vector<2x32xf32>
    %608 = arith.mulf %604, %607 : vector<2x32xf32>
    %609 = arith.addf %606, %608 : vector<2x32xf32>
    %610 = math.tanh %609 : vector<2x32xf32>
    %cst_144 = arith.constant 1.000000e+00 : f32
    %611 = vector.broadcast %cst_144 : f32 to vector<2x32xf32>
    %612 = arith.subf %611, %605 : vector<2x32xf32>
    %613 = arith.mulf %612, %610 : vector<2x32xf32>
    %614 = arith.mulf %605, %535 : vector<2x32xf32>
    %615 = arith.addf %613, %614 : vector<2x32xf32>
    %616 = arith.truncf %615 : vector<2x32xf32> to vector<2x32xbf16>
    %cst_145 = arith.constant dense<0.000000e+00> : vector<2x96xf32>
    %617 = tpu.matmul %616, %8, %cst_145 {dimension_numbers = #tpu.dot_dimension_numbers<[1], [0], [0], [1], [0, 0, 1, 1], [], []>} : vector<2x32xbf16>, vector<32x96xbf16>, vector<2x96xf32> -> vector<2x96xf32>
    %618 = vector.broadcast %10 : vector<1x96xf32> to vector<2x96xf32>
    %619 = arith.addf %617, %618 : vector<2x96xf32>
    %620 = arith.truncf %563 : vector<2x32xf32> to vector<2x32xbf16>
    %cst_146 = arith.constant dense<0.000000e+00> : vector<2x96xf32>
    %621 = tpu.matmul %620, %9, %cst_146 {dimension_numbers = #tpu.dot_dimension_numbers<[1], [0], [0], [1], [0, 0, 1, 1], [], []>} : vector<2x32xbf16>, vector<32x96xbf16>, vector<2x96xf32> -> vector<2x96xf32>
    %622 = vector.broadcast %11 : vector<1x96xf32> to vector<2x96xf32>
    %623 = arith.addf %621, %622 : vector<2x96xf32>
    %624 = vector.extract_strided_slice %619 {offsets = [0, 0], sizes = [2, 64], strides = [1, 1]} : vector<2x96xf32> to vector<2x64xf32>
    %625 = vector.extract_strided_slice %623 {offsets = [0, 0], sizes = [2, 64], strides = [1, 1]} : vector<2x96xf32> to vector<2x64xf32>
    %626 = arith.addf %624, %625 : vector<2x64xf32>
    %627 = arith.negf %626 : vector<2x64xf32>
    %628 = math.exp %627 : vector<2x64xf32>
    %cst_147 = arith.constant 1.000000e+00 : f32
    %629 = vector.broadcast %cst_147 : f32 to vector<2x64xf32>
    %630 = arith.addf %629, %628 : vector<2x64xf32>
    %631 = arith.divf %629, %630 : vector<2x64xf32>
    %632 = vector.extract_strided_slice %631 {offsets = [0, 0], sizes = [2, 32], strides = [1, 1]} : vector<2x64xf32> to vector<2x32xf32>
    %633 = vector.extract_strided_slice %631 {offsets = [0, 32], sizes = [2, 32], strides = [1, 1]} : vector<2x64xf32> to vector<2x32xf32>
    %634 = vector.extract_strided_slice %619 {offsets = [0, 64], sizes = [2, 32], strides = [1, 1]} : vector<2x96xf32> to vector<2x32xf32>
    %635 = vector.extract_strided_slice %623 {offsets = [0, 64], sizes = [2, 32], strides = [1, 1]} : vector<2x96xf32> to vector<2x32xf32>
    %636 = arith.mulf %632, %635 : vector<2x32xf32>
    %637 = arith.addf %634, %636 : vector<2x32xf32>
    %638 = math.tanh %637 : vector<2x32xf32>
    %cst_148 = arith.constant 1.000000e+00 : f32
    %639 = vector.broadcast %cst_148 : f32 to vector<2x32xf32>
    %640 = arith.subf %639, %633 : vector<2x32xf32>
    %641 = arith.mulf %640, %638 : vector<2x32xf32>
    %642 = arith.mulf %633, %563 : vector<2x32xf32>
    %643 = arith.addf %641, %642 : vector<2x32xf32>
    %644 = arith.truncf %643 : vector<2x32xf32> to vector<2x32xbf16>
    %cst_149 = arith.constant dense<0.000000e+00> : vector<2x16xf32>
    %645 = tpu.matmul %644, %12, %cst_149 {dimension_numbers = #tpu.dot_dimension_numbers<[1], [0], [0], [1], [0, 0, 1, 1], [], []>} : vector<2x32xbf16>, vector<32x16xbf16>, vector<2x16xf32> -> vector<2x16xf32>
    %646 = vector.broadcast %13 : vector<1x16xf32> to vector<2x16xf32>
    %647 = arith.addf %645, %646 : vector<2x16xf32>
    %cst_150 = arith.constant dense<0xFF800000> : vector<2xf32>
    %648 = vector.multi_reduction <maximumf>, %647, %cst_150 [1] : vector<2x16xf32> to vector<2xf32>
    %649 = vector.shape_cast %648 : vector<2xf32> to vector<2x1xf32>
    %650 = vector.broadcast %649 : vector<2x1xf32> to vector<2x16xf32>
    %651 = arith.subf %647, %650 : vector<2x16xf32>
    %652 = math.exp %651 : vector<2x16xf32>
    %cst_151 = arith.constant dense<0.000000e+00> : vector<2xf32>
    %653 = vector.multi_reduction <add>, %652, %cst_151 [1] : vector<2x16xf32> to vector<2xf32>
    %654 = vector.shape_cast %653 : vector<2xf32> to vector<2x1xf32>
    %655 = math.log %654 : vector<2x1xf32>
    %656 = vector.broadcast %655 : vector<2x1xf32> to vector<2x16xf32>
    %657 = arith.subf %651, %656 : vector<2x16xf32>
    %658 = tpu.concatenate %97, %177, %257, %337, %417, %497, %577, %657 in 1 : vector<2x16xf32>, vector<2x16xf32>, vector<2x16xf32>, vector<2x16xf32>, vector<2x16xf32>, vector<2x16xf32>, vector<2x16xf32>, vector<2x16xf32> -> vector<2x128xf32>
    %c0_152 = arith.constant 0 : index
    %c0_153 = arith.constant 0 : index
    %659 = vector.load %arg15[%c0_152, %c0_153] : memref<2x128xf32, #tpu.memory_space<vmem>>, vector<2x128xf32>
    tpu.vector_store %arg15[%c0_152, %c0_153], %658 {strides = array<i32>} : memref<2x128xf32, #tpu.memory_space<vmem>>, vector<2x128xf32>,
    return
  }
  func.func @transform_0(%arg0: i32) -> (i32, i32) {
    %c0_i32 = arith.constant 0 : i32
    %c0_i32_0 = arith.constant 0 : i32
    return %arg0, %c0_i32 : i32, i32
  }
  func.func @transform_1(%arg0: i32) -> (i32, i32) {
    %c0_i32 = arith.constant 0 : i32
    %c0_i32_0 = arith.constant 0 : i32
    %c0_i32_1 = arith.constant 0 : i32
    return %c0_i32, %c0_i32_0 : i32, i32
  }
  func.func @transform_2(%arg0: i32) -> (i32, i32) {
    %c0_i32 = arith.constant 0 : i32
    %c0_i32_0 = arith.constant 0 : i32
    %c0_i32_1 = arith.constant 0 : i32
    return %c0_i32, %c0_i32_0 : i32, i32
  }
  func.func @transform_3(%arg0: i32) -> (i32, i32) {
    %c0_i32 = arith.constant 0 : i32
    %c0_i32_0 = arith.constant 0 : i32
    %c0_i32_1 = arith.constant 0 : i32
    return %c0_i32, %c0_i32_0 : i32, i32
  }
  func.func @transform_4(%arg0: i32) -> (i32, i32) {
    %c0_i32 = arith.constant 0 : i32
    %c0_i32_0 = arith.constant 0 : i32
    %c0_i32_1 = arith.constant 0 : i32
    return %c0_i32, %c0_i32_0 : i32, i32
  }
  func.func @transform_5(%arg0: i32) -> (i32, i32) {
    %c0_i32 = arith.constant 0 : i32
    %c0_i32_0 = arith.constant 0 : i32
    %c0_i32_1 = arith.constant 0 : i32
    return %c0_i32, %c0_i32_0 : i32, i32
  }
  func.func @transform_6(%arg0: i32) -> (i32, i32) {
    %c0_i32 = arith.constant 0 : i32
    %c0_i32_0 = arith.constant 0 : i32
    %c0_i32_1 = arith.constant 0 : i32
    return %c0_i32, %c0_i32_0 : i32, i32
  }
  func.func @transform_7(%arg0: i32) -> (i32, i32) {
    %c0_i32 = arith.constant 0 : i32
    %c0_i32_0 = arith.constant 0 : i32
    %c0_i32_1 = arith.constant 0 : i32
    return %c0_i32, %c0_i32_0 : i32, i32
  }
  func.func @transform_8(%arg0: i32) -> (i32, i32) {
    %c0_i32 = arith.constant 0 : i32
    %c0_i32_0 = arith.constant 0 : i32
    %c0_i32_1 = arith.constant 0 : i32
    return %c0_i32, %c0_i32_0 : i32, i32
  }
  func.func @transform_9(%arg0: i32) -> (i32, i32) {
    %c0_i32 = arith.constant 0 : i32
    %c0_i32_0 = arith.constant 0 : i32
    %c0_i32_1 = arith.constant 0 : i32
    return %c0_i32, %c0_i32_0 : i32, i32
  }
  func.func @transform_10(%arg0: i32) -> (i32, i32) {
    %c0_i32 = arith.constant 0 : i32
    %c0_i32_0 = arith.constant 0 : i32
    %c0_i32_1 = arith.constant 0 : i32
    return %c0_i32, %c0_i32_0 : i32, i32
  }
  func.func @transform_11(%arg0: i32) -> (i32, i32) {
    %c0_i32 = arith.constant 0 : i32
    %c0_i32_0 = arith.constant 0 : i32
    %c0_i32_1 = arith.constant 0 : i32
    return %c0_i32, %c0_i32_0 : i32, i32
  }
  func.func @transform_12(%arg0: i32) -> (i32, i32) {
    %c0_i32 = arith.constant 0 : i32
    %c0_i32_0 = arith.constant 0 : i32
    %c0_i32_1 = arith.constant 0 : i32
    return %c0_i32, %c0_i32_0 : i32, i32
  }
  func.func @transform_13(%arg0: i32) -> (i32, i32) {
    %c0_i32 = arith.constant 0 : i32
    %c0_i32_0 = arith.constant 0 : i32
    %c0_i32_1 = arith.constant 0 : i32
    return %c0_i32, %c0_i32_0 : i32, i32
  }
  func.func @transform_14(%arg0: i32) -> (i32, i32) {
    %c0_i32 = arith.constant 0 : i32
    %c0_i32_0 = arith.constant 0 : i32
    return %arg0, %c0_i32 : i32, i32
  }
}

</mosaic_0001>

<llo_original>
// kernel: tpu_custom_call.1
$region0: #{tpu_custom_call.1}
  #allocation0 [shape = 'u32[]', space=smem, size = 0x4, offset = 0x4, fixed_abs, tag = 'smem constant byte address 0x4 - core index']
  #allocation1 [shape = 'u32[144,128]{1,0:T(1,128)}', space=vmem, size = 0x12000, scoped, tag = 'internal scratch']
  %s0 = inlined_call_operand.vmem [shape: f32[2,8], index: 0, kind: input, shape index: {}]
  %s1 = inlined_call_operand.hbm [shape: bf16[8,32], index: 1, kind: input, shape index: {}]
  %s2 = inlined_call_operand.hbm [shape: f32[1,32], index: 2, kind: input, shape index: {}]
  %s3 = inlined_call_operand.hbm [shape: bf16[16,96], index: 3, kind: input, shape index: {}]
  %s4 = inlined_call_operand.hbm [shape: bf16[8,96], index: 4, kind: input, shape index: {}]
  %s5 = inlined_call_operand.vmem [shape: bf16[32,96], index: 5, kind: input, shape index: {}]
  %s6 = inlined_call_operand.hbm [shape: f32[1,96], index: 6, kind: input, shape index: {}]
  %s7 = inlined_call_operand.hbm [shape: f32[1,96], index: 7, kind: input, shape index: {}]
  %s8 = inlined_call_operand.vmem [shape: bf16[32,96], index: 8, kind: input, shape index: {}]
  %s9 = inlined_call_operand.vmem [shape: bf16[32,96], index: 9, kind: input, shape index: {}]
  %s10 = inlined_call_operand.vmem [shape: f32[1,96], index: 10, kind: input, shape index: {}]
  %s11 = inlined_call_operand.vmem [shape: f32[1,96], index: 11, kind: input, shape index: {}]
  %s12 = inlined_call_operand.vmem [shape: bf16[32,16], index: 12, kind: input, shape index: {}]
  %s13 = inlined_call_operand.vmem [shape: f32[1,16], index: 13, kind: input, shape index: {}]
  %s14 = inlined_call_operand.hbm [shape: f32[2,128], index: 14, kind: output, shape index: {}]
  %s15 = sld [smem:[#allocation0]]
  $region90: #{tpu_custom_call.1} parent=0
    _
  %s17 = ssub.s32 1, %s15
  %s18 = scalar_select 0, %s17, %s15
  $region1: #{tpu_custom_call.1} parent=0
    #allocation2 [shape = 'u8[2048]{0}', space=vmem, size = 0x800, scoped, tag = 'input window, operand 1, single buffered']
    #allocation3 [shape = 's32[1]{0}', space=sflag, size = 0x4, scoped, tag = 'scoped memory for tpu_custom_call.1']
    #allocation4 [shape = 's32[1]{0}', space=sflag, size = 0x4, scoped, tag = 'scoped memory for tpu_custom_call.1']
    #allocation5 [shape = 'u8[512]{0}', space=vmem, size = 0x400, scoped, tag = 'input window, operand 2, single buffered']
    #allocation6 [shape = 's32[1]{0}', space=sflag, size = 0x4, scoped, tag = 'scoped memory for tpu_custom_call.1']
    #allocation7 [shape = 'u8[4096]{0}', space=vmem, size = 0x1000, scoped, tag = 'input window, operand 3, single buffered']
    #allocation8 [shape = 'u8[2048]{0}', space=vmem, size = 0x800, scoped, tag = 'input window, operand 4, single buffered']
    #allocation9 [shape = 's32[1]{0}', space=sflag, size = 0x4, scoped, tag = 'scoped memory for tpu_custom_call.1']
    #allocation10 [shape = 'u8[512]{0}', space=vmem, size = 0x400, scoped, tag = 'input window, operand 6, single buffered']
    #allocation11 [shape = 'u8[512]{0}', space=vmem, size = 0x400, scoped, tag = 'input window, operand 7, single buffered']
    #allocation12 [shape = 's32[1]{0}', space=sflag, size = 0x4, scoped, tag = 'scoped memory for tpu_custom_call.1']
    #allocation13 [shape = 'u8[1024]{0}', space=vmem, size = 0x400, scoped, tag = 'output window, operand 0, single buffered']
    %19 = vsyncpa [#allocation3], 0
    %20 = vsyncpa [#allocation6], 0
    %21 = vsyncpa [#allocation9], 0
    %22 = vsyncpa [#allocation12], 0
    %23 = vsyncpa [#allocation4], 0
    // Predicated region
    $region2: #{tpu_custom_call.1} parent=1 // pred_check
      _
    $region3: #{tpu_custom_call.1} parent=1 // pred_check_branch
      %25 = sbr.rel (0) target = $region5
    $region4: #{tpu_custom_call.1} parent=1 // pred_region
      _
    $region5: #{tpu_custom_call.1} parent=1 // pred_fallthru
      _
    // Predicated region
    $region6: #{tpu_custom_call.1} parent=1 // pred_check
      _
    $region7: #{tpu_custom_call.1} parent=1 // pred_check_branch
      %27 = sbr.rel (0) target = $region9
    $region8: #{tpu_custom_call.1} parent=1 // pred_region
      %s29 = ssub.s32 64, 64
      %30 = vsyncadd [#allocation3], %s29
      %s32 = sshll.u32 [#allocation2], 4
      %s33 = int_to_ptr.vmem [resolvable:$true] %s32
      %35 = dma.hbm_to_vmem [thread:$0]  %s1, 64, %s33, [#allocation3]
    $region9: #{tpu_custom_call.1} parent=1 // pred_fallthru
      _
    // Predicated region
    $region10: #{tpu_custom_call.1} parent=1 // pred_check
      _
    $region11: #{tpu_custom_call.1} parent=1 // pred_check_branch
      %37 = sbr.rel (0) target = $region13
    $region12: #{tpu_custom_call.1} parent=1 // pred_region
      %s39 = ssub.s32 16, 16
      %40 = vsyncadd [#allocation6], %s39
      %s42 = sshll.u32 [#allocation5], 4
      %s43 = int_to_ptr.vmem [resolvable:$true] %s42
      %45 = dma.hbm_to_vmem [thread:$0]  %s2, 16, %s43, [#allocation6]
    $region13: #{tpu_custom_call.1} parent=1 // pred_fallthru
      _
    // Predicated region
    $region14: #{tpu_custom_call.1} parent=1 // pred_check
      _
    $region15: #{tpu_custom_call.1} parent=1 // pred_check_branch
      %47 = sbr.rel (0) target = $region17
    $region16: #{tpu_custom_call.1} parent=1 // pred_region
      %s49 = ssub.s32 128, 128
      %50 = vsyncadd [#allocation6], %s49
      %s51 = sshll.u32 [#allocation7], 4
      %s52 = int_to_ptr.vmem [resolvable:$true] %s51
      %57 = dma.hbm_to_vmem [thread:$0]  %s3, 128, %s52, [#allocation6], 64, 64, 4
    $region17: #{tpu_custom_call.1} parent=1 // pred_fallthru
      _
    // Predicated region
    $region18: #{tpu_custom_call.1} parent=1 // pred_check
      _
    $region19: #{tpu_custom_call.1} parent=1 // pred_check_branch
      %59 = sbr.rel (0) target = $region21
    $region20: #{tpu_custom_call.1} parent=1 // pred_region
      %s61 = ssub.s32 64, 64
      %62 = vsyncadd [#allocation9], %s61
      %s64 = sshll.u32 [#allocation8], 4
      %s65 = int_to_ptr.vmem [resolvable:$true] %s64
      %67 = dma.hbm_to_vmem [thread:$0]  %s4, 64, %s65, [#allocation9]
    $region21: #{tpu_custom_call.1} parent=1 // pred_fallthru
      _
    // Predicated region
    $region22: #{tpu_custom_call.1} parent=1 // pred_check
      _
    $region23: #{tpu_custom_call.1} parent=1 // pred_check_branch
      %69 = sbr.rel (0) target = $region25
    $region24: #{tpu_custom_call.1} parent=1 // pred_region
      _
    $region25: #{tpu_custom_call.1} parent=1 // pred_fallthru
      _
    // Predicated region
    $region26: #{tpu_custom_call.1} parent=1 // pred_check
      _
    $region27: #{tpu_custom_call.1} parent=1 // pred_check_branch
      %71 = sbr.rel (0) target = $region29
    $region28: #{tpu_custom_call.1} parent=1 // pred_region
      %s73 = ssub.s32 16, 16
      %74 = vsyncadd [#allocation9], %s73
      %s76 = sshll.u32 [#allocation10], 4
      %s77 = int_to_ptr.vmem [resolvable:$true] %s76
      %79 = dma.hbm_to_vmem [thread:$0]  %s6, 16, %s77, [#allocation9]
    $region29: #{tpu_custom_call.1} parent=1 // pred_fallthru
      _
    // Predicated region
    $region30: #{tpu_custom_call.1} parent=1 // pred_check
      _
    $region31: #{tpu_custom_call.1} parent=1 // pred_check_branch
      %81 = sbr.rel (0) target = $region33
    $region32: #{tpu_custom_call.1} parent=1 // pred_region
      %s83 = ssub.s32 16, 16
      %84 = vsyncadd [#allocation12], %s83
      %s86 = sshll.u32 [#allocation11], 4
      %s87 = int_to_ptr.vmem [resolvable:$true] %s86
      %89 = dma.hbm_to_vmem [thread:$0]  %s7, 16, %s87, [#allocation12]
    $region33: #{tpu_custom_call.1} parent=1 // pred_fallthru
      _
    // Predicated region
    $region34: #{tpu_custom_call.1} parent=1 // pred_check
      _
    $region35: #{tpu_custom_call.1} parent=1 // pred_check_branch
      %91 = sbr.rel (0) target = $region37
    $region36: #{tpu_custom_call.1} parent=1 // pred_region
      _
    $region37: #{tpu_custom_call.1} parent=1 // pred_fallthru
      _
    // Predicated region
    $region38: #{tpu_custom_call.1} parent=1 // pred_check
      _
    $region39: #{tpu_custom_call.1} parent=1 // pred_check_branch
      %93 = sbr.rel (0) target = $region41
    $region40: #{tpu_custom_call.1} parent=1 // pred_region
      _
    $region41: #{tpu_custom_call.1} parent=1 // pred_fallthru
      _
    // Predicated region
    $region42: #{tpu_custom_call.1} parent=1 // pred_check
      _
    $region43: #{tpu_custom_call.1} parent=1 // pred_check_branch
      %95 = sbr.rel (0) target = $region45
    $region44: #{tpu_custom_call.1} parent=1 // pred_region
      _
    $region45: #{tpu_custom_call.1} parent=1 // pred_fallthru
      _
    // Predicated region
    $region46: #{tpu_custom_call.1} parent=1 // pred_check
      _
    $region47: #{tpu_custom_call.1} parent=1 // pred_check_branch
      %97 = sbr.rel (0) target = $region49
    $region48: #{tpu_custom_call.1} parent=1 // pred_region
      _
    $region49: #{tpu_custom_call.1} parent=1 // pred_fallthru
      _
    // Predicated region
    $region50: #{tpu_custom_call.1} parent=1 // pred_check
      _
    $region51: #{tpu_custom_call.1} parent=1 // pred_check_branch
      %99 = sbr.rel (0) target = $region53
    $region52: #{tpu_custom_call.1} parent=1 // pred_region
      _
    $region53: #{tpu_custom_call.1} parent=1 // pred_fallthru
      _
    // Predicated region
    $region54: #{tpu_custom_call.1} parent=1 // pred_check
      _
    $region55: #{tpu_custom_call.1} parent=1 // pred_check_branch
      %101 = sbr.rel (0) target = $region57
    $region56: #{tpu_custom_call.1} parent=1 // pred_region
      _
    $region57: #{tpu_custom_call.1} parent=1 // pred_fallthru
      _
    // Predicated region
    $region58: #{tpu_custom_call.1} parent=1 // pred_check
      _
    $region59: #{tpu_custom_call.1} parent=1 // pred_check_branch
      %103 = sbr.rel (0) target = $region61
    $region60: #{tpu_custom_call.1} parent=1 // pred_region
      %104 = dma.done [#allocation3], 64
    $region61: #{tpu_custom_call.1} parent=1 // pred_fallthru
      _
    // Predicated region
    $region62: #{tpu_custom_call.1} parent=1 // pred_check
      _
    $region63: #{tpu_custom_call.1} parent=1 // pred_check_branch
      %106 = sbr.rel (0) target = $region65
    $region64: #{tpu_custom_call.1} parent=1 // pred_region
      %107 = dma.done [#allocation6], 16
    $region65: #{tpu_custom_call.1} parent=1 // pred_fallthru
      _
    // Predicated region
    $region66: #{tpu_custom_call.1} parent=1 // pred_check
      _
    $region67: #{tpu_custom_call.1} parent=1 // pred_check_branch
      %109 = sbr.rel (0) target = $region69
    $region68: #{tpu_custom_call.1} parent=1 // pred_region
      %110 = dma.done [#allocation6], 128
    $region69: #{tpu_custom_call.1} parent=1 // pred_fallthru
      _
    // Predicated region
    $region70: #{tpu_custom_call.1} parent=1 // pred_check
      _
    $region71: #{tpu_custom_call.1} parent=1 // pred_check_branch
      %112 = sbr.rel (0) target = $region73
    $region72: #{tpu_custom_call.1} parent=1 // pred_region
      %113 = dma.done [#allocation9], 64
    $region73: #{tpu_custom_call.1} parent=1 // pred_fallthru
      _
    // Predicated region
    $region74: #{tpu_custom_call.1} parent=1 // pred_check
      _
    $region75: #{tpu_custom_call.1} parent=1 // pred_check_branch
      %115 = sbr.rel (0) target = $region77
    $region76: #{tpu_custom_call.1} parent=1 // pred_region
      %116 = dma.done [#allocation9], 16
    $region77: #{tpu_custom_call.1} parent=1 // pred_fallthru
      _
    // Predicated region
    $region78: #{tpu_custom_call.1} parent=1 // pred_check
      _
    $region79: #{tpu_custom_call.1} parent=1 // pred_check_branch
      %118 = sbr.rel (0) target = $region81
    $region80: #{tpu_custom_call.1} parent=1 // pred_region
      %119 = dma.done [#allocation12], 16
    $region81: #{tpu_custom_call.1} parent=1 // pred_fallthru
      _
    %v121 = vld [vmem:[%s0] sm:$0x3]
    %v122 = vld [vmem:[#allocation2] sm:$0xf]
    %v123 = vld [vmem:[#allocation5] sm:$0x1]
    %v124 = vld [vmem:[#allocation7] sm:$0xf]
    %v125 = vld [vmem:[#allocation7 + $0x4] sm:$0xf]
    %v126 = vld [vmem:[#allocation8] sm:$0xf]
    %v127 = vld [vmem:[%s5] sm:$0xf]
    %v128 = vld [vmem:[%s5 + $0x4] sm:$0xf]
    %v129 = vld [vmem:[%s5 + $0x8] sm:$0xf]
    %v130 = vld [vmem:[%s5 + $0xc] sm:$0xf]
    %v131 = vld [vmem:[#allocation10] sm:$0x1]
    %v132 = vld [vmem:[#allocation11] sm:$0x1]
    %v133 = vld [vmem:[%s8] sm:$0xf]
    %v134 = vld [vmem:[%s8 + $0x4] sm:$0xf]
    %v135 = vld [vmem:[%s8 + $0x8] sm:$0xf]
    %v136 = vld [vmem:[%s8 + $0xc] sm:$0xf]
    %v137 = vld [vmem:[%s9] sm:$0xf]
    %v138 = vld [vmem:[%s9 + $0x4] sm:$0xf]
    %v139 = vld [vmem:[%s9 + $0x8] sm:$0xf]
    %v140 = vld [vmem:[%s9 + $0xc] sm:$0xf]
    %v141 = vld [vmem:[%s10] sm:$0x1]
    %v142 = vld [vmem:[%s11] sm:$0x1]
    %v143 = vld [vmem:[%s12] sm:$0xf]
    %v144 = vld [vmem:[%s12 + $0x4] sm:$0xf]
    %v145 = vld [vmem:[%s12 + $0x8] sm:$0xf]
    %v146 = vld [vmem:[%s12 + $0xc] sm:$0xf]
    %v147 = vld [vmem:[%s13] sm:$0x1]
    %v148 = vlaneseq
    %v149 = vand.u32 %v148, 127
    %vm150 = vcmp.eq.s32.totalorder %v149, 15
    %v151 = vsel %vm150, 1.0, 0.0
    %v152 = vpack.c.bf16 %v121, %v121
    %v154 = vlaneseq
    %v155 = vshrl.u32 %v154, 7
    %v156 = vsub.s32 0, %v155
    %v157 = vrot.slane %v131, %v156
    %vm159 = vcmask 64512
    %v161 = vsel %vm159, %v152, 0
    %vm163 = vcmask 1043456
    %v165 = vsel %vm163, %v126, 0
    %167 = vmatprep.subr.bf16.mxu0 0
    %168 = vmatpush1.bf16.msra.mxu0 %v165
    %169 = vmatprep.subr.bf16.mxu0 0
    %170 = vmatpush1.bf16.msra.mxu0 0
    %171 = vmatprep.subr.bf16.mxu0 0
    %172 = vmatpush1.bf16.msra.mxu0 0
    %173 = vmatprep.subr.bf16.mxu0 0
    %174 = vmatpush1.bf16.msra.mxu0 0
    %175 = vmatprep.subr.bf16.mxu0 0
    %176 = vmatpush1.bf16.msra.mxu0 0
    %177 = vmatprep.subr.bf16.mxu0 0
    %178 = vmatpush1.bf16.msra.mxu0 0
    %179 = vmatprep.subr.bf16.mxu0 0
    %180 = vmatpush1.bf16.msra.mxu0 0
    %181 = vmatprep.subr.bf16.mxu0 0
    %182 = vmatpush1.bf16.msra.mxu0 0
    %183 = vmatprep.subr.bf16.mxu0 0
    %184 = vmatpush1.bf16.msra.mxu0 0
    %185 = vmatprep.subr.bf16.mxu0 0
    %186 = vmatpush1.bf16.msra.mxu0 0
    %187 = vmatprep.subr.bf16.mxu0 0
    %188 = vmatpush1.bf16.msra.mxu0 0
    %189 = vmatprep.subr.bf16.mxu0 0
    %190 = vmatpush1.bf16.msra.mxu0 0
    %191 = vmatprep.subr.bf16.mxu0 0
    %192 = vmatpush1.bf16.msra.mxu0 0
    %193 = vmatprep.subr.bf16.mxu0 0
    %194 = vmatpush1.bf16.msra.mxu0 0
    %195 = vmatprep.subr.bf16.mxu0 0
    %196 = vmatpush1.bf16.msra.mxu0 0
    %197 = vmatprep.subr.bf16.mxu0 0
    %198 = vmatpush1.bf16.msra.mxu0 0
    %199 = vmatprep.mubr.bf16.mxu0 0
    %200 = vmatmul.mubr.bf16.gmra.mrb[0].mxu0 %v161
    %v201 = vpop.f32.mrb[0].mxu0
    %v202 = vadd.f32 %v157, %v201
    %v203 = vpop.f32.mrb[0].mxu0
    %v204 = vpop.f32.mrb[0].mxu0
    %v205 = vpop.f32.mrb[0].mxu0
    %206 = vdwg.mxu0
    %v208 = vlaneseq
    %v209 = vshrl.u32 %v208, 7
    %v210 = vsub.s32 0, %v209
    %v211 = vrot.slane %v123, %v210
    %v214 = vsel %vm163, %v122, 0
    %216 = vmatprep.subr.bf16.mxu0 0
    %217 = vmatpush1.bf16.msra.mxu0 %v214
    %218 = vmatprep.subr.bf16.mxu0 0
    %219 = vmatpush1.bf16.msra.mxu0 0
    %220 = vmatprep.subr.bf16.mxu0 0
    %221 = vmatpush1.bf16.msra.mxu0 0
    %222 = vmatprep.subr.bf16.mxu0 0
    %223 = vmatpush1.bf16.msra.mxu0 0
    %224 = vmatprep.subr.bf16.mxu0 0
    %225 = vmatpush1.bf16.msra.mxu0 0
    %226 = vmatprep.subr.bf16.mxu0 0
    %227 = vmatpush1.bf16.msra.mxu0 0
    %228 = vmatprep.subr.bf16.mxu0 0
    %229 = vmatpush1.bf16.msra.mxu0 0
    %230 = vmatprep.subr.bf16.mxu0 0
    %231 = vmatpush1.bf16.msra.mxu0 0
    %232 = vmatprep.subr.bf16.mxu0 0
    %233 = vmatpush1.bf16.msra.mxu0 0
    %234 = vmatprep.subr.bf16.mxu0 0
    %235 = vmatpush1.bf16.msra.mxu0 0
    %236 = vmatprep.subr.bf16.mxu0 0
    %237 = vmatpush1.bf16.msra.mxu0 0
    %238 = vmatprep.subr.bf16.mxu0 0
    %239 = vmatpush1.bf16.msra.mxu0 0
    %240 = vmatprep.subr.bf16.mxu0 0
    %241 = vmatpush1.bf16.msra.mxu0 0
    %242 = vmatprep.subr.bf16.mxu0 0
    %243 = vmatpush1.bf16.msra.mxu0 0
    %244 = vmatprep.subr.bf16.mxu0 0
    %245 = vmatpush1.bf16.msra.mxu0 0
    %246 = vmatprep.subr.bf16.mxu0 0
    %247 = vmatpush1.bf16.msra.mxu0 0
    %248 = vmatprep.mubr.bf16.mxu0 0
    %249 = vmatmul.mubr.bf16.gmra.mrb[0].mxu0 %v161
    %v250 = vpop.f32.mrb[0].mxu0
    %v251 = vadd.f32 %v211, %v250
    %v252 = vpop.f32.mrb[0].mxu0
    %v253 = vpop.f32.mrb[0].mxu0
    %v254 = vpop.f32.mrb[0].mxu0
    %255 = vdwg.mxu0
    %v256 = vtanh.pop %v251
    %v257 = vpack.c.bf16 %v151, %v151
    %v260 = vunpack.c.l.b16 %v124
    %v261 = vunpack.c.l.b16 %v125
    %v262 = vpack.c.b16 %v261, %v260
    %vm264 = vcmask 130048
    %v266 = vsel %vm264, %v257, 0
    %268 = vmatprep.subr.bf16.mxu0 0
    %269 = vmatpush1.bf16.msra.mxu0 %v262
    %270 = vmatprep.subr.bf16.mxu0 0
    %271 = vmatpush1.bf16.msra.mxu0 0
    %272 = vmatprep.subr.bf16.mxu0 0
    %273 = vmatpush1.bf16.msra.mxu0 0
    %274 = vmatprep.subr.bf16.mxu0 0
    %275 = vmatpush1.bf16.msra.mxu0 0
    %276 = vmatprep.subr.bf16.mxu0 0
    %277 = vmatpush1.bf16.msra.mxu0 0
    %278 = vmatprep.subr.bf16.mxu0 0
    %279 = vmatpush1.bf16.msra.mxu0 0
    %280 = vmatprep.subr.bf16.mxu0 0
    %281 = vmatpush1.bf16.msra.mxu0 0
    %282 = vmatprep.subr.bf16.mxu0 0
    %283 = vmatpush1.bf16.msra.mxu0 0
    %284 = vmatprep.subr.bf16.mxu0 0
    %285 = vmatpush1.bf16.msra.mxu0 0
    %286 = vmatprep.subr.bf16.mxu0 0
    %287 = vmatpush1.bf16.msra.mxu0 0
    %288 = vmatprep.subr.bf16.mxu0 0
    %289 = vmatpush1.bf16.msra.mxu0 0
    %290 = vmatprep.subr.bf16.mxu0 0
    %291 = vmatpush1.bf16.msra.mxu0 0
    %292 = vmatprep.subr.bf16.mxu0 0
    %293 = vmatpush1.bf16.msra.mxu0 0
    %294 = vmatprep.subr.bf16.mxu0 0
    %295 = vmatpush1.bf16.msra.mxu0 0
    %296 = vmatprep.subr.bf16.mxu0 0
    %297 = vmatpush1.bf16.msra.mxu0 0
    %298 = vmatprep.subr.bf16.mxu0 0
    %299 = vmatpush1.bf16.msra.mxu0 0
    %300 = vmatprep.mubr.bf16.mxu0 0
    %301 = vmatmul.mubr.bf16.gmra.mrb[0].mxu0 %v266
    %v302 = vpop.f32.mrb[0].mxu0
    %v303 = vadd.f32 %v202, %v302
    %v304 = vpop.f32.mrb[0].mxu0
    %v305 = vpop.f32.mrb[0].mxu0
    %v306 = vpop.f32.mrb[0].mxu0
    %307 = vdwg.mxu0
    %v308 = vpack.c.bf16 %v256, %v256
    %v310 = vlaneseq
    %v311 = vshrl.u32 %v310, 7
    %v312 = vsub.s32 0, %v311
    %v313 = vrot.slane %v132, %v312
    %v319 = vunpack.c.l.b16 %v127
    %v320 = vunpack.c.l.b16 %v128
    %v321 = vunpack.c.l.b16 %v129
    %v322 = vunpack.c.l.b16 %v130
    %v323 = vpack.c.b16 %v320, %v319
    %v324 = vpack.c.b16 %v322, %v321
    %vm327 = vcmask 261120
    %v329 = vsel %vm327, %v308, 0
    %331 = vmatprep.subr.bf16.mxu0 0
    %332 = vmatpush1.bf16.msra.mxu0 %v323
    %333 = vmatprep.subr.bf16.mxu0 0
    %334 = vmatpush1.bf16.msra.mxu0 %v324
    %335 = vmatprep.subr.bf16.mxu0 0
    %336 = vmatpush1.bf16.msra.mxu0 0
    %337 = vmatprep.subr.bf16.mxu0 0
    %338 = vmatpush1.bf16.msra.mxu0 0
    %339 = vmatprep.subr.bf16.mxu0 0
    %340 = vmatpush1.bf16.msra.mxu0 0
    %341 = vmatprep.subr.bf16.mxu0 0
    %342 = vmatpush1.bf16.msra.mxu0 0
    %343 = vmatprep.subr.bf16.mxu0 0
    %344 = vmatpush1.bf16.msra.mxu0 0
    %345 = vmatprep.subr.bf16.mxu0 0
    %346 = vmatpush1.bf16.msra.mxu0 0
    %347 = vmatprep.subr.bf16.mxu0 0
    %348 = vmatpush1.bf16.msra.mxu0 0
    %349 = vmatprep.subr.bf16.mxu0 0
    %350 = vmatpush1.bf16.msra.mxu0 0
    %351 = vmatprep.subr.bf16.mxu0 0
    %352 = vmatpush1.bf16.msra.mxu0 0
    %353 = vmatprep.subr.bf16.mxu0 0
    %354 = vmatpush1.bf16.msra.mxu0 0
    %355 = vmatprep.subr.bf16.mxu0 0
    %356 = vmatpush1.bf16.msra.mxu0 0
    %357 = vmatprep.subr.bf16.mxu0 0
    %358 = vmatpush1.bf16.msra.mxu0 0
    %359 = vmatprep.subr.bf16.mxu0 0
    %360 = vmatpush1.bf16.msra.mxu0 0
    %361 = vmatprep.subr.bf16.mxu0 0
    %362 = vmatpush1.bf16.msra.mxu0 0
    %363 = vmatprep.mubr.bf16.mxu0 0
    %364 = vmatmul.mubr.bf16.gmra.mrb[0].mxu0 %v329
    %v365 = vpop.f32.mrb[0].mxu0
    %v366 = vadd.f32 %v313, %v365
    %v367 = vpop.f32.mrb[0].mxu0
    %v368 = vpop.f32.mrb[0].mxu0
    %v369 = vpop.f32.mrb[0].mxu0
    %370 = vdwg.mxu0
    %v371 = vadd.f32 %v303, %v366
    %v372 = vxor.u32 %v371, 2147483648
    %v373 = vmul.f32 %v372, 1.442695
    %v374 = vpow.pop %v373
    %v375 = vadd.f32 %v374, 1.0
    %v376 = vrcp.pop %v375
    %v377 = vmul.f32 1.0, %v376
    %379 = vrot.lane.b32.xlu0 %v366, 64
    %v380 = vpop.permute.xlu0 %379
    %v382 = vmul.f32 %v377, %v380
    %384 = vrot.lane.b32.xlu0 %v382, 64
    %v385 = vpop.permute.xlu0 %384
    %v387 = vadd.f32 %v303, %v385
    %v388 = vtanh.pop %v387
    %v389 = vsub.f32 1.0, %v377
    %391 = vrot.lane.b32.xlu0 %v388, 96
    %v392 = vpop.permute.xlu0 %391
    %v394 = vmul.f32 %v389, %v392
    %396 = vrot.lane.b32.xlu0 %v256, 32
    %v397 = vpop.permute.xlu0 %396
    %v399 = vmul.f32 %v377, %v397
    %v400 = vadd.f32 %v394, %v399
    %v401 = vpack.c.bf16 %v400, %v400
    %v403 = vlaneseq
    %v404 = vshrl.u32 %v403, 7
    %v405 = vsub.s32 0, %v404
    %v406 = vrot.slane %v141, %v405
    %409 = vrot.lane.b32.xlu0 %v401, 96
    %v410 = vpop.permute.xlu0 %409
    %v415 = vunpack.c.l.b16 %v133
    %v416 = vunpack.c.l.b16 %v134
    %v417 = vunpack.c.l.b16 %v135
    %v418 = vunpack.c.l.b16 %v136
    %v419 = vpack.c.b16 %v416, %v415
    %v420 = vpack.c.b16 %v418, %v417
    %v424 = vsel %vm327, %v410, 0
    %426 = vmatprep.subr.bf16.mxu0 0
    %427 = vmatpush1.bf16.msra.mxu0 %v419
    %428 = vmatprep.subr.bf16.mxu0 0
    %429 = vmatpush1.bf16.msra.mxu0 %v420
    %430 = vmatprep.subr.bf16.mxu0 0
    %431 = vmatpush1.bf16.msra.mxu0 0
    %432 = vmatprep.subr.bf16.mxu0 0
    %433 = vmatpush1.bf16.msra.mxu0 0
    %434 = vmatprep.subr.bf16.mxu0 0
    %435 = vmatpush1.bf16.msra.mxu0 0
    %436 = vmatprep.subr.bf16.mxu0 0
    %437 = vmatpush1.bf16.msra.mxu0 0
    %438 = vmatprep.subr.bf16.mxu0 0
    %439 = vmatpush1.bf16.msra.mxu0 0
    %440 = vmatprep.subr.bf16.mxu0 0
    %441 = vmatpush1.bf16.msra.mxu0 0
    %442 = vmatprep.subr.bf16.mxu0 0
    %443 = vmatpush1.bf16.msra.mxu0 0
    %444 = vmatprep.subr.bf16.mxu0 0
    %445 = vmatpush1.bf16.msra.mxu0 0
    %446 = vmatprep.subr.bf16.mxu0 0
    %447 = vmatpush1.bf16.msra.mxu0 0
    %448 = vmatprep.subr.bf16.mxu0 0
    %449 = vmatpush1.bf16.msra.mxu0 0
    %450 = vmatprep.subr.bf16.mxu0 0
    %451 = vmatpush1.bf16.msra.mxu0 0
    %452 = vmatprep.subr.bf16.mxu0 0
    %453 = vmatpush1.bf16.msra.mxu0 0
    %454 = vmatprep.subr.bf16.mxu0 0
    %455 = vmatpush1.bf16.msra.mxu0 0
    %456 = vmatprep.subr.bf16.mxu0 0
    %457 = vmatpush1.bf16.msra.mxu0 0
    %458 = vmatprep.mubr.bf16.mxu0 0
    %459 = vmatmul.mubr.bf16.gmra.mrb[0].mxu0 %v424
    %v460 = vpop.f32.mrb[0].mxu0
    %v461 = vadd.f32 %v406, %v460
    %v462 = vpop.f32.mrb[0].mxu0
    %v463 = vpop.f32.mrb[0].mxu0
    %v464 = vpop.f32.mrb[0].mxu0
    %465 = vdwg.mxu0
    %v467 = vlaneseq
    %v468 = vshrl.u32 %v467, 7
    %v469 = vsub.s32 0, %v468
    %v470 = vrot.slane %v142, %v469
    %v476 = vunpack.c.l.b16 %v137
    %v477 = vunpack.c.l.b16 %v138
    %v478 = vunpack.c.l.b16 %v139
    %v479 = vunpack.c.l.b16 %v140
    %v480 = vpack.c.b16 %v477, %v476
    %v481 = vpack.c.b16 %v479, %v478
    %484 = vmatprep.subr.bf16.mxu0 0
    %485 = vmatpush1.bf16.msra.mxu0 %v480
    %486 = vmatprep.subr.bf16.mxu0 0
    %487 = vmatpush1.bf16.msra.mxu0 %v481
    %488 = vmatprep.subr.bf16.mxu0 0
    %489 = vmatpush1.bf16.msra.mxu0 0
    %490 = vmatprep.subr.bf16.mxu0 0
    %491 = vmatpush1.bf16.msra.mxu0 0
    %492 = vmatprep.subr.bf16.mxu0 0
    %493 = vmatpush1.bf16.msra.mxu0 0
    %494 = vmatprep.subr.bf16.mxu0 0
    %495 = vmatpush1.bf16.msra.mxu0 0
    %496 = vmatprep.subr.bf16.mxu0 0
    %497 = vmatpush1.bf16.msra.mxu0 0
    %498 = vmatprep.subr.bf16.mxu0 0
    %499 = vmatpush1.bf16.msra.mxu0 0
    %500 = vmatprep.subr.bf16.mxu0 0
    %501 = vmatpush1.bf16.msra.mxu0 0
    %502 = vmatprep.subr.bf16.mxu0 0
    %503 = vmatpush1.bf16.msra.mxu0 0
    %504 = vmatprep.subr.bf16.mxu0 0
    %505 = vmatpush1.bf16.msra.mxu0 0
    %506 = vmatprep.subr.bf16.mxu0 0
    %507 = vmatpush1.bf16.msra.mxu0 0
    %508 = vmatprep.subr.bf16.mxu0 0
    %509 = vmatpush1.bf16.msra.mxu0 0
    %510 = vmatprep.subr.bf16.mxu0 0
    %511 = vmatpush1.bf16.msra.mxu0 0
    %512 = vmatprep.subr.bf16.mxu0 0
    %513 = vmatpush1.bf16.msra.mxu0 0
    %514 = vmatprep.subr.bf16.mxu0 0
    %515 = vmatpush1.bf16.msra.mxu0 0
    %516 = vmatprep.mubr.bf16.mxu0 0
    %517 = vmatmul.mubr.bf16.gmra.mrb[0].mxu0 %v424
    %v518 = vpop.f32.mrb[0].mxu0
    %v519 = vadd.f32 %v470, %v518
    %v520 = vpop.f32.mrb[0].mxu0
    %v521 = vpop.f32.mrb[0].mxu0
    %v522 = vpop.f32.mrb[0].mxu0
    %523 = vdwg.mxu0
    %v524 = vadd.f32 %v461, %v519
    %v525 = vxor.u32 %v524, 2147483648
    %v526 = vmul.f32 %v525, 1.442695
    %v527 = vpow.pop %v526
    %v528 = vadd.f32 %v527, 1.0
    %v529 = vrcp.pop %v528
    %v530 = vmul.f32 1.0, %v529
    %532 = vrot.lane.b32.xlu0 %v519, 64
    %v533 = vpop.permute.xlu0 %532
    %v535 = vmul.f32 %v530, %v533
    %537 = vrot.lane.b32.xlu0 %v535, 64
    %v538 = vpop.permute.xlu0 %537
    %v540 = vadd.f32 %v461, %v538
    %v541 = vtanh.pop %v540
    %v542 = vsub.f32 1.0, %v530
    %544 = vrot.lane.b32.xlu0 %v541, 96
    %v545 = vpop.permute.xlu0 %544
    %v547 = vmul.f32 %v542, %v545
    %v548 = vmul.f32 %v530, %v400
    %v549 = vadd.f32 %v547, %v548
    %v550 = vpack.c.bf16 %v549, %v549
    %v552 = vlaneseq
    %v553 = vshrl.u32 %v552, 7
    %v554 = vsub.s32 0, %v553
    %v555 = vrot.slane %v147, %v554
    %558 = vrot.lane.b32.xlu0 %v550, 96
    %v559 = vpop.permute.xlu0 %558
    %v564 = vunpack.c.l.b16 %v143
    %v565 = vunpack.c.l.b16 %v144
    %v566 = vunpack.c.l.b16 %v145
    %v567 = vunpack.c.l.b16 %v146
    %v568 = vpack.c.b16 %v565, %v564
    %v569 = vpack.c.b16 %v567, %v566
    %v573 = vsel %vm327, %v559, 0
    %575 = vmatprep.subr.bf16.mxu0 0
    %576 = vmatpush1.bf16.msra.mxu0 %v568
    %577 = vmatprep.subr.bf16.mxu0 0
    %578 = vmatpush1.bf16.msra.mxu0 %v569
    %579 = vmatprep.subr.bf16.mxu0 0
    %580 = vmatpush1.bf16.msra.mxu0 0
    %581 = vmatprep.subr.bf16.mxu0 0
    %582 = vmatpush1.bf16.msra.mxu0 0
    %583 = vmatprep.subr.bf16.mxu0 0
    %584 = vmatpush1.bf16.msra.mxu0 0
    %585 = vmatprep.subr.bf16.mxu0 0
    %586 = vmatpush1.bf16.msra.mxu0 0
    %587 = vmatprep.subr.bf16.mxu0 0
    %588 = vmatpush1.bf16.msra.mxu0 0
    %589 = vmatprep.subr.bf16.mxu0 0
    %590 = vmatpush1.bf16.msra.mxu0 0
    %591 = vmatprep.subr.bf16.mxu0 0
    %592 = vmatpush1.bf16.msra.mxu0 0
    %593 = vmatprep.subr.bf16.mxu0 0
    %594 = vmatpush1.bf16.msra.mxu0 0
    %595 = vmatprep.subr.bf16.mxu0 0
    %596 = vmatpush1.bf16.msra.mxu0 0
    %597 = vmatprep.subr.bf16.mxu0 0
    %598 = vmatpush1.bf16.msra.mxu0 0
    %599 = vmatprep.subr.bf16.mxu0 0
    %600 = vmatpush1.bf16.msra.mxu0 0
    %601 = vmatprep.subr.bf16.mxu0 0
    %602 = vmatpush1.bf16.msra.mxu0 0
    %603 = vmatprep.subr.bf16.mxu0 0
    %604 = vmatpush1.bf16.msra.mxu0 0
    %605 = vmatprep.subr.bf16.mxu0 0
    %606 = vmatpush1.bf16.msra.mxu0 0
    %607 = vmatprep.mubr.bf16.mxu0 0
    %608 = vmatmul.mubr.bf16.gmra.mrb[0].mxu0 %v573
    %v609 = vpop.f32.mrb[0].mxu0
    %v610 = vadd.f32 %v555, %v609
    %v611 = vpop.f32.mrb[0].mxu0
    %v612 = vpop.f32.mrb[0].mxu0
    %v613 = vpop.f32.mrb[0].mxu0
    %614 = vdwg.mxu0
    %vm615 = vcmask 123904
    %v616 = vsel %vm615, %v610, -inf
    %617 = vmax.xlane.f32.xlu0 %v616
    %v618 = vpop.xlane.xlu0 %617
    %v619 = vsub.f32 %v610, %v618
    %v620 = vmul.f32 %v619, 1.442695
    %v621 = vpow.pop %v620
    %v622 = vsel %vm615, %v621, 0.0
    %623 = vadd.xlane.f32.xlu0 %v622
    %v624 = vpop.xlane.xlu0 %623
    %v625 = vlog2.pop %v624
    %v626 = vmul.f32 %v625, 0.6931472
    %v627 = vsub.f32 %v619, %v626
    %vm628 = vcmp.eq.f32.partialorder %v619, 0.0
    %v629 = vsel %vm628, %v149, 16
    %v630 = vsel %vm615, %v629, 2147483647
    %v631 = vand.u32 %v630, 65535
    %v632 = vshra.s32 %v630, 16
    %v633 = vcvt.s32.f32 %v631
    %v634 = vcvt.s32.f32 %v632
    %635 = vmin.xlane.f32.xlu0 %v634
    %v636 = vpop.xlane.xlu0 %635
    %vm637 = vcmp.eq.f32.partialorder %v634, %v636
    %v638 = vsel %vm637, %v633, inf
    %639 = vmin.xlane.f32.xlu0 %v638
    %v640 = vpop.xlane.xlu0 %639
    %v641 = vcvt.f32.s32 %v640
    %v642 = vcvt.f32.s32 %v636
    %v643 = vshll.u32 %v642, 16
    %v644 = vadd.s32 %v643, %v641
    %vm645 = vcmp.eq.s32.totalorder %v149, %v644
    %v646 = vsel %vm645, 1.0, 0.0
    %v647 = vpack.c.bf16 %v646, %v646
    %v649 = vsel %vm264, %v647, 0
    %651 = vmatprep.subr.bf16.mxu0 0
    %652 = vmatpush1.bf16.msra.mxu0 %v262
    %653 = vmatprep.subr.bf16.mxu0 0
    %654 = vmatpush1.bf16.msra.mxu0 0
    %655 = vmatprep.subr.bf16.mxu0 0
    %656 = vmatpush1.bf16.msra.mxu0 0
    %657 = vmatprep.subr.bf16.mxu0 0
    %658 = vmatpush1.bf16.msra.mxu0 0
    %659 = vmatprep.subr.bf16.mxu0 0
    %660 = vmatpush1.bf16.msra.mxu0 0
    %661 = vmatprep.subr.bf16.mxu0 0
    %662 = vmatpush1.bf16.msra.mxu0 0
    %663 = vmatprep.subr.bf16.mxu0 0
    %664 = vmatpush1.bf16.msra.mxu0 0
    %665 = vmatprep.subr.bf16.mxu0 0
    %666 = vmatpush1.bf16.msra.mxu0 0
    %667 = vmatprep.subr.bf16.mxu0 0
    %668 = vmatpush1.bf16.msra.mxu0 0
    %669 = vmatprep.subr.bf16.mxu0 0
    %670 = vmatpush1.bf16.msra.mxu0 0
    %671 = vmatprep.subr.bf16.mxu0 0
    %672 = vmatpush1.bf16.msra.mxu0 0
    %673 = vmatprep.subr.bf16.mxu0 0
    %674 = vmatpush1.bf16.msra.mxu0 0
    %675 = vmatprep.subr.bf16.mxu0 0
    %676 = vmatpush1.bf16.msra.mxu0 0
    %677 = vmatprep.subr.bf16.mxu0 0
    %678 = vmatpush1.bf16.msra.mxu0 0
    %679 = vmatprep.subr.bf16.mxu0 0
    %680 = vmatpush1.bf16.msra.mxu0 0
    %681 = vmatprep.subr.bf16.mxu0 0
    %682 = vmatpush1.bf16.msra.mxu0 0
    %683 = vmatprep.mubr.bf16.mxu0 0
    %684 = vmatmul.mubr.bf16.gmra.mrb[0].mxu0 %v649
    %v685 = vpop.f32.mrb[0].mxu0
    %v686 = vadd.f32 %v202, %v685
    %v687 = vpop.f32.mrb[0].mxu0
    %v688 = vpop.f32.mrb[0].mxu0
    %v689 = vpop.f32.mrb[0].mxu0
    %690 = vdwg.mxu0
    %691 = vmatprep.subr.bf16.mxu0 0
    %692 = vmatpush1.bf16.msra.mxu0 %v323
    %693 = vmatprep.subr.bf16.mxu0 0
    %694 = vmatpush1.bf16.msra.mxu0 %v324
    %695 = vmatprep.subr.bf16.mxu0 0
    %696 = vmatpush1.bf16.msra.mxu0 0
    %697 = vmatprep.subr.bf16.mxu0 0
    %698 = vmatpush1.bf16.msra.mxu0 0
    %699 = vmatprep.subr.bf16.mxu0 0
    %700 = vmatpush1.bf16.msra.mxu0 0
    %701 = vmatprep.subr.bf16.mxu0 0
    %702 = vmatpush1.bf16.msra.mxu0 0
    %703 = vmatprep.subr.bf16.mxu0 0
    %704 = vmatpush1.bf16.msra.mxu0 0
    %705 = vmatprep.subr.bf16.mxu0 0
    %706 = vmatpush1.bf16.msra.mxu0 0
    %707 = vmatprep.subr.bf16.mxu0 0
    %708 = vmatpush1.bf16.msra.mxu0 0
    %709 = vmatprep.subr.bf16.mxu0 0
    %710 = vmatpush1.bf16.msra.mxu0 0
    %711 = vmatprep.subr.bf16.mxu0 0
    %712 = vmatpush1.bf16.msra.mxu0 0
    %713 = vmatprep.subr.bf16.mxu0 0
    %714 = vmatpush1.bf16.msra.mxu0 0
    %715 = vmatprep.subr.bf16.mxu0 0
    %716 = vmatpush1.bf16.msra.mxu0 0
    %717 = vmatprep.subr.bf16.mxu0 0
    %718 = vmatpush1.bf16.msra.mxu0 0
    %719 = vmatprep.subr.bf16.mxu0 0
    %720 = vmatpush1.bf16.msra.mxu0 0
    %721 = vmatprep.subr.bf16.mxu0 0
    %722 = vmatpush1.bf16.msra.mxu0 0
    %723 = vmatprep.mubr.bf16.mxu0 0
    %724 = vmatmul.mubr.bf16.gmra.mrb[0].mxu0 %v424
    %v725 = vpop.f32.mrb[0].mxu0
    %v726 = vadd.f32 %v313, %v725
    %v727 = vpop.f32.mrb[0].mxu0
    %v728 = vpop.f32.mrb[0].mxu0
    %v729 = vpop.f32.mrb[0].mxu0
    %730 = vdwg.mxu0
    %v731 = vadd.f32 %v686, %v726
    %v732 = vxor.u32 %v731, 2147483648
    %v733 = vmul.f32 %v732, 1.442695
    %v734 = vpow.pop %v733
    %v735 = vadd.f32 %v734, 1.0
    %v736 = vrcp.pop %v735
    %v737 = vmul.f32 1.0, %v736
    %739 = vrot.lane.b32.xlu0 %v726, 64
    %v740 = vpop.permute.xlu0 %739
    %v742 = vmul.f32 %v737, %v740
    %744 = vrot.lane.b32.xlu0 %v742, 64
    %v745 = vpop.permute.xlu0 %744
    %v747 = vadd.f32 %v686, %v745
    %v748 = vtanh.pop %v747
    %v749 = vsub.f32 1.0, %v737
    %751 = vrot.lane.b32.xlu0 %v748, 96
    %v752 = vpop.permute.xlu0 %751
    %v754 = vmul.f32 %v749, %v752
    %v755 = vmul.f32 %v737, %v400
    %v756 = vadd.f32 %v754, %v755
    %v757 = vpack.c.bf16 %v756, %v756
    %759 = vrot.lane.b32.xlu0 %v757, 96
    %v760 = vpop.permute.xlu0 %759
    %v762 = vsel %vm327, %v760, 0
    %764 = vmatprep.subr.bf16.mxu0 0
    %765 = vmatpush1.bf16.msra.mxu0 %v419
    %766 = vmatprep.subr.bf16.mxu0 0
    %767 = vmatpush1.bf16.msra.mxu0 %v420
    %768 = vmatprep.subr.bf16.mxu0 0
    %769 = vmatpush1.bf16.msra.mxu0 0
    %770 = vmatprep.subr.bf16.mxu0 0
    %771 = vmatpush1.bf16.msra.mxu0 0
    %772 = vmatprep.subr.bf16.mxu0 0
    %773 = vmatpush1.bf16.msra.mxu0 0
    %774 = vmatprep.subr.bf16.mxu0 0
    %775 = vmatpush1.bf16.msra.mxu0 0
    %776 = vmatprep.subr.bf16.mxu0 0
    %777 = vmatpush1.bf16.msra.mxu0 0
    %778 = vmatprep.subr.bf16.mxu0 0
    %779 = vmatpush1.bf16.msra.mxu0 0
    %780 = vmatprep.subr.bf16.mxu0 0
    %781 = vmatpush1.bf16.msra.mxu0 0
    %782 = vmatprep.subr.bf16.mxu0 0
    %783 = vmatpush1.bf16.msra.mxu0 0
    %784 = vmatprep.subr.bf16.mxu0 0
    %785 = vmatpush1.bf16.msra.mxu0 0
    %786 = vmatprep.subr.bf16.mxu0 0
    %787 = vmatpush1.bf16.msra.mxu0 0
    %788 = vmatprep.subr.bf16.mxu0 0
    %789 = vmatpush1.bf16.msra.mxu0 0
    %790 = vmatprep.subr.bf16.mxu0 0
    %791 = vmatpush1.bf16.msra.mxu0 0
    %792 = vmatprep.subr.bf16.mxu0 0
    %793 = vmatpush1.bf16.msra.mxu0 0
    %794 = vmatprep.subr.bf16.mxu0 0
    %795 = vmatpush1.bf16.msra.mxu0 0
    %796 = vmatprep.mubr.bf16.mxu0 0
    %797 = vmatmul.mubr.bf16.gmra.mrb[0].mxu0 %v762
    %v798 = vpop.f32.mrb[0].mxu0
    %v799 = vadd.f32 %v406, %v798
    %v800 = vpop.f32.mrb[0].mxu0
    %v801 = vpop.f32.mrb[0].mxu0
    %v802 = vpop.f32.mrb[0].mxu0
    %803 = vdwg.mxu0
    %804 = vmatprep.subr.bf16.mxu0 0
    %805 = vmatpush1.bf16.msra.mxu0 %v480
    %806 = vmatprep.subr.bf16.mxu0 0
    %807 = vmatpush1.bf16.msra.mxu0 %v481
    %808 = vmatprep.subr.bf16.mxu0 0
    %809 = vmatpush1.bf16.msra.mxu0 0
    %810 = vmatprep.subr.bf16.mxu0 0
    %811 = vmatpush1.bf16.msra.mxu0 0
    %812 = vmatprep.subr.bf16.mxu0 0
    %813 = vmatpush1.bf16.msra.mxu0 0
    %814 = vmatprep.subr.bf16.mxu0 0
    %815 = vmatpush1.bf16.msra.mxu0 0
    %816 = vmatprep.subr.bf16.mxu0 0
    %817 = vmatpush1.bf16.msra.mxu0 0
    %818 = vmatprep.subr.bf16.mxu0 0
    %819 = vmatpush1.bf16.msra.mxu0 0
    %820 = vmatprep.subr.bf16.mxu0 0
    %821 = vmatpush1.bf16.msra.mxu0 0
    %822 = vmatprep.subr.bf16.mxu0 0
    %823 = vmatpush1.bf16.msra.mxu0 0
    %824 = vmatprep.subr.bf16.mxu0 0
    %825 = vmatpush1.bf16.msra.mxu0 0
    %826 = vmatprep.subr.bf16.mxu0 0
    %827 = vmatpush1.bf16.msra.mxu0 0
    %828 = vmatprep.subr.bf16.mxu0 0
    %829 = vmatpush1.bf16.msra.mxu0 0
    %830 = vmatprep.subr.bf16.mxu0 0
    %831 = vmatpush1.bf16.msra.mxu0 0
    %832 = vmatprep.subr.bf16.mxu0 0
    %833 = vmatpush1.bf16.msra.mxu0 0
    %834 = vmatprep.subr.bf16.mxu0 0
    %835 = vmatpush1.bf16.msra.mxu0 0
    %836 = vmatprep.mubr.bf16.mxu0 0
    %837 = vmatmul.mubr.bf16.gmra.mrb[0].mxu0 %v573
    %v838 = vpop.f32.mrb[0].mxu0
    %v839 = vadd.f32 %v470, %v838
    %v840 = vpop.f32.mrb[0].mxu0
    %v841 = vpop.f32.mrb[0].mxu0
    %v842 = vpop.f32.mrb[0].mxu0
    %843 = vdwg.mxu0
    %v844 = vadd.f32 %v799, %v839
    %v845 = vxor.u32 %v844, 2147483648
    %v846 = vmul.f32 %v845, 1.442695
    %v847 = vpow.pop %v846
    %v848 = vadd.f32 %v847, 1.0
    %v849 = vrcp.pop %v848
    %v850 = vmul.f32 1.0, %v849
    %852 = vrot.lane.b32.xlu0 %v839, 64
    %v853 = vpop.permute.xlu0 %852
    %v855 = vmul.f32 %v850, %v853
    %857 = vrot.lane.b32.xlu0 %v855, 64
    %v858 = vpop.permute.xlu0 %857
    %v860 = vadd.f32 %v799, %v858
    %v861 = vtanh.pop %v860
    %v862 = vsub.f32 1.0, %v850
    %864 = vrot.lane.b32.xlu0 %v861, 96
    %v865 = vpop.permute.xlu0 %864
    %v867 = vmul.f32 %v862, %v865
    %v868 = vmul.f32 %v850, %v549
    %v869 = vadd.f32 %v867, %v868
    %v870 = vpack.c.bf16 %v869, %v869
    %872 = vrot.lane.b32.xlu0 %v870, 96
    %v873 = vpop.permute.xlu0 %872
    %v875 = vsel %vm327, %v873, 0
    %877 = vmatprep.subr.bf16.mxu0 0
    %878 = vmatpush1.bf16.msra.mxu0 %v568
    %879 = vmatprep.subr.bf16.mxu0 0
    %880 = vmatpush1.bf16.msra.mxu0 %v569
    %881 = vmatprep.subr.bf16.mxu0 0
    %882 = vmatpush1.bf16.msra.mxu0 0
    %883 = vmatprep.subr.bf16.mxu0 0
    %884 = vmatpush1.bf16.msra.mxu0 0
    %885 = vmatprep.subr.bf16.mxu0 0
    %886 = vmatpush1.bf16.msra.mxu0 0
    %887 = vmatprep.subr.bf16.mxu0 0
    %888 = vmatpush1.bf16.msra.mxu0 0
    %889 = vmatprep.subr.bf16.mxu0 0
    %890 = vmatpush1.bf16.msra.mxu0 0
    %891 = vmatprep.subr.bf16.mxu0 0
    %892 = vmatpush1.bf16.msra.mxu0 0
    %893 = vmatprep.subr.bf16.mxu0 0
    %894 = vmatpush1.bf16.msra.mxu0 0
    %895 = vmatprep.subr.bf16.mxu0 0
    %896 = vmatpush1.bf16.msra.mxu0 0
    %897 = vmatprep.subr.bf16.mxu0 0
    %898 = vmatpush1.bf16.msra.mxu0 0
    %899 = vmatprep.subr.bf16.mxu0 0
    %900 = vmatpush1.bf16.msra.mxu0 0
    %901 = vmatprep.subr.bf16.mxu0 0
    %902 = vmatpush1.bf16.msra.mxu0 0
    %903 = vmatprep.subr.bf16.mxu0 0
    %904 = vmatpush1.bf16.msra.mxu0 0
    %905 = vmatprep.subr.bf16.mxu0 0
    %906 = vmatpush1.bf16.msra.mxu0 0
    %907 = vmatprep.subr.bf16.mxu0 0
    %908 = vmatpush1.bf16.msra.mxu0 0
    %909 = vmatprep.mubr.bf16.mxu0 0
    %910 = vmatmul.mubr.bf16.gmra.mrb[0].mxu0 %v875
    %v911 = vpop.f32.mrb[0].mxu0
    %v912 = vadd.f32 %v555, %v911
    %v913 = vpop.f32.mrb[0].mxu0
    %v914 = vpop.f32.mrb[0].mxu0
    %v915 = vpop.f32.mrb[0].mxu0
    %916 = vdwg.mxu0
    %v917 = vsel %vm615, %v912, -inf
    %918 = vmax.xlane.f32.xlu0 %v917
    %v919 = vpop.xlane.xlu0 %918
    %v920 = vsub.f32 %v912, %v919
    %v921 = vmul.f32 %v920, 1.442695
    %v922 = vpow.pop %v921
    %v923 = vsel %vm615, %v922, 0.0
    %924 = vadd.xlane.f32.xlu0 %v923
    %v925 = vpop.xlane.xlu0 %924
    %v926 = vlog2.pop %v925
    %v927 = vmul.f32 %v926, 0.6931472
    %v928 = vsub.f32 %v920, %v927
    %vm929 = vcmp.eq.f32.partialorder %v920, 0.0
    %v930 = vsel %vm929, %v149, 16
    %v931 = vsel %vm615, %v930, 2147483647
    %v932 = vand.u32 %v931, 65535
    %v933 = vshra.s32 %v931, 16
    %v934 = vcvt.s32.f32 %v932
    %v935 = vcvt.s32.f32 %v933
    %936 = vmin.xlane.f32.xlu0 %v935
    %v937 = vpop.xlane.xlu0 %936
    %vm938 = vcmp.eq.f32.partialorder %v935, %v937
    %v939 = vsel %vm938, %v934, inf
    %940 = vmin.xlane.f32.xlu0 %v939
    %v941 = vpop.xlane.xlu0 %940
    %v942 = vcvt.f32.s32 %v941
    %v943 = vcvt.f32.s32 %v937
    %v944 = vshll.u32 %v943, 16
    %v945 = vadd.s32 %v944, %v942
    %vm946 = vcmp.eq.s32.totalorder %v149, %v945
    %v947 = vsel %vm946, 1.0, 0.0
    %v948 = vpack.c.bf16 %v947, %v947
    %v950 = vsel %vm264, %v948, 0
    %952 = vmatprep.subr.bf16.mxu0 0
    %953 = vmatpush1.bf16.msra.mxu0 %v262
    %954 = vmatprep.subr.bf16.mxu0 0
    %955 = vmatpush1.bf16.msra.mxu0 0
    %956 = vmatprep.subr.bf16.mxu0 0
    %957 = vmatpush1.bf16.msra.mxu0 0
    %958 = vmatprep.subr.bf16.mxu0 0
    %959 = vmatpush1.bf16.msra.mxu0 0
    %960 = vmatprep.subr.bf16.mxu0 0
    %961 = vmatpush1.bf16.msra.mxu0 0
    %962 = vmatprep.subr.bf16.mxu0 0
    %963 = vmatpush1.bf16.msra.mxu0 0
    %964 = vmatprep.subr.bf16.mxu0 0
    %965 = vmatpush1.bf16.msra.mxu0 0
    %966 = vmatprep.subr.bf16.mxu0 0
    %967 = vmatpush1.bf16.msra.mxu0 0
    %968 = vmatprep.subr.bf16.mxu0 0
    %969 = vmatpush1.bf16.msra.mxu0 0
    %970 = vmatprep.subr.bf16.mxu0 0
    %971 = vmatpush1.bf16.msra.mxu0 0
    %972 = vmatprep.subr.bf16.mxu0 0
    %973 = vmatpush1.bf16.msra.mxu0 0
    %974 = vmatprep.subr.bf16.mxu0 0
    %975 = vmatpush1.bf16.msra.mxu0 0
    %976 = vmatprep.subr.bf16.mxu0 0
    %977 = vmatpush1.bf16.msra.mxu0 0
    %978 = vmatprep.subr.bf16.mxu0 0
    %979 = vmatpush1.bf16.msra.mxu0 0
    %980 = vmatprep.subr.bf16.mxu0 0
    %981 = vmatpush1.bf16.msra.mxu0 0
    %982 = vmatprep.subr.bf16.mxu0 0
    %983 = vmatpush1.bf16.msra.mxu0 0
    %984 = vmatprep.mubr.bf16.mxu0 0
    %985 = vmatmul.mubr.bf16.gmra.mrb[0].mxu0 %v950
    %v986 = vpop.f32.mrb[0].mxu0
    %v987 = vadd.f32 %v202, %v986
    %v988 = vpop.f32.mrb[0].mxu0
    %v989 = vpop.f32.mrb[0].mxu0
    %v990 = vpop.f32.mrb[0].mxu0
    %991 = vdwg.mxu0
    %992 = vmatprep.subr.bf16.mxu0 0
    %993 = vmatpush1.bf16.msra.mxu0 %v323
    %994 = vmatprep.subr.bf16.mxu0 0
    %995 = vmatpush1.bf16.msra.mxu0 %v324
    %996 = vmatprep.subr.bf16.mxu0 0
    %997 = vmatpush1.bf16.msra.mxu0 0
    %998 = vmatprep.subr.bf16.mxu0 0
    %999 = vmatpush1.bf16.msra.mxu0 0
    %1000 = vmatprep.subr.bf16.mxu0 0
    %1001 = vmatpush1.bf16.msra.mxu0 0
    %1002 = vmatprep.subr.bf16.mxu0 0
    %1003 = vmatpush1.bf16.msra.mxu0 0
    %1004 = vmatprep.subr.bf16.mxu0 0
    %1005 = vmatpush1.bf16.msra.mxu0 0
    %1006 = vmatprep.subr.bf16.mxu0 0
    %1007 = vmatpush1.bf16.msra.mxu0 0
    %1008 = vmatprep.subr.bf16.mxu0 0
    %1009 = vmatpush1.bf16.msra.mxu0 0
    %1010 = vmatprep.subr.bf16.mxu0 0
    %1011 = vmatpush1.bf16.msra.mxu0 0
    %1012 = vmatprep.subr.bf16.mxu0 0
    %1013 = vmatpush1.bf16.msra.mxu0 0
    %1014 = vmatprep.subr.bf16.mxu0 0
    %1015 = vmatpush1.bf16.msra.mxu0 0
    %1016 = vmatprep.subr.bf16.mxu0 0
    %1017 = vmatpush1.bf16.msra.mxu0 0
    %1018 = vmatprep.subr.bf16.mxu0 0
    %1019 = vmatpush1.bf16.msra.mxu0 0
    %1020 = vmatprep.subr.bf16.mxu0 0
    %1021 = vmatpush1.bf16.msra.mxu0 0
    %1022 = vmatprep.subr.bf16.mxu0 0
    %1023 = vmatpush1.bf16.msra.mxu0 0
    %1024 = vmatprep.mubr.bf16.mxu0 0
    %1025 = vmatmul.mubr.bf16.gmra.mrb[0].mxu0 %v762
    %v1026 = vpop.f32.mrb[0].mxu0
    %v1027 = vadd.f32 %v313, %v1026
    %v1028 = vpop.f32.mrb[0].mxu0
    %v1029 = vpop.f32.mrb[0].mxu0
    %v1030 = vpop.f32.mrb[0].mxu0
    %1031 = vdwg.mxu0
    %v1032 = vadd.f32 %v987, %v1027
    %v1033 = vxor.u32 %v1032, 2147483648
    %v1034 = vmul.f32 %v1033, 1.442695
    %v1035 = vpow.pop %v1034
    %v1036 = vadd.f32 %v1035, 1.0
    %v1037 = vrcp.pop %v1036
    %v1038 = vmul.f32 1.0, %v1037
    %1040 = vrot.lane.b32.xlu0 %v1027, 64
    %v1041 = vpop.permute.xlu0 %1040
    %v1043 = vmul.f32 %v1038, %v1041
    %1045 = vrot.lane.b32.xlu0 %v1043, 64
    %v1046 = vpop.permute.xlu0 %1045
    %v1048 = vadd.f32 %v987, %v1046
    %v1049 = vtanh.pop %v1048
    %v1050 = vsub.f32 1.0, %v1038
    %1052 = vrot.lane.b32.xlu0 %v1049, 96
    %v1053 = vpop.permute.xlu0 %1052
    %v1055 = vmul.f32 %v1050, %v1053
    %v1056 = vmul.f32 %v1038, %v756
    %v1057 = vadd.f32 %v1055, %v1056
    %v1058 = vpack.c.bf16 %v1057, %v1057
    %1060 = vrot.lane.b32.xlu0 %v1058, 96
    %v1061 = vpop.permute.xlu0 %1060
    %v1063 = vsel %vm327, %v1061, 0
    %1065 = vmatprep.subr.bf16.mxu0 0
    %1066 = vmatpush1.bf16.msra.mxu0 %v419
    %1067 = vmatprep.subr.bf16.mxu0 0
    %1068 = vmatpush1.bf16.msra.mxu0 %v420
    %1069 = vmatprep.subr.bf16.mxu0 0
    %1070 = vmatpush1.bf16.msra.mxu0 0
    %1071 = vmatprep.subr.bf16.mxu0 0
    %1072 = vmatpush1.bf16.msra.mxu0 0
    %1073 = vmatprep.subr.bf16.mxu0 0
    %1074 = vmatpush1.bf16.msra.mxu0 0
    %1075 = vmatprep.subr.bf16.mxu0 0
    %1076 = vmatpush1.bf16.msra.mxu0 0
    %1077 = vmatprep.subr.bf16.mxu0 0
    %1078 = vmatpush1.bf16.msra.mxu0 0
    %1079 = vmatprep.subr.bf16.mxu0 0
    %1080 = vmatpush1.bf16.msra.mxu0 0
    %1081 = vmatprep.subr.bf16.mxu0 0
    %1082 = vmatpush1.bf16.msra.mxu0 0
    %1083 = vmatprep.subr.bf16.mxu0 0
    %1084 = vmatpush1.bf16.msra.mxu0 0
    %1085 = vmatprep.subr.bf16.mxu0 0
    %1086 = vmatpush1.bf16.msra.mxu0 0
    %1087 = vmatprep.subr.bf16.mxu0 0
    %1088 = vmatpush1.bf16.msra.mxu0 0
    %1089 = vmatprep.subr.bf16.mxu0 0
    %1090 = vmatpush1.bf16.msra.mxu0 0
    %1091 = vmatprep.subr.bf16.mxu0 0
    %1092 = vmatpush1.bf16.msra.mxu0 0
    %1093 = vmatprep.subr.bf16.mxu0 0
    %1094 = vmatpush1.bf16.msra.mxu0 0
    %1095 = vmatprep.subr.bf16.mxu0 0
    %1096 = vmatpush1.bf16.msra.mxu0 0
    %1097 = vmatprep.mubr.bf16.mxu0 0
    %1098 = vmatmul.mubr.bf16.gmra.mrb[0].mxu0 %v1063
    %v1099 = vpop.f32.mrb[0].mxu0
    %v1100 = vadd.f32 %v406, %v1099
    %v1101 = vpop.f32.mrb[0].mxu0
    %v1102 = vpop.f32.mrb[0].mxu0
    %v1103 = vpop.f32.mrb[0].mxu0
    %1104 = vdwg.mxu0
    %1105 = vmatprep.subr.bf16.mxu0 0
    %1106 = vmatpush1.bf16.msra.mxu0 %v480
    %1107 = vmatprep.subr.bf16.mxu0 0
    %1108 = vmatpush1.bf16.msra.mxu0 %v481
    %1109 = vmatprep.subr.bf16.mxu0 0
    %1110 = vmatpush1.bf16.msra.mxu0 0
    %1111 = vmatprep.subr.bf16.mxu0 0
    %1112 = vmatpush1.bf16.msra.mxu0 0
    %1113 = vmatprep.subr.bf16.mxu0 0
    %1114 = vmatpush1.bf16.msra.mxu0 0
    %1115 = vmatprep.subr.bf16.mxu0 0
    %1116 = vmatpush1.bf16.msra.mxu0 0
    %1117 = vmatprep.subr.bf16.mxu0 0
    %1118 = vmatpush1.bf16.msra.mxu0 0
    %1119 = vmatprep.subr.bf16.mxu0 0
    %1120 = vmatpush1.bf16.msra.mxu0 0
    %1121 = vmatprep.subr.bf16.mxu0 0
    %1122 = vmatpush1.bf16.msra.mxu0 0
    %1123 = vmatprep.subr.bf16.mxu0 0
    %1124 = vmatpush1.bf16.msra.mxu0 0
    %1125 = vmatprep.subr.bf16.mxu0 0
    %1126 = vmatpush1.bf16.msra.mxu0 0
    %1127 = vmatprep.subr.bf16.mxu0 0
    %1128 = vmatpush1.bf16.msra.mxu0 0
    %1129 = vmatprep.subr.bf16.mxu0 0
    %1130 = vmatpush1.bf16.msra.mxu0 0
    %1131 = vmatprep.subr.bf16.mxu0 0
    %1132 = vmatpush1.bf16.msra.mxu0 0
    %1133 = vmatprep.subr.bf16.mxu0 0
    %1134 = vmatpush1.bf16.msra.mxu0 0
    %1135 = vmatprep.subr.bf16.mxu0 0
    %1136 = vmatpush1.bf16.msra.mxu0 0
    %1137 = vmatprep.mubr.bf16.mxu0 0
    %1138 = vmatmul.mubr.bf16.gmra.mrb[0].mxu0 %v875
    %v1139 = vpop.f32.mrb[0].mxu0
    %v1140 = vadd.f32 %v470, %v1139
    %v1141 = vpop.f32.mrb[0].mxu0
    %v1142 = vpop.f32.mrb[0].mxu0
    %v1143 = vpop.f32.mrb[0].mxu0
    %1144 = vdwg.mxu0
    %v1145 = vadd.f32 %v1100, %v1140
    %v1146 = vxor.u32 %v1145, 2147483648
    %v1147 = vmul.f32 %v1146, 1.442695
    %v1148 = vpow.pop %v1147
    %v1149 = vadd.f32 %v1148, 1.0
    %v1150 = vrcp.pop %v1149
    %v1151 = vmul.f32 1.0, %v1150
    %1153 = vrot.lane.b32.xlu0 %v1140, 64
    %v1154 = vpop.permute.xlu0 %1153
    %v1156 = vmul.f32 %v1151, %v1154
    %1158 = vrot.lane.b32.xlu0 %v1156, 64
    %v1159 = vpop.permute.xlu0 %1158
    %v1161 = vadd.f32 %v1100, %v1159
    %v1162 = vtanh.pop %v1161
    %v1163 = vsub.f32 1.0, %v1151
    %1165 = vrot.lane.b32.xlu0 %v1162, 96
    %v1166 = vpop.permute.xlu0 %1165
    %v1168 = vmul.f32 %v1163, %v1166
    %v1169 = vmul.f32 %v1151, %v869
    %v1170 = vadd.f32 %v1168, %v1169
    %v1171 = vpack.c.bf16 %v1170, %v1170
    %1173 = vrot.lane.b32.xlu0 %v1171, 96
    %v1174 = vpop.permute.xlu0 %1173
    %v1176 = vsel %vm327, %v1174, 0
    %1178 = vmatprep.subr.bf16.mxu0 0
    %1179 = vmatpush1.bf16.msra.mxu0 %v568
    %1180 = vmatprep.subr.bf16.mxu0 0
    %1181 = vmatpush1.bf16.msra.mxu0 %v569
    %1182 = vmatprep.subr.bf16.mxu0 0
    %1183 = vmatpush1.bf16.msra.mxu0 0
    %1184 = vmatprep.subr.bf16.mxu0 0
    %1185 = vmatpush1.bf16.msra.mxu0 0
    %1186 = vmatprep.subr.bf16.mxu0 0
    %1187 = vmatpush1.bf16.msra.mxu0 0
    %1188 = vmatprep.subr.bf16.mxu0 0
    %1189 = vmatpush1.bf16.msra.mxu0 0
    %1190 = vmatprep.subr.bf16.mxu0 0
    %1191 = vmatpush1.bf16.msra.mxu0 0
    %1192 = vmatprep.subr.bf16.mxu0 0
    %1193 = vmatpush1.bf16.msra.mxu0 0
    %1194 = vmatprep.subr.bf16.mxu0 0
    %1195 = vmatpush1.bf16.msra.mxu0 0
    %1196 = vmatprep.subr.bf16.mxu0 0
    %1197 = vmatpush1.bf16.msra.mxu0 0
    %1198 = vmatprep.subr.bf16.mxu0 0
    %1199 = vmatpush1.bf16.msra.mxu0 0
    %1200 = vmatprep.subr.bf16.mxu0 0
    %1201 = vmatpush1.bf16.msra.mxu0 0
    %1202 = vmatprep.subr.bf16.mxu0 0
    %1203 = vmatpush1.bf16.msra.mxu0 0
    %1204 = vmatprep.subr.bf16.mxu0 0
    %1205 = vmatpush1.bf16.msra.mxu0 0
    %1206 = vmatprep.subr.bf16.mxu0 0
    %1207 = vmatpush1.bf16.msra.mxu0 0
    %1208 = vmatprep.subr.bf16.mxu0 0
    %1209 = vmatpush1.bf16.msra.mxu0 0
    %1210 = vmatprep.mubr.bf16.mxu0 0
    %1211 = vmatmul.mubr.bf16.gmra.mrb[0].mxu0 %v1176
    %v1212 = vpop.f32.mrb[0].mxu0
    %v1213 = vadd.f32 %v555, %v1212
    %v1214 = vpop.f32.mrb[0].mxu0
    %v1215 = vpop.f32.mrb[0].mxu0
    %v1216 = vpop.f32.mrb[0].mxu0
    %1217 = vdwg.mxu0
    %v1218 = vsel %vm615, %v1213, -inf
    %1219 = vmax.xlane.f32.xlu0 %v1218
    %v1220 = vpop.xlane.xlu0 %1219
    %v1221 = vsub.f32 %v1213, %v1220
    %v1222 = vmul.f32 %v1221, 1.442695
    %v1223 = vpow.pop %v1222
    %v1224 = vsel %vm615, %v1223, 0.0
    %1225 = vadd.xlane.f32.xlu0 %v1224
    %v1226 = vpop.xlane.xlu0 %1225
    %v1227 = vlog2.pop %v1226
    %v1228 = vmul.f32 %v1227, 0.6931472
    %v1229 = vsub.f32 %v1221, %v1228
    %vm1230 = vcmp.eq.f32.partialorder %v1221, 0.0
    %v1231 = vsel %vm1230, %v149, 16
    %v1232 = vsel %vm615, %v1231, 2147483647
    %v1233 = vand.u32 %v1232, 65535
    %v1234 = vshra.s32 %v1232, 16
    %v1235 = vcvt.s32.f32 %v1233
    %v1236 = vcvt.s32.f32 %v1234
    %1237 = vmin.xlane.f32.xlu0 %v1236
    %v1238 = vpop.xlane.xlu0 %1237
    %vm1239 = vcmp.eq.f32.partialorder %v1236, %v1238
    %v1240 = vsel %vm1239, %v1235, inf
    %1241 = vmin.xlane.f32.xlu0 %v1240
    %v1242 = vpop.xlane.xlu0 %1241
    %v1243 = vcvt.f32.s32 %v1242
    %v1244 = vcvt.f32.s32 %v1238
    %v1245 = vshll.u32 %v1244, 16
    %v1246 = vadd.s32 %v1245, %v1243
    %vm1247 = vcmp.eq.s32.totalorder %v149, %v1246
    %v1248 = vsel %vm1247, 1.0, 0.0
    %v1249 = vpack.c.bf16 %v1248, %v1248
    %v1251 = vsel %vm264, %v1249, 0
    %1253 = vmatprep.subr.bf16.mxu0 0
    %1254 = vmatpush1.bf16.msra.mxu0 %v262
    %1255 = vmatprep.subr.bf16.mxu0 0
    %1256 = vmatpush1.bf16.msra.mxu0 0
    %1257 = vmatprep.subr.bf16.mxu0 0
    %1258 = vmatpush1.bf16.msra.mxu0 0
    %1259 = vmatprep.subr.bf16.mxu0 0
    %1260 = vmatpush1.bf16.msra.mxu0 0
    %1261 = vmatprep.subr.bf16.mxu0 0
    %1262 = vmatpush1.bf16.msra.mxu0 0
    %1263 = vmatprep.subr.bf16.mxu0 0
    %1264 = vmatpush1.bf16.msra.mxu0 0
    %1265 = vmatprep.subr.bf16.mxu0 0
    %1266 = vmatpush1.bf16.msra.mxu0 0
    %1267 = vmatprep.subr.bf16.mxu0 0
    %1268 = vmatpush1.bf16.msra.mxu0 0
    %1269 = vmatprep.subr.bf16.mxu0 0
    %1270 = vmatpush1.bf16.msra.mxu0 0
    %1271 = vmatprep.subr.bf16.mxu0 0
    %1272 = vmatpush1.bf16.msra.mxu0 0
    %1273 = vmatprep.subr.bf16.mxu0 0
    %1274 = vmatpush1.bf16.msra.mxu0 0
    %1275 = vmatprep.subr.bf16.mxu0 0
    %1276 = vmatpush1.bf16.msra.mxu0 0
    %1277 = vmatprep.subr.bf16.mxu0 0
    %1278 = vmatpush1.bf16.msra.mxu0 0
    %1279 = vmatprep.subr.bf16.mxu0 0
    %1280 = vmatpush1.bf16.msra.mxu0 0
    %1281 = vmatprep.subr.bf16.mxu0 0
    %1282 = vmatpush1.bf16.msra.mxu0 0
    %1283 = vmatprep.subr.bf16.mxu0 0
    %1284 = vmatpush1.bf16.msra.mxu0 0
    %1285 = vmatprep.mubr.bf16.mxu0 0
    %1286 = vmatmul.mubr.bf16.gmra.mrb[0].mxu0 %v1251
    %v1287 = vpop.f32.mrb[0].mxu0
    %v1288 = vadd.f32 %v202, %v1287
    %v1289 = vpop.f32.mrb[0].mxu0
    %v1290 = vpop.f32.mrb[0].mxu0
    %v1291 = vpop.f32.mrb[0].mxu0
    %1292 = vdwg.mxu0
    %1293 = vmatprep.subr.bf16.mxu0 0
    %1294 = vmatpush1.bf16.msra.mxu0 %v323
    %1295 = vmatprep.subr.bf16.mxu0 0
    %1296 = vmatpush1.bf16.msra.mxu0 %v324
    %1297 = vmatprep.subr.bf16.mxu0 0
    %1298 = vmatpush1.bf16.msra.mxu0 0
    %1299 = vmatprep.subr.bf16.mxu0 0
    %1300 = vmatpush1.bf16.msra.mxu0 0
    %1301 = vmatprep.subr.bf16.mxu0 0
    %1302 = vmatpush1.bf16.msra.mxu0 0
    %1303 = vmatprep.subr.bf16.mxu0 0
    %1304 = vmatpush1.bf16.msra.mxu0 0
    %1305 = vmatprep.subr.bf16.mxu0 0
    %1306 = vmatpush1.bf16.msra.mxu0 0
    %1307 = vmatprep.subr.bf16.mxu0 0
    %1308 = vmatpush1.bf16.msra.mxu0 0
    %1309 = vmatprep.subr.bf16.mxu0 0
    %1310 = vmatpush1.bf16.msra.mxu0 0
    %1311 = vmatprep.subr.bf16.mxu0 0
    %1312 = vmatpush1.bf16.msra.mxu0 0
    %1313 = vmatprep.subr.bf16.mxu0 0
    %1314 = vmatpush1.bf16.msra.mxu0 0
    %1315 = vmatprep.subr.bf16.mxu0 0
    %1316 = vmatpush1.bf16.msra.mxu0 0
    %1317 = vmatprep.subr.bf16.mxu0 0
    %1318 = vmatpush1.bf16.msra.mxu0 0
    %1319 = vmatprep.subr.bf16.mxu0 0
    %1320 = vmatpush1.bf16.msra.mxu0 0
    %1321 = vmatprep.subr.bf16.mxu0 0
    %1322 = vmatpush1.bf16.msra.mxu0 0
    %1323 = vmatprep.subr.bf16.mxu0 0
    %1324 = vmatpush1.bf16.msra.mxu0 0
    %1325 = vmatprep.mubr.bf16.mxu0 0
    %1326 = vmatmul.mubr.bf16.gmra.mrb[0].mxu0 %v1063
    %v1327 = vpop.f32.mrb[0].mxu0
    %v1328 = vadd.f32 %v313, %v1327
    %v1329 = vpop.f32.mrb[0].mxu0
    %v1330 = vpop.f32.mrb[0].mxu0
    %v1331 = vpop.f32.mrb[0].mxu0
    %1332 = vdwg.mxu0
    %v1333 = vadd.f32 %v1288, %v1328
    %v1334 = vxor.u32 %v1333, 2147483648
    %v1335 = vmul.f32 %v1334, 1.442695
    %v1336 = vpow.pop %v1335
    %v1337 = vadd.f32 %v1336, 1.0
    %v1338 = vrcp.pop %v1337
    %v1339 = vmul.f32 1.0, %v1338
    %1341 = vrot.lane.b32.xlu0 %v1328, 64
    %v1342 = vpop.permute.xlu0 %1341
    %v1344 = vmul.f32 %v1339, %v1342
    %1346 = vrot.lane.b32.xlu0 %v1344, 64
    %v1347 = vpop.permute.xlu0 %1346
    %v1349 = vadd.f32 %v1288, %v1347
    %v1350 = vtanh.pop %v1349
    %v1351 = vsub.f32 1.0, %v1339
    %1353 = vrot.lane.b32.xlu0 %v1350, 96
    %v1354 = vpop.permute.xlu0 %1353
    %v1356 = vmul.f32 %v1351, %v1354
    %v1357 = vmul.f32 %v1339, %v1057
    %v1358 = vadd.f32 %v1356, %v1357
    %v1359 = vpack.c.bf16 %v1358, %v1358
    %1361 = vrot.lane.b32.xlu0 %v1359, 96
    %v1362 = vpop.permute.xlu0 %1361
    %v1364 = vsel %vm327, %v1362, 0
    %1366 = vmatprep.subr.bf16.mxu0 0
    %1367 = vmatpush1.bf16.msra.mxu0 %v419
    %1368 = vmatprep.subr.bf16.mxu0 0
    %1369 = vmatpush1.bf16.msra.mxu0 %v420
    %1370 = vmatprep.subr.bf16.mxu0 0
    %1371 = vmatpush1.bf16.msra.mxu0 0
    %1372 = vmatprep.subr.bf16.mxu0 0
    %1373 = vmatpush1.bf16.msra.mxu0 0
    %1374 = vmatprep.subr.bf16.mxu0 0
    %1375 = vmatpush1.bf16.msra.mxu0 0
    %1376 = vmatprep.subr.bf16.mxu0 0
    %1377 = vmatpush1.bf16.msra.mxu0 0
    %1378 = vmatprep.subr.bf16.mxu0 0
    %1379 = vmatpush1.bf16.msra.mxu0 0
    %1380 = vmatprep.subr.bf16.mxu0 0
    %1381 = vmatpush1.bf16.msra.mxu0 0
    %1382 = vmatprep.subr.bf16.mxu0 0
    %1383 = vmatpush1.bf16.msra.mxu0 0
    %1384 = vmatprep.subr.bf16.mxu0 0
    %1385 = vmatpush1.bf16.msra.mxu0 0
    %1386 = vmatprep.subr.bf16.mxu0 0
    %1387 = vmatpush1.bf16.msra.mxu0 0
    %1388 = vmatprep.subr.bf16.mxu0 0
    %1389 = vmatpush1.bf16.msra.mxu0 0
    %1390 = vmatprep.subr.bf16.mxu0 0
    %1391 = vmatpush1.bf16.msra.mxu0 0
    %1392 = vmatprep.subr.bf16.mxu0 0
    %1393 = vmatpush1.bf16.msra.mxu0 0
    %1394 = vmatprep.subr.bf16.mxu0 0
    %1395 = vmatpush1.bf16.msra.mxu0 0
    %1396 = vmatprep.subr.bf16.mxu0 0
    %1397 = vmatpush1.bf16.msra.mxu0 0
    %1398 = vmatprep.mubr.bf16.mxu0 0
    %1399 = vmatmul.mubr.bf16.gmra.mrb[0].mxu0 %v1364
    %v1400 = vpop.f32.mrb[0].mxu0
    %v1401 = vadd.f32 %v406, %v1400
    %v1402 = vpop.f32.mrb[0].mxu0
    %v1403 = vpop.f32.mrb[0].mxu0
    %v1404 = vpop.f32.mrb[0].mxu0
    %1405 = vdwg.mxu0
    %1406 = vmatprep.subr.bf16.mxu0 0
    %1407 = vmatpush1.bf16.msra.mxu0 %v480
    %1408 = vmatprep.subr.bf16.mxu0 0
    %1409 = vmatpush1.bf16.msra.mxu0 %v481
    %1410 = vmatprep.subr.bf16.mxu0 0
    %1411 = vmatpush1.bf16.msra.mxu0 0
    %1412 = vmatprep.subr.bf16.mxu0 0
    %1413 = vmatpush1.bf16.msra.mxu0 0
    %1414 = vmatprep.subr.bf16.mxu0 0
    %1415 = vmatpush1.bf16.msra.mxu0 0
    %1416 = vmatprep.subr.bf16.mxu0 0
    %1417 = vmatpush1.bf16.msra.mxu0 0
    %1418 = vmatprep.subr.bf16.mxu0 0
    %1419 = vmatpush1.bf16.msra.mxu0 0
    %1420 = vmatprep.subr.bf16.mxu0 0
    %1421 = vmatpush1.bf16.msra.mxu0 0
    %1422 = vmatprep.subr.bf16.mxu0 0
    %1423 = vmatpush1.bf16.msra.mxu0 0
    %1424 = vmatprep.subr.bf16.mxu0 0
    %1425 = vmatpush1.bf16.msra.mxu0 0
    %1426 = vmatprep.subr.bf16.mxu0 0
    %1427 = vmatpush1.bf16.msra.mxu0 0
    %1428 = vmatprep.subr.bf16.mxu0 0
    %1429 = vmatpush1.bf16.msra.mxu0 0
    %1430 = vmatprep.subr.bf16.mxu0 0
    %1431 = vmatpush1.bf16.msra.mxu0 0
    %1432 = vmatprep.subr.bf16.mxu0 0
    %1433 = vmatpush1.bf16.msra.mxu0 0
    %1434 = vmatprep.subr.bf16.mxu0 0
    %1435 = vmatpush1.bf16.msra.mxu0 0
    %1436 = vmatprep.subr.bf16.mxu0 0
    %1437 = vmatpush1.bf16.msra.mxu0 0
    %1438 = vmatprep.mubr.bf16.mxu0 0
    %1439 = vmatmul.mubr.bf16.gmra.mrb[0].mxu0 %v1176
    %v1440 = vpop.f32.mrb[0].mxu0
    %v1441 = vadd.f32 %v470, %v1440
    %v1442 = vpop.f32.mrb[0].mxu0
    %v1443 = vpop.f32.mrb[0].mxu0
    %v1444 = vpop.f32.mrb[0].mxu0
    %1445 = vdwg.mxu0
    %v1446 = vadd.f32 %v1401, %v1441
    %v1447 = vxor.u32 %v1446, 2147483648
    %v1448 = vmul.f32 %v1447, 1.442695
    %v1449 = vpow.pop %v1448
    %v1450 = vadd.f32 %v1449, 1.0
    %v1451 = vrcp.pop %v1450
    %v1452 = vmul.f32 1.0, %v1451
    %1454 = vrot.lane.b32.xlu0 %v1441, 64
    %v1455 = vpop.permute.xlu0 %1454
    %v1457 = vmul.f32 %v1452, %v1455
    %1459 = vrot.lane.b32.xlu0 %v1457, 64
    %v1460 = vpop.permute.xlu0 %1459
    %v1462 = vadd.f32 %v1401, %v1460
    %v1463 = vtanh.pop %v1462
    %v1464 = vsub.f32 1.0, %v1452
    %1466 = vrot.lane.b32.xlu0 %v1463, 96
    %v1467 = vpop.permute.xlu0 %1466
    %v1469 = vmul.f32 %v1464, %v1467
    %v1470 = vmul.f32 %v1452, %v1170
    %v1471 = vadd.f32 %v1469, %v1470
    %v1472 = vpack.c.bf16 %v1471, %v1471
    %1474 = vrot.lane.b32.xlu0 %v1472, 96
    %v1475 = vpop.permute.xlu0 %1474
    %v1477 = vsel %vm327, %v1475, 0
    %1479 = vmatprep.subr.bf16.mxu0 0
    %1480 = vmatpush1.bf16.msra.mxu0 %v568
    %1481 = vmatprep.subr.bf16.mxu0 0
    %1482 = vmatpush1.bf16.msra.mxu0 %v569
    %1483 = vmatprep.subr.bf16.mxu0 0
    %1484 = vmatpush1.bf16.msra.mxu0 0
    %1485 = vmatprep.subr.bf16.mxu0 0
    %1486 = vmatpush1.bf16.msra.mxu0 0
    %1487 = vmatprep.subr.bf16.mxu0 0
    %1488 = vmatpush1.bf16.msra.mxu0 0
    %1489 = vmatprep.subr.bf16.mxu0 0
    %1490 = vmatpush1.bf16.msra.mxu0 0
    %1491 = vmatprep.subr.bf16.mxu0 0
    %1492 = vmatpush1.bf16.msra.mxu0 0
    %1493 = vmatprep.subr.bf16.mxu0 0
    %1494 = vmatpush1.bf16.msra.mxu0 0
    %1495 = vmatprep.subr.bf16.mxu0 0
    %1496 = vmatpush1.bf16.msra.mxu0 0
    %1497 = vmatprep.subr.bf16.mxu0 0
    %1498 = vmatpush1.bf16.msra.mxu0 0
    %1499 = vmatprep.subr.bf16.mxu0 0
    %1500 = vmatpush1.bf16.msra.mxu0 0
    %1501 = vmatprep.subr.bf16.mxu0 0
    %1502 = vmatpush1.bf16.msra.mxu0 0
    %1503 = vmatprep.subr.bf16.mxu0 0
    %1504 = vmatpush1.bf16.msra.mxu0 0
    %1505 = vmatprep.subr.bf16.mxu0 0
    %1506 = vmatpush1.bf16.msra.mxu0 0
    %1507 = vmatprep.subr.bf16.mxu0 0
    %1508 = vmatpush1.bf16.msra.mxu0 0
    %1509 = vmatprep.subr.bf16.mxu0 0
    %1510 = vmatpush1.bf16.msra.mxu0 0
    %1511 = vmatprep.mubr.bf16.mxu0 0
    %1512 = vmatmul.mubr.bf16.gmra.mrb[0].mxu0 %v1477
    %v1513 = vpop.f32.mrb[0].mxu0
    %v1514 = vadd.f32 %v555, %v1513
    %v1515 = vpop.f32.mrb[0].mxu0
    %v1516 = vpop.f32.mrb[0].mxu0
    %v1517 = vpop.f32.mrb[0].mxu0
    %1518 = vdwg.mxu0
    %v1519 = vsel %vm615, %v1514, -inf
    %1520 = vmax.xlane.f32.xlu0 %v1519
    %v1521 = vpop.xlane.xlu0 %1520
    %v1522 = vsub.f32 %v1514, %v1521
    %v1523 = vmul.f32 %v1522, 1.442695
    %v1524 = vpow.pop %v1523
    %v1525 = vsel %vm615, %v1524, 0.0
    %1526 = vadd.xlane.f32.xlu0 %v1525
    %v1527 = vpop.xlane.xlu0 %1526
    %v1528 = vlog2.pop %v1527
    %v1529 = vmul.f32 %v1528, 0.6931472
    %v1530 = vsub.f32 %v1522, %v1529
    %vm1531 = vcmp.eq.f32.partialorder %v1522, 0.0
    %v1532 = vsel %vm1531, %v149, 16
    %v1533 = vsel %vm615, %v1532, 2147483647
    %v1534 = vand.u32 %v1533, 65535
    %v1535 = vshra.s32 %v1533, 16
    %v1536 = vcvt.s32.f32 %v1534
    %v1537 = vcvt.s32.f32 %v1535
    %1538 = vmin.xlane.f32.xlu0 %v1537
    %v1539 = vpop.xlane.xlu0 %1538
    %vm1540 = vcmp.eq.f32.partialorder %v1537, %v1539
    %v1541 = vsel %vm1540, %v1536, inf
    %1542 = vmin.xlane.f32.xlu0 %v1541
    %v1543 = vpop.xlane.xlu0 %1542
    %v1544 = vcvt.f32.s32 %v1543
    %v1545 = vcvt.f32.s32 %v1539
    %v1546 = vshll.u32 %v1545, 16
    %v1547 = vadd.s32 %v1546, %v1544
    %vm1548 = vcmp.eq.s32.totalorder %v149, %v1547
    %v1549 = vsel %vm1548, 1.0, 0.0
    %v1550 = vpack.c.bf16 %v1549, %v1549
    %v1552 = vsel %vm264, %v1550, 0
    %1554 = vmatprep.subr.bf16.mxu0 0
    %1555 = vmatpush1.bf16.msra.mxu0 %v262
    %1556 = vmatprep.subr.bf16.mxu0 0
    %1557 = vmatpush1.bf16.msra.mxu0 0
    %1558 = vmatprep.subr.bf16.mxu0 0
    %1559 = vmatpush1.bf16.msra.mxu0 0
    %1560 = vmatprep.subr.bf16.mxu0 0
    %1561 = vmatpush1.bf16.msra.mxu0 0
    %1562 = vmatprep.subr.bf16.mxu0 0
    %1563 = vmatpush1.bf16.msra.mxu0 0
    %1564 = vmatprep.subr.bf16.mxu0 0
    %1565 = vmatpush1.bf16.msra.mxu0 0
    %1566 = vmatprep.subr.bf16.mxu0 0
    %1567 = vmatpush1.bf16.msra.mxu0 0
    %1568 = vmatprep.subr.bf16.mxu0 0
    %1569 = vmatpush1.bf16.msra.mxu0 0
    %1570 = vmatprep.subr.bf16.mxu0 0
    %1571 = vmatpush1.bf16.msra.mxu0 0
    %1572 = vmatprep.subr.bf16.mxu0 0
    %1573 = vmatpush1.bf16.msra.mxu0 0
    %1574 = vmatprep.subr.bf16.mxu0 0
    %1575 = vmatpush1.bf16.msra.mxu0 0
    %1576 = vmatprep.subr.bf16.mxu0 0
    %1577 = vmatpush1.bf16.msra.mxu0 0
    %1578 = vmatprep.subr.bf16.mxu0 0
    %1579 = vmatpush1.bf16.msra.mxu0 0
    %1580 = vmatprep.subr.bf16.mxu0 0
    %1581 = vmatpush1.bf16.msra.mxu0 0
    %1582 = vmatprep.subr.bf16.mxu0 0
    %1583 = vmatpush1.bf16.msra.mxu0 0
    %1584 = vmatprep.subr.bf16.mxu0 0
    %1585 = vmatpush1.bf16.msra.mxu0 0
    %1586 = vmatprep.mubr.bf16.mxu0 0
    %1587 = vmatmul.mubr.bf16.gmra.mrb[0].mxu0 %v1552
    %v1588 = vpop.f32.mrb[0].mxu0
    %v1589 = vadd.f32 %v202, %v1588
    %v1590 = vpop.f32.mrb[0].mxu0
    %v1591 = vpop.f32.mrb[0].mxu0
    %v1592 = vpop.f32.mrb[0].mxu0
    %1593 = vdwg.mxu0
    %1594 = vmatprep.subr.bf16.mxu0 0
    %1595 = vmatpush1.bf16.msra.mxu0 %v323
    %1596 = vmatprep.subr.bf16.mxu0 0
    %1597 = vmatpush1.bf16.msra.mxu0 %v324
    %1598 = vmatprep.subr.bf16.mxu0 0
    %1599 = vmatpush1.bf16.msra.mxu0 0
    %1600 = vmatprep.subr.bf16.mxu0 0
    %1601 = vmatpush1.bf16.msra.mxu0 0
    %1602 = vmatprep.subr.bf16.mxu0 0
    %1603 = vmatpush1.bf16.msra.mxu0 0
    %1604 = vmatprep.subr.bf16.mxu0 0
    %1605 = vmatpush1.bf16.msra.mxu0 0
    %1606 = vmatprep.subr.bf16.mxu0 0
    %1607 = vmatpush1.bf16.msra.mxu0 0
    %1608 = vmatprep.subr.bf16.mxu0 0
    %1609 = vmatpush1.bf16.msra.mxu0 0
    %1610 = vmatprep.subr.bf16.mxu0 0
    %1611 = vmatpush1.bf16.msra.mxu0 0
    %1612 = vmatprep.subr.bf16.mxu0 0
    %1613 = vmatpush1.bf16.msra.mxu0 0
    %1614 = vmatprep.subr.bf16.mxu0 0
    %1615 = vmatpush1.bf16.msra.mxu0 0
    %1616 = vmatprep.subr.bf16.mxu0 0
    %1617 = vmatpush1.bf16.msra.mxu0 0
    %1618 = vmatprep.subr.bf16.mxu0 0
    %1619 = vmatpush1.bf16.msra.mxu0 0
    %1620 = vmatprep.subr.bf16.mxu0 0
    %1621 = vmatpush1.bf16.msra.mxu0 0
    %1622 = vmatprep.subr.bf16.mxu0 0
    %1623 = vmatpush1.bf16.msra.mxu0 0
    %1624 = vmatprep.subr.bf16.mxu0 0
    %1625 = vmatpush1.bf16.msra.mxu0 0
    %1626 = vmatprep.mubr.bf16.mxu0 0
    %1627 = vmatmul.mubr.bf16.gmra.mrb[0].mxu0 %v1364
    %v1628 = vpop.f32.mrb[0].mxu0
    %v1629 = vadd.f32 %v313, %v1628
    %v1630 = vpop.f32.mrb[0].mxu0
    %v1631 = vpop.f32.mrb[0].mxu0
    %v1632 = vpop.f32.mrb[0].mxu0
    %1633 = vdwg.mxu0
    %v1634 = vadd.f32 %v1589, %v1629
    %v1635 = vxor.u32 %v1634, 2147483648
    %v1636 = vmul.f32 %v1635, 1.442695
    %v1637 = vpow.pop %v1636
    %v1638 = vadd.f32 %v1637, 1.0
    %v1639 = vrcp.pop %v1638
    %v1640 = vmul.f32 1.0, %v1639
    %1642 = vrot.lane.b32.xlu0 %v1629, 64
    %v1643 = vpop.permute.xlu0 %1642
    %v1645 = vmul.f32 %v1640, %v1643
    %1647 = vrot.lane.b32.xlu0 %v1645, 64
    %v1648 = vpop.permute.xlu0 %1647
    %v1650 = vadd.f32 %v1589, %v1648
    %v1651 = vtanh.pop %v1650
    %v1652 = vsub.f32 1.0, %v1640
    %1654 = vrot.lane.b32.xlu0 %v1651, 96
    %v1655 = vpop.permute.xlu0 %1654
    %v1657 = vmul.f32 %v1652, %v1655
    %v1658 = vmul.f32 %v1640, %v1358
    %v1659 = vadd.f32 %v1657, %v1658
    %v1660 = vpack.c.bf16 %v1659, %v1659
    %1662 = vrot.lane.b32.xlu0 %v1660, 96
    %v1663 = vpop.permute.xlu0 %1662
    %v1665 = vsel %vm327, %v1663, 0
    %1667 = vmatprep.subr.bf16.mxu0 0
    %1668 = vmatpush1.bf16.msra.mxu0 %v419
    %1669 = vmatprep.subr.bf16.mxu0 0
    %1670 = vmatpush1.bf16.msra.mxu0 %v420
    %1671 = vmatprep.subr.bf16.mxu0 0
    %1672 = vmatpush1.bf16.msra.mxu0 0
    %1673 = vmatprep.subr.bf16.mxu0 0
    %1674 = vmatpush1.bf16.msra.mxu0 0
    %1675 = vmatprep.subr.bf16.mxu0 0
    %1676 = vmatpush1.bf16.msra.mxu0 0
    %1677 = vmatprep.subr.bf16.mxu0 0
    %1678 = vmatpush1.bf16.msra.mxu0 0
    %1679 = vmatprep.subr.bf16.mxu0 0
    %1680 = vmatpush1.bf16.msra.mxu0 0
    %1681 = vmatprep.subr.bf16.mxu0 0
    %1682 = vmatpush1.bf16.msra.mxu0 0
    %1683 = vmatprep.subr.bf16.mxu0 0
    %1684 = vmatpush1.bf16.msra.mxu0 0
    %1685 = vmatprep.subr.bf16.mxu0 0
    %1686 = vmatpush1.bf16.msra.mxu0 0
    %1687 = vmatprep.subr.bf16.mxu0 0
    %1688 = vmatpush1.bf16.msra.mxu0 0
    %1689 = vmatprep.subr.bf16.mxu0 0
    %1690 = vmatpush1.bf16.msra.mxu0 0
    %1691 = vmatprep.subr.bf16.mxu0 0
    %1692 = vmatpush1.bf16.msra.mxu0 0
    %1693 = vmatprep.subr.bf16.mxu0 0
    %1694 = vmatpush1.bf16.msra.mxu0 0
    %1695 = vmatprep.subr.bf16.mxu0 0
    %1696 = vmatpush1.bf16.msra.mxu0 0
    %1697 = vmatprep.subr.bf16.mxu0 0
    %1698 = vmatpush1.bf16.msra.mxu0 0
    %1699 = vmatprep.mubr.bf16.mxu0 0
    %1700 = vmatmul.mubr.bf16.gmra.mrb[0].mxu0 %v1665
    %v1701 = vpop.f32.mrb[0].mxu0
    %v1702 = vadd.f32 %v406, %v1701
    %v1703 = vpop.f32.mrb[0].mxu0
    %v1704 = vpop.f32.mrb[0].mxu0
    %v1705 = vpop.f32.mrb[0].mxu0
    %1706 = vdwg.mxu0
    %1707 = vmatprep.subr.bf16.mxu0 0
    %1708 = vmatpush1.bf16.msra.mxu0 %v480
    %1709 = vmatprep.subr.bf16.mxu0 0
    %1710 = vmatpush1.bf16.msra.mxu0 %v481
    %1711 = vmatprep.subr.bf16.mxu0 0
    %1712 = vmatpush1.bf16.msra.mxu0 0
    %1713 = vmatprep.subr.bf16.mxu0 0
    %1714 = vmatpush1.bf16.msra.mxu0 0
    %1715 = vmatprep.subr.bf16.mxu0 0
    %1716 = vmatpush1.bf16.msra.mxu0 0
    %1717 = vmatprep.subr.bf16.mxu0 0
    %1718 = vmatpush1.bf16.msra.mxu0 0
    %1719 = vmatprep.subr.bf16.mxu0 0
    %1720 = vmatpush1.bf16.msra.mxu0 0
    %1721 = vmatprep.subr.bf16.mxu0 0
    %1722 = vmatpush1.bf16.msra.mxu0 0
    %1723 = vmatprep.subr.bf16.mxu0 0
    %1724 = vmatpush1.bf16.msra.mxu0 0
    %1725 = vmatprep.subr.bf16.mxu0 0
    %1726 = vmatpush1.bf16.msra.mxu0 0
    %1727 = vmatprep.subr.bf16.mxu0 0
    %1728 = vmatpush1.bf16.msra.mxu0 0
    %1729 = vmatprep.subr.bf16.mxu0 0
    %1730 = vmatpush1.bf16.msra.mxu0 0
    %1731 = vmatprep.subr.bf16.mxu0 0
    %1732 = vmatpush1.bf16.msra.mxu0 0
    %1733 = vmatprep.subr.bf16.mxu0 0
    %1734 = vmatpush1.bf16.msra.mxu0 0
    %1735 = vmatprep.subr.bf16.mxu0 0
    %1736 = vmatpush1.bf16.msra.mxu0 0
    %1737 = vmatprep.subr.bf16.mxu0 0
    %1738 = vmatpush1.bf16.msra.mxu0 0
    %1739 = vmatprep.mubr.bf16.mxu0 0
    %1740 = vmatmul.mubr.bf16.gmra.mrb[0].mxu0 %v1477
    %v1741 = vpop.f32.mrb[0].mxu0
    %v1742 = vadd.f32 %v470, %v1741
    %v1743 = vpop.f32.mrb[0].mxu0
    %v1744 = vpop.f32.mrb[0].mxu0
    %v1745 = vpop.f32.mrb[0].mxu0
    %1746 = vdwg.mxu0
    %v1747 = vadd.f32 %v1702, %v1742
    %v1748 = vxor.u32 %v1747, 2147483648
    %v1749 = vmul.f32 %v1748, 1.442695
    %v1750 = vpow.pop %v1749
    %v1751 = vadd.f32 %v1750, 1.0
    %v1752 = vrcp.pop %v1751
    %v1753 = vmul.f32 1.0, %v1752
    %1755 = vrot.lane.b32.xlu0 %v1742, 64
    %v1756 = vpop.permute.xlu0 %1755
    %v1758 = vmul.f32 %v1753, %v1756
    %1760 = vrot.lane.b32.xlu0 %v1758, 64
    %v1761 = vpop.permute.xlu0 %1760
    %v1763 = vadd.f32 %v1702, %v1761
    %v1764 = vtanh.pop %v1763
    %v1765 = vsub.f32 1.0, %v1753
    %1767 = vrot.lane.b32.xlu0 %v1764, 96
    %v1768 = vpop.permute.xlu0 %1767
    %v1770 = vmul.f32 %v1765, %v1768
    %v1771 = vmul.f32 %v1753, %v1471
    %v1772 = vadd.f32 %v1770, %v1771
    %v1773 = vpack.c.bf16 %v1772, %v1772
    %1775 = vrot.lane.b32.xlu0 %v1773, 96
    %v1776 = vpop.permute.xlu0 %1775
    %v1778 = vsel %vm327, %v1776, 0
    %1780 = vmatprep.subr.bf16.mxu0 0
    %1781 = vmatpush1.bf16.msra.mxu0 %v568
    %1782 = vmatprep.subr.bf16.mxu0 0
    %1783 = vmatpush1.bf16.msra.mxu0 %v569
    %1784 = vmatprep.subr.bf16.mxu0 0
    %1785 = vmatpush1.bf16.msra.mxu0 0
    %1786 = vmatprep.subr.bf16.mxu0 0
    %1787 = vmatpush1.bf16.msra.mxu0 0
    %1788 = vmatprep.subr.bf16.mxu0 0
    %1789 = vmatpush1.bf16.msra.mxu0 0
    %1790 = vmatprep.subr.bf16.mxu0 0
    %1791 = vmatpush1.bf16.msra.mxu0 0
    %1792 = vmatprep.subr.bf16.mxu0 0
    %1793 = vmatpush1.bf16.msra.mxu0 0
    %1794 = vmatprep.subr.bf16.mxu0 0
    %1795 = vmatpush1.bf16.msra.mxu0 0
    %1796 = vmatprep.subr.bf16.mxu0 0
    %1797 = vmatpush1.bf16.msra.mxu0 0
    %1798 = vmatprep.subr.bf16.mxu0 0
    %1799 = vmatpush1.bf16.msra.mxu0 0
    %1800 = vmatprep.subr.bf16.mxu0 0
    %1801 = vmatpush1.bf16.msra.mxu0 0
    %1802 = vmatprep.subr.bf16.mxu0 0
    %1803 = vmatpush1.bf16.msra.mxu0 0
    %1804 = vmatprep.subr.bf16.mxu0 0
    %1805 = vmatpush1.bf16.msra.mxu0 0
    %1806 = vmatprep.subr.bf16.mxu0 0
    %1807 = vmatpush1.bf16.msra.mxu0 0
    %1808 = vmatprep.subr.bf16.mxu0 0
    %1809 = vmatpush1.bf16.msra.mxu0 0
    %1810 = vmatprep.subr.bf16.mxu0 0
    %1811 = vmatpush1.bf16.msra.mxu0 0
    %1812 = vmatprep.mubr.bf16.mxu0 0
    %1813 = vmatmul.mubr.bf16.gmra.mrb[0].mxu0 %v1778
    %v1814 = vpop.f32.mrb[0].mxu0
    %v1815 = vadd.f32 %v555, %v1814
    %v1816 = vpop.f32.mrb[0].mxu0
    %v1817 = vpop.f32.mrb[0].mxu0
    %v1818 = vpop.f32.mrb[0].mxu0
    %1819 = vdwg.mxu0
    %v1820 = vsel %vm615, %v1815, -inf
    %1821 = vmax.xlane.f32.xlu0 %v1820
    %v1822 = vpop.xlane.xlu0 %1821
    %v1823 = vsub.f32 %v1815, %v1822
    %v1824 = vmul.f32 %v1823, 1.442695
    %v1825 = vpow.pop %v1824
    %v1826 = vsel %vm615, %v1825, 0.0
    %1827 = vadd.xlane.f32.xlu0 %v1826
    %v1828 = vpop.xlane.xlu0 %1827
    %v1829 = vlog2.pop %v1828
    %v1830 = vmul.f32 %v1829, 0.6931472
    %v1831 = vsub.f32 %v1823, %v1830
    %vm1832 = vcmp.eq.f32.partialorder %v1823, 0.0
    %v1833 = vsel %vm1832, %v149, 16
    %v1834 = vsel %vm615, %v1833, 2147483647
    %v1835 = vand.u32 %v1834, 65535
    %v1836 = vshra.s32 %v1834, 16
    %v1837 = vcvt.s32.f32 %v1835
    %v1838 = vcvt.s32.f32 %v1836
    %1839 = vmin.xlane.f32.xlu0 %v1838
    %v1840 = vpop.xlane.xlu0 %1839
    %vm1841 = vcmp.eq.f32.partialorder %v1838, %v1840
    %v1842 = vsel %vm1841, %v1837, inf
    %1843 = vmin.xlane.f32.xlu0 %v1842
    %v1844 = vpop.xlane.xlu0 %1843
    %v1845 = vcvt.f32.s32 %v1844
    %v1846 = vcvt.f32.s32 %v1840
    %v1847 = vshll.u32 %v1846, 16
    %v1848 = vadd.s32 %v1847, %v1845
    %vm1849 = vcmp.eq.s32.totalorder %v149, %v1848
    %v1850 = vsel %vm1849, 1.0, 0.0
    %v1851 = vpack.c.bf16 %v1850, %v1850
    %v1853 = vsel %vm264, %v1851, 0
    %1855 = vmatprep.subr.bf16.mxu0 0
    %1856 = vmatpush1.bf16.msra.mxu0 %v262
    %1857 = vmatprep.subr.bf16.mxu0 0
    %1858 = vmatpush1.bf16.msra.mxu0 0
    %1859 = vmatprep.subr.bf16.mxu0 0
    %1860 = vmatpush1.bf16.msra.mxu0 0
    %1861 = vmatprep.subr.bf16.mxu0 0
    %1862 = vmatpush1.bf16.msra.mxu0 0
    %1863 = vmatprep.subr.bf16.mxu0 0
    %1864 = vmatpush1.bf16.msra.mxu0 0
    %1865 = vmatprep.subr.bf16.mxu0 0
    %1866 = vmatpush1.bf16.msra.mxu0 0
    %1867 = vmatprep.subr.bf16.mxu0 0
    %1868 = vmatpush1.bf16.msra.mxu0 0
    %1869 = vmatprep.subr.bf16.mxu0 0
    %1870 = vmatpush1.bf16.msra.mxu0 0
    %1871 = vmatprep.subr.bf16.mxu0 0
    %1872 = vmatpush1.bf16.msra.mxu0 0
    %1873 = vmatprep.subr.bf16.mxu0 0
    %1874 = vmatpush1.bf16.msra.mxu0 0
    %1875 = vmatprep.subr.bf16.mxu0 0
    %1876 = vmatpush1.bf16.msra.mxu0 0
    %1877 = vmatprep.subr.bf16.mxu0 0
    %1878 = vmatpush1.bf16.msra.mxu0 0
    %1879 = vmatprep.subr.bf16.mxu0 0
    %1880 = vmatpush1.bf16.msra.mxu0 0
    %1881 = vmatprep.subr.bf16.mxu0 0
    %1882 = vmatpush1.bf16.msra.mxu0 0
    %1883 = vmatprep.subr.bf16.mxu0 0
    %1884 = vmatpush1.bf16.msra.mxu0 0
    %1885 = vmatprep.subr.bf16.mxu0 0
    %1886 = vmatpush1.bf16.msra.mxu0 0
    %1887 = vmatprep.mubr.bf16.mxu0 0
    %1888 = vmatmul.mubr.bf16.gmra.mrb[0].mxu0 %v1853
    %v1889 = vpop.f32.mrb[0].mxu0
    %v1890 = vadd.f32 %v202, %v1889
    %v1891 = vpop.f32.mrb[0].mxu0
    %v1892 = vpop.f32.mrb[0].mxu0
    %v1893 = vpop.f32.mrb[0].mxu0
    %1894 = vdwg.mxu0
    %1895 = vmatprep.subr.bf16.mxu0 0
    %1896 = vmatpush1.bf16.msra.mxu0 %v323
    %1897 = vmatprep.subr.bf16.mxu0 0
    %1898 = vmatpush1.bf16.msra.mxu0 %v324
    %1899 = vmatprep.subr.bf16.mxu0 0
    %1900 = vmatpush1.bf16.msra.mxu0 0
    %1901 = vmatprep.subr.bf16.mxu0 0
    %1902 = vmatpush1.bf16.msra.mxu0 0
    %1903 = vmatprep.subr.bf16.mxu0 0
    %1904 = vmatpush1.bf16.msra.mxu0 0
    %1905 = vmatprep.subr.bf16.mxu0 0
    %1906 = vmatpush1.bf16.msra.mxu0 0
    %1907 = vmatprep.subr.bf16.mxu0 0
    %1908 = vmatpush1.bf16.msra.mxu0 0
    %1909 = vmatprep.subr.bf16.mxu0 0
    %1910 = vmatpush1.bf16.msra.mxu0 0
    %1911 = vmatprep.subr.bf16.mxu0 0
    %1912 = vmatpush1.bf16.msra.mxu0 0
    %1913 = vmatprep.subr.bf16.mxu0 0
    %1914 = vmatpush1.bf16.msra.mxu0 0
    %1915 = vmatprep.subr.bf16.mxu0 0
    %1916 = vmatpush1.bf16.msra.mxu0 0
    %1917 = vmatprep.subr.bf16.mxu0 0
    %1918 = vmatpush1.bf16.msra.mxu0 0
    %1919 = vmatprep.subr.bf16.mxu0 0
    %1920 = vmatpush1.bf16.msra.mxu0 0
    %1921 = vmatprep.subr.bf16.mxu0 0
    %1922 = vmatpush1.bf16.msra.mxu0 0
    %1923 = vmatprep.subr.bf16.mxu0 0
    %1924 = vmatpush1.bf16.msra.mxu0 0
    %1925 = vmatprep.subr.bf16.mxu0 0
    %1926 = vmatpush1.bf16.msra.mxu0 0
    %1927 = vmatprep.mubr.bf16.mxu0 0
    %1928 = vmatmul.mubr.bf16.gmra.mrb[0].mxu0 %v1665
    %v1929 = vpop.f32.mrb[0].mxu0
    %v1930 = vadd.f32 %v313, %v1929
    %v1931 = vpop.f32.mrb[0].mxu0
    %v1932 = vpop.f32.mrb[0].mxu0
    %v1933 = vpop.f32.mrb[0].mxu0
    %1934 = vdwg.mxu0
    %v1935 = vadd.f32 %v1890, %v1930
    %v1936 = vxor.u32 %v1935, 2147483648
    %v1937 = vmul.f32 %v1936, 1.442695
    %v1938 = vpow.pop %v1937
    %v1939 = vadd.f32 %v1938, 1.0
    %v1940 = vrcp.pop %v1939
    %v1941 = vmul.f32 1.0, %v1940
    %1943 = vrot.lane.b32.xlu0 %v1930, 64
    %v1944 = vpop.permute.xlu0 %1943
    %v1946 = vmul.f32 %v1941, %v1944
    %1948 = vrot.lane.b32.xlu0 %v1946, 64
    %v1949 = vpop.permute.xlu0 %1948
    %v1951 = vadd.f32 %v1890, %v1949
    %v1952 = vtanh.pop %v1951
    %v1953 = vsub.f32 1.0, %v1941
    %1955 = vrot.lane.b32.xlu0 %v1952, 96
    %v1956 = vpop.permute.xlu0 %1955
    %v1958 = vmul.f32 %v1953, %v1956
    %v1959 = vmul.f32 %v1941, %v1659
    %v1960 = vadd.f32 %v1958, %v1959
    %v1961 = vpack.c.bf16 %v1960, %v1960
    %1963 = vrot.lane.b32.xlu0 %v1961, 96
    %v1964 = vpop.permute.xlu0 %1963
    %v1966 = vsel %vm327, %v1964, 0
    %1968 = vmatprep.subr.bf16.mxu0 0
    %1969 = vmatpush1.bf16.msra.mxu0 %v419
    %1970 = vmatprep.subr.bf16.mxu0 0
    %1971 = vmatpush1.bf16.msra.mxu0 %v420
    %1972 = vmatprep.subr.bf16.mxu0 0
    %1973 = vmatpush1.bf16.msra.mxu0 0
    %1974 = vmatprep.subr.bf16.mxu0 0
    %1975 = vmatpush1.bf16.msra.mxu0 0
    %1976 = vmatprep.subr.bf16.mxu0 0
    %1977 = vmatpush1.bf16.msra.mxu0 0
    %1978 = vmatprep.subr.bf16.mxu0 0
    %1979 = vmatpush1.bf16.msra.mxu0 0
    %1980 = vmatprep.subr.bf16.mxu0 0
    %1981 = vmatpush1.bf16.msra.mxu0 0
    %1982 = vmatprep.subr.bf16.mxu0 0
    %1983 = vmatpush1.bf16.msra.mxu0 0
    %1984 = vmatprep.subr.bf16.mxu0 0
    %1985 = vmatpush1.bf16.msra.mxu0 0
    %1986 = vmatprep.subr.bf16.mxu0 0
    %1987 = vmatpush1.bf16.msra.mxu0 0
    %1988 = vmatprep.subr.bf16.mxu0 0
    %1989 = vmatpush1.bf16.msra.mxu0 0
    %1990 = vmatprep.subr.bf16.mxu0 0
    %1991 = vmatpush1.bf16.msra.mxu0 0
    %1992 = vmatprep.subr.bf16.mxu0 0
    %1993 = vmatpush1.bf16.msra.mxu0 0
    %1994 = vmatprep.subr.bf16.mxu0 0
    %1995 = vmatpush1.bf16.msra.mxu0 0
    %1996 = vmatprep.subr.bf16.mxu0 0
    %1997 = vmatpush1.bf16.msra.mxu0 0
    %1998 = vmatprep.subr.bf16.mxu0 0
    %1999 = vmatpush1.bf16.msra.mxu0 0
    %2000 = vmatprep.mubr.bf16.mxu0 0
    %2001 = vmatmul.mubr.bf16.gmra.mrb[0].mxu0 %v1966
    %v2002 = vpop.f32.mrb[0].mxu0
    %v2003 = vadd.f32 %v406, %v2002
    %v2004 = vpop.f32.mrb[0].mxu0
    %v2005 = vpop.f32.mrb[0].mxu0
    %v2006 = vpop.f32.mrb[0].mxu0
    %2007 = vdwg.mxu0
    %2008 = vmatprep.subr.bf16.mxu0 0
    %2009 = vmatpush1.bf16.msra.mxu0 %v480
    %2010 = vmatprep.subr.bf16.mxu0 0
    %2011 = vmatpush1.bf16.msra.mxu0 %v481
    %2012 = vmatprep.subr.bf16.mxu0 0
    %2013 = vmatpush1.bf16.msra.mxu0 0
    %2014 = vmatprep.subr.bf16.mxu0 0
    %2015 = vmatpush1.bf16.msra.mxu0 0
    %2016 = vmatprep.subr.bf16.mxu0 0
    %2017 = vmatpush1.bf16.msra.mxu0 0
    %2018 = vmatprep.subr.bf16.mxu0 0
    %2019 = vmatpush1.bf16.msra.mxu0 0
    %2020 = vmatprep.subr.bf16.mxu0 0
    %2021 = vmatpush1.bf16.msra.mxu0 0
    %2022 = vmatprep.subr.bf16.mxu0 0
    %2023 = vmatpush1.bf16.msra.mxu0 0
    %2024 = vmatprep.subr.bf16.mxu0 0
    %2025 = vmatpush1.bf16.msra.mxu0 0
    %2026 = vmatprep.subr.bf16.mxu0 0
    %2027 = vmatpush1.bf16.msra.mxu0 0
    %2028 = vmatprep.subr.bf16.mxu0 0
    %2029 = vmatpush1.bf16.msra.mxu0 0
    %2030 = vmatprep.subr.bf16.mxu0 0
    %2031 = vmatpush1.bf16.msra.mxu0 0
    %2032 = vmatprep.subr.bf16.mxu0 0
    %2033 = vmatpush1.bf16.msra.mxu0 0
    %2034 = vmatprep.subr.bf16.mxu0 0
    %2035 = vmatpush1.bf16.msra.mxu0 0
    %2036 = vmatprep.subr.bf16.mxu0 0
    %2037 = vmatpush1.bf16.msra.mxu0 0
    %2038 = vmatprep.subr.bf16.mxu0 0
    %2039 = vmatpush1.bf16.msra.mxu0 0
    %2040 = vmatprep.mubr.bf16.mxu0 0
    %2041 = vmatmul.mubr.bf16.gmra.mrb[0].mxu0 %v1778
    %v2042 = vpop.f32.mrb[0].mxu0
    %v2043 = vadd.f32 %v470, %v2042
    %v2044 = vpop.f32.mrb[0].mxu0
    %v2045 = vpop.f32.mrb[0].mxu0
    %v2046 = vpop.f32.mrb[0].mxu0
    %2047 = vdwg.mxu0
    %v2048 = vadd.f32 %v2003, %v2043
    %v2049 = vxor.u32 %v2048, 2147483648
    %v2050 = vmul.f32 %v2049, 1.442695
    %v2051 = vpow.pop %v2050
    %v2052 = vadd.f32 %v2051, 1.0
    %v2053 = vrcp.pop %v2052
    %v2054 = vmul.f32 1.0, %v2053
    %2056 = vrot.lane.b32.xlu0 %v2043, 64
    %v2057 = vpop.permute.xlu0 %2056
    %v2059 = vmul.f32 %v2054, %v2057
    %2061 = vrot.lane.b32.xlu0 %v2059, 64
    %v2062 = vpop.permute.xlu0 %2061
    %v2064 = vadd.f32 %v2003, %v2062
    %v2065 = vtanh.pop %v2064
    %v2066 = vsub.f32 1.0, %v2054
    %2068 = vrot.lane.b32.xlu0 %v2065, 96
    %v2069 = vpop.permute.xlu0 %2068
    %v2071 = vmul.f32 %v2066, %v2069
    %v2072 = vmul.f32 %v2054, %v1772
    %v2073 = vadd.f32 %v2071, %v2072
    %v2074 = vpack.c.bf16 %v2073, %v2073
    %2076 = vrot.lane.b32.xlu0 %v2074, 96
    %v2077 = vpop.permute.xlu0 %2076
    %v2079 = vsel %vm327, %v2077, 0
    %2081 = vmatprep.subr.bf16.mxu0 0
    %2082 = vmatpush1.bf16.msra.mxu0 %v568
    %2083 = vmatprep.subr.bf16.mxu0 0
    %2084 = vmatpush1.bf16.msra.mxu0 %v569
    %2085 = vmatprep.subr.bf16.mxu0 0
    %2086 = vmatpush1.bf16.msra.mxu0 0
    %2087 = vmatprep.subr.bf16.mxu0 0
    %2088 = vmatpush1.bf16.msra.mxu0 0
    %2089 = vmatprep.subr.bf16.mxu0 0
    %2090 = vmatpush1.bf16.msra.mxu0 0
    %2091 = vmatprep.subr.bf16.mxu0 0
    %2092 = vmatpush1.bf16.msra.mxu0 0
    %2093 = vmatprep.subr.bf16.mxu0 0
    %2094 = vmatpush1.bf16.msra.mxu0 0
    %2095 = vmatprep.subr.bf16.mxu0 0
    %2096 = vmatpush1.bf16.msra.mxu0 0
    %2097 = vmatprep.subr.bf16.mxu0 0
    %2098 = vmatpush1.bf16.msra.mxu0 0
    %2099 = vmatprep.subr.bf16.mxu0 0
    %2100 = vmatpush1.bf16.msra.mxu0 0
    %2101 = vmatprep.subr.bf16.mxu0 0
    %2102 = vmatpush1.bf16.msra.mxu0 0
    %2103 = vmatprep.subr.bf16.mxu0 0
    %2104 = vmatpush1.bf16.msra.mxu0 0
    %2105 = vmatprep.subr.bf16.mxu0 0
    %2106 = vmatpush1.bf16.msra.mxu0 0
    %2107 = vmatprep.subr.bf16.mxu0 0
    %2108 = vmatpush1.bf16.msra.mxu0 0
    %2109 = vmatprep.subr.bf16.mxu0 0
    %2110 = vmatpush1.bf16.msra.mxu0 0
    %2111 = vmatprep.subr.bf16.mxu0 0
    %2112 = vmatpush1.bf16.msra.mxu0 0
    %2113 = vmatprep.mubr.bf16.mxu0 0
    %2114 = vmatmul.mubr.bf16.gmra.mrb[0].mxu0 %v2079
    %v2115 = vpop.f32.mrb[0].mxu0
    %v2116 = vadd.f32 %v555, %v2115
    %v2117 = vpop.f32.mrb[0].mxu0
    %v2118 = vpop.f32.mrb[0].mxu0
    %v2119 = vpop.f32.mrb[0].mxu0
    %2120 = vdwg.mxu0
    %v2121 = vsel %vm615, %v2116, -inf
    %2122 = vmax.xlane.f32.xlu0 %v2121
    %v2123 = vpop.xlane.xlu0 %2122
    %v2124 = vsub.f32 %v2116, %v2123
    %v2125 = vmul.f32 %v2124, 1.442695
    %v2126 = vpow.pop %v2125
    %v2127 = vsel %vm615, %v2126, 0.0
    %2128 = vadd.xlane.f32.xlu0 %v2127
    %v2129 = vpop.xlane.xlu0 %2128
    %v2130 = vlog2.pop %v2129
    %v2131 = vmul.f32 %v2130, 0.6931472
    %v2132 = vsub.f32 %v2124, %v2131
    %vm2133 = vcmp.eq.f32.partialorder %v2124, 0.0
    %v2134 = vsel %vm2133, %v149, 16
    %v2135 = vsel %vm615, %v2134, 2147483647
    %v2136 = vand.u32 %v2135, 65535
    %v2137 = vshra.s32 %v2135, 16
    %v2138 = vcvt.s32.f32 %v2136
    %v2139 = vcvt.s32.f32 %v2137
    %2140 = vmin.xlane.f32.xlu0 %v2139
    %v2141 = vpop.xlane.xlu0 %2140
    %vm2142 = vcmp.eq.f32.partialorder %v2139, %v2141
    %v2143 = vsel %vm2142, %v2138, inf
    %2144 = vmin.xlane.f32.xlu0 %v2143
    %v2145 = vpop.xlane.xlu0 %2144
    %v2146 = vcvt.f32.s32 %v2145
    %v2147 = vcvt.f32.s32 %v2141
    %v2148 = vshll.u32 %v2147, 16
    %v2149 = vadd.s32 %v2148, %v2146
    %vm2150 = vcmp.eq.s32.totalorder %v149, %v2149
    %v2151 = vsel %vm2150, 1.0, 0.0
    %v2152 = vpack.c.bf16 %v2151, %v2151
    %v2154 = vsel %vm264, %v2152, 0
    %2156 = vmatprep.subr.bf16.mxu0 0
    %2157 = vmatpush1.bf16.msra.mxu0 %v262
    %2158 = vmatprep.subr.bf16.mxu0 0
    %2159 = vmatpush1.bf16.msra.mxu0 0
    %2160 = vmatprep.subr.bf16.mxu0 0
    %2161 = vmatpush1.bf16.msra.mxu0 0
    %2162 = vmatprep.subr.bf16.mxu0 0
    %2163 = vmatpush1.bf16.msra.mxu0 0
    %2164 = vmatprep.subr.bf16.mxu0 0
    %2165 = vmatpush1.bf16.msra.mxu0 0
    %2166 = vmatprep.subr.bf16.mxu0 0
    %2167 = vmatpush1.bf16.msra.mxu0 0
    %2168 = vmatprep.subr.bf16.mxu0 0
    %2169 = vmatpush1.bf16.msra.mxu0 0
    %2170 = vmatprep.subr.bf16.mxu0 0
    %2171 = vmatpush1.bf16.msra.mxu0 0
    %2172 = vmatprep.subr.bf16.mxu0 0
    %2173 = vmatpush1.bf16.msra.mxu0 0
    %2174 = vmatprep.subr.bf16.mxu0 0
    %2175 = vmatpush1.bf16.msra.mxu0 0
    %2176 = vmatprep.subr.bf16.mxu0 0
    %2177 = vmatpush1.bf16.msra.mxu0 0
    %2178 = vmatprep.subr.bf16.mxu0 0
    %2179 = vmatpush1.bf16.msra.mxu0 0
    %2180 = vmatprep.subr.bf16.mxu0 0
    %2181 = vmatpush1.bf16.msra.mxu0 0
    %2182 = vmatprep.subr.bf16.mxu0 0
    %2183 = vmatpush1.bf16.msra.mxu0 0
    %2184 = vmatprep.subr.bf16.mxu0 0
    %2185 = vmatpush1.bf16.msra.mxu0 0
    %2186 = vmatprep.subr.bf16.mxu0 0
    %2187 = vmatpush1.bf16.msra.mxu0 0
    %2188 = vmatprep.mubr.bf16.mxu0 0
    %2189 = vmatmul.mubr.bf16.gmra.mrb[0].mxu0 %v2154
    %v2190 = vpop.f32.mrb[0].mxu0
    %v2191 = vadd.f32 %v202, %v2190
    %v2192 = vpop.f32.mrb[0].mxu0
    %v2193 = vpop.f32.mrb[0].mxu0
    %v2194 = vpop.f32.mrb[0].mxu0
    %2195 = vdwg.mxu0
    %2196 = vmatprep.subr.bf16.mxu0 0
    %2197 = vmatpush1.bf16.msra.mxu0 %v323
    %2198 = vmatprep.subr.bf16.mxu0 0
    %2199 = vmatpush1.bf16.msra.mxu0 %v324
    %2200 = vmatprep.subr.bf16.mxu0 0
    %2201 = vmatpush1.bf16.msra.mxu0 0
    %2202 = vmatprep.subr.bf16.mxu0 0
    %2203 = vmatpush1.bf16.msra.mxu0 0
    %2204 = vmatprep.subr.bf16.mxu0 0
    %2205 = vmatpush1.bf16.msra.mxu0 0
    %2206 = vmatprep.subr.bf16.mxu0 0
    %2207 = vmatpush1.bf16.msra.mxu0 0
    %2208 = vmatprep.subr.bf16.mxu0 0
    %2209 = vmatpush1.bf16.msra.mxu0 0
    %2210 = vmatprep.subr.bf16.mxu0 0
    %2211 = vmatpush1.bf16.msra.mxu0 0
    %2212 = vmatprep.subr.bf16.mxu0 0
    %2213 = vmatpush1.bf16.msra.mxu0 0
    %2214 = vmatprep.subr.bf16.mxu0 0
    %2215 = vmatpush1.bf16.msra.mxu0 0
    %2216 = vmatprep.subr.bf16.mxu0 0
    %2217 = vmatpush1.bf16.msra.mxu0 0
    %2218 = vmatprep.subr.bf16.mxu0 0
    %2219 = vmatpush1.bf16.msra.mxu0 0
    %2220 = vmatprep.subr.bf16.mxu0 0
    %2221 = vmatpush1.bf16.msra.mxu0 0
    %2222 = vmatprep.subr.bf16.mxu0 0
    %2223 = vmatpush1.bf16.msra.mxu0 0
    %2224 = vmatprep.subr.bf16.mxu0 0
    %2225 = vmatpush1.bf16.msra.mxu0 0
    %2226 = vmatprep.subr.bf16.mxu0 0
    %2227 = vmatpush1.bf16.msra.mxu0 0
    %2228 = vmatprep.mubr.bf16.mxu0 0
    %2229 = vmatmul.mubr.bf16.gmra.mrb[0].mxu0 %v1966
    %v2230 = vpop.f32.mrb[0].mxu0
    %v2231 = vadd.f32 %v313, %v2230
    %v2232 = vpop.f32.mrb[0].mxu0
    %v2233 = vpop.f32.mrb[0].mxu0
    %v2234 = vpop.f32.mrb[0].mxu0
    %2235 = vdwg.mxu0
    %v2236 = vadd.f32 %v2191, %v2231
    %v2237 = vxor.u32 %v2236, 2147483648
    %v2238 = vmul.f32 %v2237, 1.442695
    %v2239 = vpow.pop %v2238
    %v2240 = vadd.f32 %v2239, 1.0
    %v2241 = vrcp.pop %v2240
    %v2242 = vmul.f32 1.0, %v2241
    %2244 = vrot.lane.b32.xlu0 %v2231, 64
    %v2245 = vpop.permute.xlu0 %2244
    %v2247 = vmul.f32 %v2242, %v2245
    %2249 = vrot.lane.b32.xlu0 %v2247, 64
    %v2250 = vpop.permute.xlu0 %2249
    %v2252 = vadd.f32 %v2191, %v2250
    %v2253 = vtanh.pop %v2252
    %v2254 = vsub.f32 1.0, %v2242
    %2256 = vrot.lane.b32.xlu0 %v2253, 96
    %v2257 = vpop.permute.xlu0 %2256
    %v2259 = vmul.f32 %v2254, %v2257
    %v2260 = vmul.f32 %v2242, %v1960
    %v2261 = vadd.f32 %v2259, %v2260
    %v2262 = vpack.c.bf16 %v2261, %v2261
    %2264 = vrot.lane.b32.xlu0 %v2262, 96
    %v2265 = vpop.permute.xlu0 %2264
    %v2267 = vsel %vm327, %v2265, 0
    %2269 = vmatprep.subr.bf16.mxu0 0
    %2270 = vmatpush1.bf16.msra.mxu0 %v419
    %2271 = vmatprep.subr.bf16.mxu0 0
    %2272 = vmatpush1.bf16.msra.mxu0 %v420
    %2273 = vmatprep.subr.bf16.mxu0 0
    %2274 = vmatpush1.bf16.msra.mxu0 0
    %2275 = vmatprep.subr.bf16.mxu0 0
    %2276 = vmatpush1.bf16.msra.mxu0 0
    %2277 = vmatprep.subr.bf16.mxu0 0
    %2278 = vmatpush1.bf16.msra.mxu0 0
    %2279 = vmatprep.subr.bf16.mxu0 0
    %2280 = vmatpush1.bf16.msra.mxu0 0
    %2281 = vmatprep.subr.bf16.mxu0 0
    %2282 = vmatpush1.bf16.msra.mxu0 0
    %2283 = vmatprep.subr.bf16.mxu0 0
    %2284 = vmatpush1.bf16.msra.mxu0 0
    %2285 = vmatprep.subr.bf16.mxu0 0
    %2286 = vmatpush1.bf16.msra.mxu0 0
    %2287 = vmatprep.subr.bf16.mxu0 0
    %2288 = vmatpush1.bf16.msra.mxu0 0
    %2289 = vmatprep.subr.bf16.mxu0 0
    %2290 = vmatpush1.bf16.msra.mxu0 0
    %2291 = vmatprep.subr.bf16.mxu0 0
    %2292 = vmatpush1.bf16.msra.mxu0 0
    %2293 = vmatprep.subr.bf16.mxu0 0
    %2294 = vmatpush1.bf16.msra.mxu0 0
    %2295 = vmatprep.subr.bf16.mxu0 0
    %2296 = vmatpush1.bf16.msra.mxu0 0
    %2297 = vmatprep.subr.bf16.mxu0 0
    %2298 = vmatpush1.bf16.msra.mxu0 0
    %2299 = vmatprep.subr.bf16.mxu0 0
    %2300 = vmatpush1.bf16.msra.mxu0 0
    %2301 = vmatprep.mubr.bf16.mxu0 0
    %2302 = vmatmul.mubr.bf16.gmra.mrb[0].mxu0 %v2267
    %v2303 = vpop.f32.mrb[0].mxu0
    %v2304 = vadd.f32 %v406, %v2303
    %v2305 = vpop.f32.mrb[0].mxu0
    %v2306 = vpop.f32.mrb[0].mxu0
    %v2307 = vpop.f32.mrb[0].mxu0
    %2308 = vdwg.mxu0
    %2309 = vmatprep.subr.bf16.mxu0 0
    %2310 = vmatpush1.bf16.msra.mxu0 %v480
    %2311 = vmatprep.subr.bf16.mxu0 0
    %2312 = vmatpush1.bf16.msra.mxu0 %v481
    %2313 = vmatprep.subr.bf16.mxu0 0
    %2314 = vmatpush1.bf16.msra.mxu0 0
    %2315 = vmatprep.subr.bf16.mxu0 0
    %2316 = vmatpush1.bf16.msra.mxu0 0
    %2317 = vmatprep.subr.bf16.mxu0 0
    %2318 = vmatpush1.bf16.msra.mxu0 0
    %2319 = vmatprep.subr.bf16.mxu0 0
    %2320 = vmatpush1.bf16.msra.mxu0 0
    %2321 = vmatprep.subr.bf16.mxu0 0
    %2322 = vmatpush1.bf16.msra.mxu0 0
    %2323 = vmatprep.subr.bf16.mxu0 0
    %2324 = vmatpush1.bf16.msra.mxu0 0
    %2325 = vmatprep.subr.bf16.mxu0 0
    %2326 = vmatpush1.bf16.msra.mxu0 0
    %2327 = vmatprep.subr.bf16.mxu0 0
    %2328 = vmatpush1.bf16.msra.mxu0 0
    %2329 = vmatprep.subr.bf16.mxu0 0
    %2330 = vmatpush1.bf16.msra.mxu0 0
    %2331 = vmatprep.subr.bf16.mxu0 0
    %2332 = vmatpush1.bf16.msra.mxu0 0
    %2333 = vmatprep.subr.bf16.mxu0 0
    %2334 = vmatpush1.bf16.msra.mxu0 0
    %2335 = vmatprep.subr.bf16.mxu0 0
    %2336 = vmatpush1.bf16.msra.mxu0 0
    %2337 = vmatprep.subr.bf16.mxu0 0
    %2338 = vmatpush1.bf16.msra.mxu0 0
    %2339 = vmatprep.subr.bf16.mxu0 0
    %2340 = vmatpush1.bf16.msra.mxu0 0
    %2341 = vmatprep.mubr.bf16.mxu0 0
    %2342 = vmatmul.mubr.bf16.gmra.mrb[0].mxu0 %v2079
    %v2343 = vpop.f32.mrb[0].mxu0
    %v2344 = vadd.f32 %v470, %v2343
    %v2345 = vpop.f32.mrb[0].mxu0
    %v2346 = vpop.f32.mrb[0].mxu0
    %v2347 = vpop.f32.mrb[0].mxu0
    %2348 = vdwg.mxu0
    %v2349 = vadd.f32 %v2304, %v2344
    %v2350 = vxor.u32 %v2349, 2147483648
    %v2351 = vmul.f32 %v2350, 1.442695
    %v2352 = vpow.pop %v2351
    %v2353 = vadd.f32 %v2352, 1.0
    %v2354 = vrcp.pop %v2353
    %v2355 = vmul.f32 1.0, %v2354
    %2357 = vrot.lane.b32.xlu0 %v2344, 64
    %v2358 = vpop.permute.xlu0 %2357
    %v2360 = vmul.f32 %v2355, %v2358
    %2362 = vrot.lane.b32.xlu0 %v2360, 64
    %v2363 = vpop.permute.xlu0 %2362
    %v2365 = vadd.f32 %v2304, %v2363
    %v2366 = vtanh.pop %v2365
    %v2367 = vsub.f32 1.0, %v2355
    %2369 = vrot.lane.b32.xlu0 %v2366, 96
    %v2370 = vpop.permute.xlu0 %2369
    %v2372 = vmul.f32 %v2367, %v2370
    %v2373 = vmul.f32 %v2355, %v2073
    %v2374 = vadd.f32 %v2372, %v2373
    %v2375 = vpack.c.bf16 %v2374, %v2374
    %2377 = vrot.lane.b32.xlu0 %v2375, 96
    %v2378 = vpop.permute.xlu0 %2377
    %v2380 = vsel %vm327, %v2378, 0
    %2382 = vmatprep.subr.bf16.mxu0 0
    %2383 = vmatpush1.bf16.msra.mxu0 %v568
    %2384 = vmatprep.subr.bf16.mxu0 0
    %2385 = vmatpush1.bf16.msra.mxu0 %v569
    %2386 = vmatprep.subr.bf16.mxu0 0
    %2387 = vmatpush1.bf16.msra.mxu0 0
    %2388 = vmatprep.subr.bf16.mxu0 0
    %2389 = vmatpush1.bf16.msra.mxu0 0
    %2390 = vmatprep.subr.bf16.mxu0 0
    %2391 = vmatpush1.bf16.msra.mxu0 0
    %2392 = vmatprep.subr.bf16.mxu0 0
    %2393 = vmatpush1.bf16.msra.mxu0 0
    %2394 = vmatprep.subr.bf16.mxu0 0
    %2395 = vmatpush1.bf16.msra.mxu0 0
    %2396 = vmatprep.subr.bf16.mxu0 0
    %2397 = vmatpush1.bf16.msra.mxu0 0
    %2398 = vmatprep.subr.bf16.mxu0 0
    %2399 = vmatpush1.bf16.msra.mxu0 0
    %2400 = vmatprep.subr.bf16.mxu0 0
    %2401 = vmatpush1.bf16.msra.mxu0 0
    %2402 = vmatprep.subr.bf16.mxu0 0
    %2403 = vmatpush1.bf16.msra.mxu0 0
    %2404 = vmatprep.subr.bf16.mxu0 0
    %2405 = vmatpush1.bf16.msra.mxu0 0
    %2406 = vmatprep.subr.bf16.mxu0 0
    %2407 = vmatpush1.bf16.msra.mxu0 0
    %2408 = vmatprep.subr.bf16.mxu0 0
    %2409 = vmatpush1.bf16.msra.mxu0 0
    %2410 = vmatprep.subr.bf16.mxu0 0
    %2411 = vmatpush1.bf16.msra.mxu0 0
    %2412 = vmatprep.subr.bf16.mxu0 0
    %2413 = vmatpush1.bf16.msra.mxu0 0
    %2414 = vmatprep.mubr.bf16.mxu0 0
    %2415 = vmatmul.mubr.bf16.gmra.mrb[0].mxu0 %v2380
    %v2416 = vpop.f32.mrb[0].mxu0
    %v2417 = vadd.f32 %v555, %v2416
    %v2418 = vpop.f32.mrb[0].mxu0
    %v2419 = vpop.f32.mrb[0].mxu0
    %v2420 = vpop.f32.mrb[0].mxu0
    %2421 = vdwg.mxu0
    %v2422 = vsel %vm615, %v2417, -inf
    %2423 = vmax.xlane.f32.xlu0 %v2422
    %v2424 = vpop.xlane.xlu0 %2423
    %v2425 = vsub.f32 %v2417, %v2424
    %v2426 = vmul.f32 %v2425, 1.442695
    %v2427 = vpow.pop %v2426
    %v2428 = vsel %vm615, %v2427, 0.0
    %2429 = vadd.xlane.f32.xlu0 %v2428
    %v2430 = vpop.xlane.xlu0 %2429
    %v2431 = vlog2.pop %v2430
    %v2432 = vmul.f32 %v2431, 0.6931472
    %v2433 = vsub.f32 %v2425, %v2432
    %vm2434 = vcmp.eq.f32.partialorder %v2425, 0.0
    %v2435 = vsel %vm2434, %v149, 16
    %v2436 = vsel %vm615, %v2435, 2147483647
    %v2437 = vand.u32 %v2436, 65535
    %v2438 = vshra.s32 %v2436, 16
    %v2439 = vcvt.s32.f32 %v2437
    %v2440 = vcvt.s32.f32 %v2438
    %2441 = vmin.xlane.f32.xlu0 %v2440
    %v2442 = vpop.xlane.xlu0 %2441
    %vm2443 = vcmp.eq.f32.partialorder %v2440, %v2442
    %v2444 = vsel %vm2443, %v2439, inf
    %2445 = vmin.xlane.f32.xlu0 %v2444
    %v2446 = vpop.xlane.xlu0 %2445
    %v2447 = vcvt.f32.s32 %v2446
    %v2448 = vcvt.f32.s32 %v2442
    %v2449 = vshll.u32 %v2448, 16
    %v2450 = vadd.s32 %v2449, %v2447
    %vm2451 = vcmp.eq.s32.totalorder %v149, %v2450
    %v2452 = vsel %vm2451, 1.0, 0.0
    %v2453 = vpack.c.bf16 %v2452, %v2452
    %v2455 = vsel %vm264, %v2453, 0
    %2457 = vmatprep.subr.bf16.mxu0 0
    %2458 = vmatpush1.bf16.msra.mxu0 %v262
    %2459 = vmatprep.subr.bf16.mxu0 0
    %2460 = vmatpush1.bf16.msra.mxu0 0
    %2461 = vmatprep.subr.bf16.mxu0 0
    %2462 = vmatpush1.bf16.msra.mxu0 0
    %2463 = vmatprep.subr.bf16.mxu0 0
    %2464 = vmatpush1.bf16.msra.mxu0 0
    %2465 = vmatprep.subr.bf16.mxu0 0
    %2466 = vmatpush1.bf16.msra.mxu0 0
    %2467 = vmatprep.subr.bf16.mxu0 0
    %2468 = vmatpush1.bf16.msra.mxu0 0
    %2469 = vmatprep.subr.bf16.mxu0 0
    %2470 = vmatpush1.bf16.msra.mxu0 0
    %2471 = vmatprep.subr.bf16.mxu0 0
    %2472 = vmatpush1.bf16.msra.mxu0 0
    %2473 = vmatprep.subr.bf16.mxu0 0
    %2474 = vmatpush1.bf16.msra.mxu0 0
    %2475 = vmatprep.subr.bf16.mxu0 0
    %2476 = vmatpush1.bf16.msra.mxu0 0
    %2477 = vmatprep.subr.bf16.mxu0 0
    %2478 = vmatpush1.bf16.msra.mxu0 0
    %2479 = vmatprep.subr.bf16.mxu0 0
    %2480 = vmatpush1.bf16.msra.mxu0 0
    %2481 = vmatprep.subr.bf16.mxu0 0
    %2482 = vmatpush1.bf16.msra.mxu0 0
    %2483 = vmatprep.subr.bf16.mxu0 0
    %2484 = vmatpush1.bf16.msra.mxu0 0
    %2485 = vmatprep.subr.bf16.mxu0 0
    %2486 = vmatpush1.bf16.msra.mxu0 0
    %2487 = vmatprep.subr.bf16.mxu0 0
    %2488 = vmatpush1.bf16.msra.mxu0 0
    %2489 = vmatprep.mubr.bf16.mxu0 0
    %2490 = vmatmul.mubr.bf16.gmra.mrb[0].mxu0 %v2455
    %v2491 = vpop.f32.mrb[0].mxu0
    %v2492 = vadd.f32 %v202, %v2491
    %v2493 = vpop.f32.mrb[0].mxu0
    %v2494 = vpop.f32.mrb[0].mxu0
    %v2495 = vpop.f32.mrb[0].mxu0
    %2496 = vdwg.mxu0
    %2497 = vmatprep.subr.bf16.mxu0 0
    %2498 = vmatpush1.bf16.msra.mxu0 %v323
    %2499 = vmatprep.subr.bf16.mxu0 0
    %2500 = vmatpush1.bf16.msra.mxu0 %v324
    %2501 = vmatprep.subr.bf16.mxu0 0
    %2502 = vmatpush1.bf16.msra.mxu0 0
    %2503 = vmatprep.subr.bf16.mxu0 0
    %2504 = vmatpush1.bf16.msra.mxu0 0
    %2505 = vmatprep.subr.bf16.mxu0 0
    %2506 = vmatpush1.bf16.msra.mxu0 0
    %2507 = vmatprep.subr.bf16.mxu0 0
    %2508 = vmatpush1.bf16.msra.mxu0 0
    %2509 = vmatprep.subr.bf16.mxu0 0
    %2510 = vmatpush1.bf16.msra.mxu0 0
    %2511 = vmatprep.subr.bf16.mxu0 0
    %2512 = vmatpush1.bf16.msra.mxu0 0
    %2513 = vmatprep.subr.bf16.mxu0 0
    %2514 = vmatpush1.bf16.msra.mxu0 0
    %2515 = vmatprep.subr.bf16.mxu0 0
    %2516 = vmatpush1.bf16.msra.mxu0 0
    %2517 = vmatprep.subr.bf16.mxu0 0
    %2518 = vmatpush1.bf16.msra.mxu0 0
    %2519 = vmatprep.subr.bf16.mxu0 0
    %2520 = vmatpush1.bf16.msra.mxu0 0
    %2521 = vmatprep.subr.bf16.mxu0 0
    %2522 = vmatpush1.bf16.msra.mxu0 0
    %2523 = vmatprep.subr.bf16.mxu0 0
    %2524 = vmatpush1.bf16.msra.mxu0 0
    %2525 = vmatprep.subr.bf16.mxu0 0
    %2526 = vmatpush1.bf16.msra.mxu0 0
    %2527 = vmatprep.subr.bf16.mxu0 0
    %2528 = vmatpush1.bf16.msra.mxu0 0
    %2529 = vmatprep.mubr.bf16.mxu0 0
    %2530 = vmatmul.mubr.bf16.gmra.mrb[0].mxu0 %v2267
    %v2531 = vpop.f32.mrb[0].mxu0
    %v2532 = vadd.f32 %v313, %v2531
    %v2533 = vpop.f32.mrb[0].mxu0
    %v2534 = vpop.f32.mrb[0].mxu0
    %v2535 = vpop.f32.mrb[0].mxu0
    %2536 = vdwg.mxu0
    %v2537 = vadd.f32 %v2492, %v2532
    %v2538 = vxor.u32 %v2537, 2147483648
    %v2539 = vmul.f32 %v2538, 1.442695
    %v2540 = vpow.pop %v2539
    %v2541 = vadd.f32 %v2540, 1.0
    %v2542 = vrcp.pop %v2541
    %v2543 = vmul.f32 1.0, %v2542
    %2545 = vrot.lane.b32.xlu0 %v2532, 64
    %v2546 = vpop.permute.xlu0 %2545
    %v2548 = vmul.f32 %v2543, %v2546
    %2550 = vrot.lane.b32.xlu0 %v2548, 64
    %v2551 = vpop.permute.xlu0 %2550
    %v2553 = vadd.f32 %v2492, %v2551
    %v2554 = vtanh.pop %v2553
    %v2555 = vsub.f32 1.0, %v2543
    %2557 = vrot.lane.b32.xlu0 %v2554, 96
    %v2558 = vpop.permute.xlu0 %2557
    %v2560 = vmul.f32 %v2555, %v2558
    %v2561 = vmul.f32 %v2543, %v2261
    %v2562 = vadd.f32 %v2560, %v2561
    %v2563 = vpack.c.bf16 %v2562, %v2562
    %2565 = vrot.lane.b32.xlu0 %v2563, 96
    %v2566 = vpop.permute.xlu0 %2565
    %v2568 = vsel %vm327, %v2566, 0
    %2570 = vmatprep.subr.bf16.mxu0 0
    %2571 = vmatpush1.bf16.msra.mxu0 %v419
    %2572 = vmatprep.subr.bf16.mxu0 0
    %2573 = vmatpush1.bf16.msra.mxu0 %v420
    %2574 = vmatprep.subr.bf16.mxu0 0
    %2575 = vmatpush1.bf16.msra.mxu0 0
    %2576 = vmatprep.subr.bf16.mxu0 0
    %2577 = vmatpush1.bf16.msra.mxu0 0
    %2578 = vmatprep.subr.bf16.mxu0 0
    %2579 = vmatpush1.bf16.msra.mxu0 0
    %2580 = vmatprep.subr.bf16.mxu0 0
    %2581 = vmatpush1.bf16.msra.mxu0 0
    %2582 = vmatprep.subr.bf16.mxu0 0
    %2583 = vmatpush1.bf16.msra.mxu0 0
    %2584 = vmatprep.subr.bf16.mxu0 0
    %2585 = vmatpush1.bf16.msra.mxu0 0
    %2586 = vmatprep.subr.bf16.mxu0 0
    %2587 = vmatpush1.bf16.msra.mxu0 0
    %2588 = vmatprep.subr.bf16.mxu0 0
    %2589 = vmatpush1.bf16.msra.mxu0 0
    %2590 = vmatprep.subr.bf16.mxu0 0
    %2591 = vmatpush1.bf16.msra.mxu0 0
    %2592 = vmatprep.subr.bf16.mxu0 0
    %2593 = vmatpush1.bf16.msra.mxu0 0
    %2594 = vmatprep.subr.bf16.mxu0 0
    %2595 = vmatpush1.bf16.msra.mxu0 0
    %2596 = vmatprep.subr.bf16.mxu0 0
    %2597 = vmatpush1.bf16.msra.mxu0 0
    %2598 = vmatprep.subr.bf16.mxu0 0
    %2599 = vmatpush1.bf16.msra.mxu0 0
    %2600 = vmatprep.subr.bf16.mxu0 0
    %2601 = vmatpush1.bf16.msra.mxu0 0
    %2602 = vmatprep.mubr.bf16.mxu0 0
    %2603 = vmatmul.mubr.bf16.gmra.mrb[0].mxu0 %v2568
    %v2604 = vpop.f32.mrb[0].mxu0
    %v2605 = vadd.f32 %v406, %v2604
    %v2606 = vpop.f32.mrb[0].mxu0
    %v2607 = vpop.f32.mrb[0].mxu0
    %v2608 = vpop.f32.mrb[0].mxu0
    %2609 = vdwg.mxu0
    %2610 = vmatprep.subr.bf16.mxu0 0
    %2611 = vmatpush1.bf16.msra.mxu0 %v480
    %2612 = vmatprep.subr.bf16.mxu0 0
    %2613 = vmatpush1.bf16.msra.mxu0 %v481
    %2614 = vmatprep.subr.bf16.mxu0 0
    %2615 = vmatpush1.bf16.msra.mxu0 0
    %2616 = vmatprep.subr.bf16.mxu0 0
    %2617 = vmatpush1.bf16.msra.mxu0 0
    %2618 = vmatprep.subr.bf16.mxu0 0
    %2619 = vmatpush1.bf16.msra.mxu0 0
    %2620 = vmatprep.subr.bf16.mxu0 0
    %2621 = vmatpush1.bf16.msra.mxu0 0
    %2622 = vmatprep.subr.bf16.mxu0 0
    %2623 = vmatpush1.bf16.msra.mxu0 0
    %2624 = vmatprep.subr.bf16.mxu0 0
    %2625 = vmatpush1.bf16.msra.mxu0 0
    %2626 = vmatprep.subr.bf16.mxu0 0
    %2627 = vmatpush1.bf16.msra.mxu0 0
    %2628 = vmatprep.subr.bf16.mxu0 0
    %2629 = vmatpush1.bf16.msra.mxu0 0
    %2630 = vmatprep.subr.bf16.mxu0 0
    %2631 = vmatpush1.bf16.msra.mxu0 0
    %2632 = vmatprep.subr.bf16.mxu0 0
    %2633 = vmatpush1.bf16.msra.mxu0 0
    %2634 = vmatprep.subr.bf16.mxu0 0
    %2635 = vmatpush1.bf16.msra.mxu0 0
    %2636 = vmatprep.subr.bf16.mxu0 0
    %2637 = vmatpush1.bf16.msra.mxu0 0
    %2638 = vmatprep.subr.bf16.mxu0 0
    %2639 = vmatpush1.bf16.msra.mxu0 0
    %2640 = vmatprep.subr.bf16.mxu0 0
    %2641 = vmatpush1.bf16.msra.mxu0 0
    %2642 = vmatprep.mubr.bf16.mxu0 0
    %2643 = vmatmul.mubr.bf16.gmra.mrb[0].mxu0 %v2380
    %v2644 = vpop.f32.mrb[0].mxu0
    %v2645 = vadd.f32 %v470, %v2644
    %v2646 = vpop.f32.mrb[0].mxu0
    %v2647 = vpop.f32.mrb[0].mxu0
    %v2648 = vpop.f32.mrb[0].mxu0
    %2649 = vdwg.mxu0
    %v2650 = vadd.f32 %v2605, %v2645
    %v2651 = vxor.u32 %v2650, 2147483648
    %v2652 = vmul.f32 %v2651, 1.442695
    %v2653 = vpow.pop %v2652
    %v2654 = vadd.f32 %v2653, 1.0
    %v2655 = vrcp.pop %v2654
    %v2656 = vmul.f32 1.0, %v2655
    %2658 = vrot.lane.b32.xlu0 %v2645, 64
    %v2659 = vpop.permute.xlu0 %2658
    %v2661 = vmul.f32 %v2656, %v2659
    %2663 = vrot.lane.b32.xlu0 %v2661, 64
    %v2664 = vpop.permute.xlu0 %2663
    %v2666 = vadd.f32 %v2605, %v2664
    %v2667 = vtanh.pop %v2666
    %v2668 = vsub.f32 1.0, %v2656
    %2670 = vrot.lane.b32.xlu0 %v2667, 96
    %v2671 = vpop.permute.xlu0 %2670
    %v2673 = vmul.f32 %v2668, %v2671
    %v2674 = vmul.f32 %v2656, %v2374
    %v2675 = vadd.f32 %v2673, %v2674
    %v2676 = vpack.c.bf16 %v2675, %v2675
    %2678 = vrot.lane.b32.xlu0 %v2676, 96
    %v2679 = vpop.permute.xlu0 %2678
    %v2681 = vsel %vm327, %v2679, 0
    %2683 = vmatprep.subr.bf16.mxu0 0
    %2684 = vmatpush1.bf16.msra.mxu0 %v568
    %2685 = vmatprep.subr.bf16.mxu0 0
    %2686 = vmatpush1.bf16.msra.mxu0 %v569
    %2687 = vmatprep.subr.bf16.mxu0 0
    %2688 = vmatpush1.bf16.msra.mxu0 0
    %2689 = vmatprep.subr.bf16.mxu0 0
    %2690 = vmatpush1.bf16.msra.mxu0 0
    %2691 = vmatprep.subr.bf16.mxu0 0
    %2692 = vmatpush1.bf16.msra.mxu0 0
    %2693 = vmatprep.subr.bf16.mxu0 0
    %2694 = vmatpush1.bf16.msra.mxu0 0
    %2695 = vmatprep.subr.bf16.mxu0 0
    %2696 = vmatpush1.bf16.msra.mxu0 0
    %2697 = vmatprep.subr.bf16.mxu0 0
    %2698 = vmatpush1.bf16.msra.mxu0 0
    %2699 = vmatprep.subr.bf16.mxu0 0
    %2700 = vmatpush1.bf16.msra.mxu0 0
    %2701 = vmatprep.subr.bf16.mxu0 0
    %2702 = vmatpush1.bf16.msra.mxu0 0
    %2703 = vmatprep.subr.bf16.mxu0 0
    %2704 = vmatpush1.bf16.msra.mxu0 0
    %2705 = vmatprep.subr.bf16.mxu0 0
    %2706 = vmatpush1.bf16.msra.mxu0 0
    %2707 = vmatprep.subr.bf16.mxu0 0
    %2708 = vmatpush1.bf16.msra.mxu0 0
    %2709 = vmatprep.subr.bf16.mxu0 0
    %2710 = vmatpush1.bf16.msra.mxu0 0
    %2711 = vmatprep.subr.bf16.mxu0 0
    %2712 = vmatpush1.bf16.msra.mxu0 0
    %2713 = vmatprep.subr.bf16.mxu0 0
    %2714 = vmatpush1.bf16.msra.mxu0 0
    %2715 = vmatprep.mubr.bf16.mxu0 0
    %2716 = vmatmul.mubr.bf16.gmra.mrb[0].mxu0 %v2681
    %v2717 = vpop.f32.mrb[0].mxu0
    %v2718 = vadd.f32 %v555, %v2717
    %v2719 = vpop.f32.mrb[0].mxu0
    %v2720 = vpop.f32.mrb[0].mxu0
    %v2721 = vpop.f32.mrb[0].mxu0
    %2722 = vdwg.mxu0
    %v2723 = vsel %vm615, %v2718, -inf
    %2724 = vmax.xlane.f32.xlu0 %v2723
    %v2725 = vpop.xlane.xlu0 %2724
    %v2726 = vsub.f32 %v2718, %v2725
    %v2727 = vmul.f32 %v2726, 1.442695
    %v2728 = vpow.pop %v2727
    %v2729 = vsel %vm615, %v2728, 0.0
    %2730 = vadd.xlane.f32.xlu0 %v2729
    %v2731 = vpop.xlane.xlu0 %2730
    %v2732 = vlog2.pop %v2731
    %v2733 = vmul.f32 %v2732, 0.6931472
    %v2734 = vsub.f32 %v2726, %v2733
    %2736 = vrot.lane.b32.xlu0 %v928, 16
    %v2737 = vpop.permute.xlu0 %2736
    %2740 = vrot.lane.b32.xlu0 %v1229, 32
    %v2741 = vpop.permute.xlu0 %2740
    %2744 = vrot.lane.b32.xlu0 %v1530, 48
    %v2745 = vpop.permute.xlu0 %2744
    %2748 = vrot.lane.b32.xlu0 %v1831, 64
    %v2749 = vpop.permute.xlu0 %2748
    %2752 = vrot.lane.b32.xlu0 %v2132, 80
    %v2753 = vpop.permute.xlu0 %2752
    %2756 = vrot.lane.b32.xlu0 %v2433, 96
    %v2757 = vpop.permute.xlu0 %2756
    %2760 = vrot.lane.b32.xlu0 %v2734, 112
    %v2761 = vpop.permute.xlu0 %2760
    %v2763 = vsel %vm264, %v627, %v2737
    %v2764 = vsel %vm327, %v2763, %v2741
    %vm2765 = vcmask 392192
    %v2766 = vsel %vm2765, %v2764, %v2745
    %vm2767 = vcmask 523264
    %v2768 = vsel %vm2767, %v2766, %v2749
    %vm2769 = vcmask 654336
    %v2770 = vsel %vm2769, %v2768, %v2753
    %vm2771 = vcmask 785408
    %v2772 = vsel %vm2771, %v2770, %v2757
    %vm2773 = vcmask 916480
    %v2774 = vsel %vm2773, %v2772, %v2761
    %2775 = vst [vmem:[#allocation13] sm:$0x3] %v2774
    // Predicated region
    $region82: #{tpu_custom_call.1} parent=1 // pred_check
      _
    $region83: #{tpu_custom_call.1} parent=1 // pred_check_branch
      %2777 = sbr.rel (0) target = $region85
    $region84: #{tpu_custom_call.1} parent=1 // pred_region
      %s2779 = ssub.s32 32, 32
      %2780 = vsyncadd [#allocation4], %s2779
      %s2782 = sshll.u32 [#allocation13], 4
      %s2783 = int_to_ptr.vmem [resolvable:$true] %s2782
      %2785 = dma.vmem_to_hbm [thread:$0]  %s2783, 32, %s14, [#allocation4]
    $region85: #{tpu_custom_call.1} parent=1 // pred_fallthru
      _
    // Predicated region
    $region86: #{tpu_custom_call.1} parent=1 // pred_check
      _
    $region87: #{tpu_custom_call.1} parent=1 // pred_check_branch
      %2787 = sbr.rel (0) target = $region89
    $region88: #{tpu_custom_call.1} parent=1 // pred_region
      %2788 = dma.done [#allocation4], 32
    $region89: #{tpu_custom_call.1} parent=1 // pred_fallthru
      _
    %2789 = vsyncpa [#allocation3], 1
    %2790 = vsyncpa [#allocation6], 1
    %2791 = vsyncpa [#allocation9], 1
    %2792 = vsyncpa [#allocation12], 1
    %2793 = vsyncpa [#allocation4], 1

</llo_original>
